<compile_context>
chip_gen: v6e
topology: v6e:2x2x1
jax: 0.10.0
libtpu: 0.0.40
codegen_flags: <defaults>
</compile_context>

<pallas_src>
import jax
import jax.numpy as jnp
from jax.experimental import pallas as pl
from jax.experimental.pallas import tpu as pltpu


def _conv1x1_kernel(x_ref, w_ref, o_ref):
    # x_ref: (C_in, HW)  bf16 activations, channels-major (no transpose)
    # w_ref: (TN, C_in)  bf16 out-channel slab of the weight, PyTorch layout
    # o_ref: (TN, HW)    f32 output tile
    o_ref[...] = jnp.dot(
        w_ref[...], x_ref[...], preferred_element_type=jnp.float32
    ).astype(o_ref.dtype)


def _default_tn(c_out):
    """Two parallel C_out slabs on v7x (2 TCs/chip); one big grid step elsewhere."""
    try:
        kind = jax.devices()[0].device_kind.lower()
    except Exception:
        kind = ""
    if "v7" in kind and c_out % 2 == 0:
        return c_out // 2
    return c_out


def conv2d_1x1(x_nchw, weight_oihw, *, tn=None,
               compute_dtype=jnp.bfloat16, out_dtype=jnp.float32):
    """1x1 conv, stride 1, no bias.
    x_nchw: (N, C_in, H, W), weight_oihw: (C_out, C_in, 1, 1) -> (N, C_out, H, W)."""
    N, C_in, H, W = x_nchw.shape
    C_out = weight_oihw.shape[0]
    assert weight_oihw.shape == (C_out, C_in, 1, 1)
    if tn is None:
        tn = _default_tn(C_out)
    assert C_out % tn == 0, "out-channel tile must divide C_out"
    HW = H * W

    # Free layout views (no transposes) + narrow storage dtype for HBM traffic.
    x_cm = x_nchw.reshape(N, C_in, HW).astype(compute_dtype)   # channels-major
    w2d = weight_oihw.reshape(C_out, C_in).astype(compute_dtype)

    in_item = jnp.dtype(compute_dtype).itemsize
    out_item = jnp.dtype(out_dtype).itemsize
    cost = pl.CostEstimate(
        flops=2 * N * HW * C_in * C_out,
        transcendentals=0,
        bytes_accessed=(N * C_in * HW + C_out * C_in) * in_item
        + N * C_out * HW * out_item,
    )

    if N == 1:
        # Degenerate batch axis collapsed: 1-D grid over out-channel tiles.
        grid = (C_out // tn,)
        in_specs = [
            pl.BlockSpec((None, C_in, HW), lambda j: (0, 0, 0)),
            pl.BlockSpec((tn, C_in), lambda j: (j, 0)),
        ]
        out_specs = pl.BlockSpec((None, tn, HW), lambda j: (0, j, 0))
        dim_sem = ("parallel",)
    else:
        grid = (N, C_out // tn)
        in_specs = [
            pl.BlockSpec((None, C_in, HW), lambda n, j: (n, 0, 0)),
            pl.BlockSpec((tn, C_in), lambda n, j: (j, 0)),
        ]
        out_specs = pl.BlockSpec((None, tn, HW), lambda n, j: (n, j, 0))
        dim_sem = ("parallel", "parallel")

    out = pl.pallas_call(
        _conv1x1_kernel,
        out_shape=jax.ShapeDtypeStruct((N, C_out, HW), out_dtype),
        grid_spec=pltpu.PrefetchScalarGridSpec(
            num_scalar_prefetch=0,
            grid=grid,
            in_specs=in_specs,
            out_specs=out_specs,
        ),
        compiler_params=pltpu.CompilerParams(dimension_semantics=dim_sem),
        cost_estimate=cost,
    )(x_cm, w2d)

    # (N, C_out, H*W) -> (N, C_out, H, W): pure reshape, no data movement.
    return out.reshape(N, C_out, H, W)


if __name__ == "__main__":
    key = jax.random.PRNGKey(0)
    kx, kw = jax.random.split(key)

    # Shapes from the PyTorch module: x619 = randn(1, 384, 7, 7),
    # Conv2d(384, 2304, kernel_size=1, stride=1, bias=False).
    N, C_in, H, W = 1, 384, 7, 7
    C_out = 2304

    x = jax.random.normal(kx, (N, C_in, H, W), dtype=jnp.float32)
    # Deterministic synthetic weights (kaiming-uniform-like scale).
    bound = 1.0 / jnp.sqrt(jnp.float32(C_in))
    w = jax.random.uniform(
        kw, (C_out, C_in, 1, 1), dtype=jnp.float32, minval=-bound, maxval=bound
    )

    y = conv2d_1x1(x, w)
    y = jax.block_until_ready(y)
    assert y.shape == (N, C_out, H, W)

    w2 = w.reshape(C_out, C_in)

    # Tight check: same bf16-rounded operands, f32 accumulation — verifies the
    # kernel's matmul itself.
    x_q = x.astype(jnp.bfloat16).astype(jnp.float32)
    w_q = w2.astype(jnp.bfloat16).astype(jnp.float32)
    ref_q = jnp.einsum("nchw,oc->nohw", x_q, w_q,
                       precision=jax.lax.Precision.HIGHEST)
    assert jnp.allclose(y, ref_q, atol=1e-3, rtol=1e-3)

    # Loose check against the full-f32 reference — documents the accepted
    # bf16-storage error for this layer (review correctness concern).
    ref_f32 = jnp.einsum("nchw,oc->nohw", x, w2,
                         precision=jax.lax.Precision.HIGHEST)
    assert jnp.allclose(y, ref_f32, atol=5e-2, rtol=5e-2)

    print("KERNEL_OK")
</pallas_src>

<mosaic_0001>
module attributes {stable_mosaic.version = 11 : i64} {
  func.func @_conv1x1_kernel(%arg0: i32, %arg1: memref<1x384x49xbf16, #tpu.memory_space<vmem>>, %arg2: memref<2304x384xbf16, #tpu.memory_space<vmem>>, %arg3: memref<1x2304x49xf32, #tpu.memory_space<vmem>>) attributes {dimension_semantics = [#tpu.dimension_semantics<parallel>], iteration_bounds = array<i64: 1>, scalar_prefetch = 0 : i64, scratch_operands = 0 : i64, tpu.core_type = #tpu.core_type<tc>, window_params = [{pipeline_mode = #tpu.pipeline_mode<synchronous>, transform_indices = @transform_0, window_bounds = array<i64: 1, 384, 49>}, {transform_indices = @transform_1, window_bounds = array<i64: 2304, 384>}, {transform_indices = @transform_2, window_bounds = array<i64: 1, 2304, 49>}]} {
    %c0 = arith.constant 0 : index
    %c0_0 = arith.constant 0 : index
    %0 = vector.load %arg2[%c0, %c0_0] : memref<2304x384xbf16, #tpu.memory_space<vmem>>, vector<2304x384xbf16>
    %c0_1 = arith.constant 0 : index
    %c0_2 = arith.constant 0 : index
    %c0_3 = arith.constant 0 : index
    %1 = vector.load %arg1[%c0_1, %c0_2, %c0_3] : memref<1x384x49xbf16, #tpu.memory_space<vmem>>, vector<1x384x49xbf16>
    %2 = vector.shape_cast %1 : vector<1x384x49xbf16> to vector<384x49xbf16>
    %cst = arith.constant dense<0.000000e+00> : vector<2304x49xf32>
    %3 = tpu.matmul %0, %2, %cst {dimension_numbers = #tpu.dot_dimension_numbers<[1], [0], [0], [1], [0, 0, 1, 1], [], []>} : vector<2304x384xbf16>, vector<384x49xbf16>, vector<2304x49xf32> -> vector<2304x49xf32>
    %c0_4 = arith.constant 0 : index
    %c0_5 = arith.constant 0 : index
    %c0_6 = arith.constant 0 : index
    %4 = vector.load %arg3[%c0_4, %c0_5, %c0_6] : memref<1x2304x49xf32, #tpu.memory_space<vmem>>, vector<1x2304x49xf32>
    %5 = vector.shape_cast %4 : vector<1x2304x49xf32> to vector<2304x49xf32>
    %6 = vector.shape_cast %3 : vector<2304x49xf32> to vector<1x2304x49xf32>
    tpu.vector_store %arg3[%c0_4, %c0_5, %c0_6], %6 {strides = array<i32>} : memref<1x2304x49xf32, #tpu.memory_space<vmem>>, vector<1x2304x49xf32>,
    return
  }
  func.func @transform_0(%arg0: i32) -> (i32, i32, i32) {
    %c0_i32 = arith.constant 0 : i32
    %c0_i32_0 = arith.constant 0 : i32
    %c0_i32_1 = arith.constant 0 : i32
    %c0_i32_2 = arith.constant 0 : i32
    return %c0_i32, %c0_i32_0, %c0_i32_1 : i32, i32, i32
  }
  func.func @transform_1(%arg0: i32) -> (i32, i32) {
    %c0_i32 = arith.constant 0 : i32
    %c0_i32_0 = arith.constant 0 : i32
    return %arg0, %c0_i32 : i32, i32
  }
  func.func @transform_2(%arg0: i32) -> (i32, i32, i32) {
    %c0_i32 = arith.constant 0 : i32
    %c0_i32_0 = arith.constant 0 : i32
    %c0_i32_1 = arith.constant 0 : i32
    return %c0_i32, %arg0, %c0_i32_0 : i32, i32, i32
  }
}

</mosaic_0001>

<llo_original>
// kernel: tpu_custom_call.1
$region0: #{tpu_custom_call.1}
  #allocation0 [shape = 'u32[]', space=smem, size = 0x4, offset = 0x4, fixed_abs, tag = 'smem constant byte address 0x4 - core index']
  #allocation1 [shape = 'u32[144,128]{1,0:T(1,128)}', space=vmem, size = 0x12000, scoped, tag = 'internal scratch']
  %s0 = inlined_call_operand.vmem [shape: bf16[1,384,49], index: 0, kind: input, shape index: {}]
  %s1 = inlined_call_operand.hbm [shape: bf16[2304,384], index: 1, kind: input, shape index: {}]
  %s2 = inlined_call_operand.vmem [shape: f32[1,2304,49], index: 2, kind: output, shape index: {}]
  %s3 = sld [smem:[#allocation0]]
  $region22: #{tpu_custom_call.1} parent=0
    _
  %s5 = ssub.s32 1, %s3
  %s6 = scalar_select 0, %s5, %s3
  $region1: #{tpu_custom_call.1} parent=0
    #allocation2 [shape = 'u8[1769472]{0}', space=vmem, size = 0x1b0000, scoped, tag = 'input window, operand 1, single buffered']
    #allocation3 [shape = 's32[1]{0}', space=sflag, size = 0x4, scoped, tag = 'scoped memory for tpu_custom_call.1']
    %7 = vsyncpa [#allocation3], 0
    // Predicated region
    $region2: #{tpu_custom_call.1} parent=1 // pred_check
      _
    $region3: #{tpu_custom_call.1} parent=1 // pred_check_branch
      %9 = sbr.rel (0) target = $region5
    $region4: #{tpu_custom_call.1} parent=1 // pred_region
      _
    $region5: #{tpu_custom_call.1} parent=1 // pred_fallthru
      _
    // Predicated region
    $region6: #{tpu_custom_call.1} parent=1 // pred_check
      _
    $region7: #{tpu_custom_call.1} parent=1 // pred_check_branch
      %11 = sbr.rel (0) target = $region9
    $region8: #{tpu_custom_call.1} parent=1 // pred_region
      %s13 = ssub.s32 55296, 55296
      %14 = vsyncadd [#allocation3], %s13
      %s15 = sshll.u32 [#allocation2], 4
      %s16 = int_to_ptr.vmem [resolvable:$true] %s15
      %21 = dma.hbm_to_vmem [thread:$0]  %s1, 55296, %s16, [#allocation3], 192, 192, 12
    $region9: #{tpu_custom_call.1} parent=1 // pred_fallthru
      _
    // Predicated region
    $region10: #{tpu_custom_call.1} parent=1 // pred_check
      _
    $region11: #{tpu_custom_call.1} parent=1 // pred_check_branch
      %23 = sbr.rel (0) target = $region13
    $region12: #{tpu_custom_call.1} parent=1 // pred_region
      %24 = dma.done [#allocation3], 55296
    $region13: #{tpu_custom_call.1} parent=1 // pred_fallthru
      _
    %v26 = vld [vmem:[#allocation2] sm:$0xff]
    %v27 = vld [vmem:[#allocation2 + $0x8] sm:$0xf]
    %v28 = vld [vmem:[#allocation2 + $0xc] sm:$0xff]
    %v29 = vld [vmem:[#allocation2 + $0x14] sm:$0xf]
    %v30 = vld [vmem:[#allocation2 + $0x18] sm:$0xff]
    %v31 = vld [vmem:[#allocation2 + $0x20] sm:$0xf]
    %v32 = vld [vmem:[#allocation2 + $0x24] sm:$0xff]
    %v33 = vld [vmem:[#allocation2 + $0x2c] sm:$0xf]
    %v34 = vld [vmem:[#allocation2 + $0x30] sm:$0xff]
    %v35 = vld [vmem:[#allocation2 + $0x38] sm:$0xf]
    %v36 = vld [vmem:[#allocation2 + $0x3c] sm:$0xff]
    %v37 = vld [vmem:[#allocation2 + $0x44] sm:$0xf]
    %v38 = vld [vmem:[#allocation2 + $0x48] sm:$0xff]
    %v39 = vld [vmem:[#allocation2 + $0x50] sm:$0xf]
    %v40 = vld [vmem:[#allocation2 + $0x54] sm:$0xff]
    %v41 = vld [vmem:[#allocation2 + $0x5c] sm:$0xf]
    %v42 = vld [vmem:[#allocation2 + $0x60] sm:$0xff]
    %v43 = vld [vmem:[#allocation2 + $0x68] sm:$0xf]
    %v44 = vld [vmem:[#allocation2 + $0x6c] sm:$0xff]
    %v45 = vld [vmem:[#allocation2 + $0x74] sm:$0xf]
    %v46 = vld [vmem:[#allocation2 + $0x78] sm:$0xff]
    %v47 = vld [vmem:[#allocation2 + $0x80] sm:$0xf]
    %v48 = vld [vmem:[#allocation2 + $0x84] sm:$0xff]
    %v49 = vld [vmem:[#allocation2 + $0x8c] sm:$0xf]
    %v50 = vld [vmem:[#allocation2 + $0x90] sm:$0xff]
    %v51 = vld [vmem:[#allocation2 + $0x98] sm:$0xf]
    %v52 = vld [vmem:[#allocation2 + $0x9c] sm:$0xff]
    %v53 = vld [vmem:[#allocation2 + $0xa4] sm:$0xf]
    %v54 = vld [vmem:[#allocation2 + $0xa8] sm:$0xff]
    %v55 = vld [vmem:[#allocation2 + $0xb0] sm:$0xf]
    %v56 = vld [vmem:[#allocation2 + $0xb4] sm:$0xff]
    %v57 = vld [vmem:[#allocation2 + $0xbc] sm:$0xf]
    %v58 = vld [vmem:[#allocation2 + $0xc0] sm:$0xff]
    %v59 = vld [vmem:[#allocation2 + $0xc8] sm:$0xf]
    %v60 = vld [vmem:[#allocation2 + $0xcc] sm:$0xff]
    %v61 = vld [vmem:[#allocation2 + $0xd4] sm:$0xf]
    %v62 = vld [vmem:[#allocation2 + $0xd8] sm:$0xff]
    %v63 = vld [vmem:[#allocation2 + $0xe0] sm:$0xf]
    %v64 = vld [vmem:[#allocation2 + $0xe4] sm:$0xff]
    %v65 = vld [vmem:[#allocation2 + $0xec] sm:$0xf]
    %v66 = vld [vmem:[#allocation2 + $0xf0] sm:$0xff]
    %v67 = vld [vmem:[#allocation2 + $0xf8] sm:$0xf]
    %v68 = vld [vmem:[#allocation2 + $0xfc] sm:$0xff]
    %v69 = vld [vmem:[#allocation2 + $0x104] sm:$0xf]
    %v70 = vld [vmem:[#allocation2 + $0x108] sm:$0xff]
    %v71 = vld [vmem:[#allocation2 + $0x110] sm:$0xf]
    %v72 = vld [vmem:[#allocation2 + $0x114] sm:$0xff]
    %v73 = vld [vmem:[#allocation2 + $0x11c] sm:$0xf]
    %v74 = vld [vmem:[#allocation2 + $0x120] sm:$0xff]
    %v75 = vld [vmem:[#allocation2 + $0x128] sm:$0xf]
    %v76 = vld [vmem:[#allocation2 + $0x12c] sm:$0xff]
    %v77 = vld [vmem:[#allocation2 + $0x134] sm:$0xf]
    %v78 = vld [vmem:[#allocation2 + $0x138] sm:$0xff]
    %v79 = vld [vmem:[#allocation2 + $0x140] sm:$0xf]
    %v80 = vld [vmem:[#allocation2 + $0x144] sm:$0xff]
    %v81 = vld [vmem:[#allocation2 + $0x14c] sm:$0xf]
    %v82 = vld [vmem:[#allocation2 + $0x150] sm:$0xff]
    %v83 = vld [vmem:[#allocation2 + $0x158] sm:$0xf]
    %v84 = vld [vmem:[#allocation2 + $0x15c] sm:$0xff]
    %v85 = vld [vmem:[#allocation2 + $0x164] sm:$0xf]
    %v86 = vld [vmem:[#allocation2 + $0x168] sm:$0xff]
    %v87 = vld [vmem:[#allocation2 + $0x170] sm:$0xf]
    %v88 = vld [vmem:[#allocation2 + $0x174] sm:$0xff]
    %v89 = vld [vmem:[#allocation2 + $0x17c] sm:$0xf]
    %v90 = vld [vmem:[#allocation2 + $0x180] sm:$0xff]
    %v91 = vld [vmem:[#allocation2 + $0x188] sm:$0xf]
    %v92 = vld [vmem:[#allocation2 + $0x18c] sm:$0xff]
    %v93 = vld [vmem:[#allocation2 + $0x194] sm:$0xf]
    %v94 = vld [vmem:[#allocation2 + $0x198] sm:$0xff]
    %v95 = vld [vmem:[#allocation2 + $0x1a0] sm:$0xf]
    %v96 = vld [vmem:[#allocation2 + $0x1a4] sm:$0xff]
    %v97 = vld [vmem:[#allocation2 + $0x1ac] sm:$0xf]
    %v98 = vld [vmem:[#allocation2 + $0x1b0] sm:$0xff]
    %v99 = vld [vmem:[#allocation2 + $0x1b8] sm:$0xf]
    %v100 = vld [vmem:[#allocation2 + $0x1bc] sm:$0xff]
    %v101 = vld [vmem:[#allocation2 + $0x1c4] sm:$0xf]
    %v102 = vld [vmem:[#allocation2 + $0x1c8] sm:$0xff]
    %v103 = vld [vmem:[#allocation2 + $0x1d0] sm:$0xf]
    %v104 = vld [vmem:[#allocation2 + $0x1d4] sm:$0xff]
    %v105 = vld [vmem:[#allocation2 + $0x1dc] sm:$0xf]
    %v106 = vld [vmem:[#allocation2 + $0x1e0] sm:$0xff]
    %v107 = vld [vmem:[#allocation2 + $0x1e8] sm:$0xf]
    %v108 = vld [vmem:[#allocation2 + $0x1ec] sm:$0xff]
    %v109 = vld [vmem:[#allocation2 + $0x1f4] sm:$0xf]
    %v110 = vld [vmem:[#allocation2 + $0x1f8] sm:$0xff]
    %v111 = vld [vmem:[#allocation2 + $0x200] sm:$0xf]
    %v112 = vld [vmem:[#allocation2 + $0x204] sm:$0xff]
    %v113 = vld [vmem:[#allocation2 + $0x20c] sm:$0xf]
    %v114 = vld [vmem:[#allocation2 + $0x210] sm:$0xff]
    %v115 = vld [vmem:[#allocation2 + $0x218] sm:$0xf]
    %v116 = vld [vmem:[#allocation2 + $0x21c] sm:$0xff]
    %v117 = vld [vmem:[#allocation2 + $0x224] sm:$0xf]
    %v118 = vld [vmem:[#allocation2 + $0x228] sm:$0xff]
    %v119 = vld [vmem:[#allocation2 + $0x230] sm:$0xf]
    %v120 = vld [vmem:[#allocation2 + $0x234] sm:$0xff]
    %v121 = vld [vmem:[#allocation2 + $0x23c] sm:$0xf]
    %v122 = vld [vmem:[#allocation2 + $0x240] sm:$0xff]
    %v123 = vld [vmem:[#allocation2 + $0x248] sm:$0xf]
    %v124 = vld [vmem:[#allocation2 + $0x24c] sm:$0xff]
    %v125 = vld [vmem:[#allocation2 + $0x254] sm:$0xf]
    %v126 = vld [vmem:[#allocation2 + $0x258] sm:$0xff]
    %v127 = vld [vmem:[#allocation2 + $0x260] sm:$0xf]
    %v128 = vld [vmem:[#allocation2 + $0x264] sm:$0xff]
    %v129 = vld [vmem:[#allocation2 + $0x26c] sm:$0xf]
    %v130 = vld [vmem:[#allocation2 + $0x270] sm:$0xff]
    %v131 = vld [vmem:[#allocation2 + $0x278] sm:$0xf]
    %v132 = vld [vmem:[#allocation2 + $0x27c] sm:$0xff]
    %v133 = vld [vmem:[#allocation2 + $0x284] sm:$0xf]
    %v134 = vld [vmem:[#allocation2 + $0x288] sm:$0xff]
    %v135 = vld [vmem:[#allocation2 + $0x290] sm:$0xf]
    %v136 = vld [vmem:[#allocation2 + $0x294] sm:$0xff]
    %v137 = vld [vmem:[#allocation2 + $0x29c] sm:$0xf]
    %v138 = vld [vmem:[#allocation2 + $0x2a0] sm:$0xff]
    %v139 = vld [vmem:[#allocation2 + $0x2a8] sm:$0xf]
    %v140 = vld [vmem:[#allocation2 + $0x2ac] sm:$0xff]
    %v141 = vld [vmem:[#allocation2 + $0x2b4] sm:$0xf]
    %v142 = vld [vmem:[#allocation2 + $0x2b8] sm:$0xff]
    %v143 = vld [vmem:[#allocation2 + $0x2c0] sm:$0xf]
    %v144 = vld [vmem:[#allocation2 + $0x2c4] sm:$0xff]
    %v145 = vld [vmem:[#allocation2 + $0x2cc] sm:$0xf]
    %v146 = vld [vmem:[#allocation2 + $0x2d0] sm:$0xff]
    %v147 = vld [vmem:[#allocation2 + $0x2d8] sm:$0xf]
    %v148 = vld [vmem:[#allocation2 + $0x2dc] sm:$0xff]
    %v149 = vld [vmem:[#allocation2 + $0x2e4] sm:$0xf]
    %v150 = vld [vmem:[#allocation2 + $0x2e8] sm:$0xff]
    %v151 = vld [vmem:[#allocation2 + $0x2f0] sm:$0xf]
    %v152 = vld [vmem:[#allocation2 + $0x2f4] sm:$0xff]
    %v153 = vld [vmem:[#allocation2 + $0x2fc] sm:$0xf]
    %v154 = vld [vmem:[#allocation2 + $0x300] sm:$0xff]
    %v155 = vld [vmem:[#allocation2 + $0x308] sm:$0xf]
    %v156 = vld [vmem:[#allocation2 + $0x30c] sm:$0xff]
    %v157 = vld [vmem:[#allocation2 + $0x314] sm:$0xf]
    %v158 = vld [vmem:[#allocation2 + $0x318] sm:$0xff]
    %v159 = vld [vmem:[#allocation2 + $0x320] sm:$0xf]
    %v160 = vld [vmem:[#allocation2 + $0x324] sm:$0xff]
    %v161 = vld [vmem:[#allocation2 + $0x32c] sm:$0xf]
    %v162 = vld [vmem:[#allocation2 + $0x330] sm:$0xff]
    %v163 = vld [vmem:[#allocation2 + $0x338] sm:$0xf]
    %v164 = vld [vmem:[#allocation2 + $0x33c] sm:$0xff]
    %v165 = vld [vmem:[#allocation2 + $0x344] sm:$0xf]
    %v166 = vld [vmem:[#allocation2 + $0x348] sm:$0xff]
    %v167 = vld [vmem:[#allocation2 + $0x350] sm:$0xf]
    %v168 = vld [vmem:[#allocation2 + $0x354] sm:$0xff]
    %v169 = vld [vmem:[#allocation2 + $0x35c] sm:$0xf]
    %v170 = vld [vmem:[#allocation2 + $0x360] sm:$0xff]
    %v171 = vld [vmem:[#allocation2 + $0x368] sm:$0xf]
    %v172 = vld [vmem:[#allocation2 + $0x36c] sm:$0xff]
    %v173 = vld [vmem:[#allocation2 + $0x374] sm:$0xf]
    %v174 = vld [vmem:[#allocation2 + $0x378] sm:$0xff]
    %v175 = vld [vmem:[#allocation2 + $0x380] sm:$0xf]
    %v176 = vld [vmem:[#allocation2 + $0x384] sm:$0xff]
    %v177 = vld [vmem:[#allocation2 + $0x38c] sm:$0xf]
    %v178 = vld [vmem:[#allocation2 + $0x390] sm:$0xff]
    %v179 = vld [vmem:[#allocation2 + $0x398] sm:$0xf]
    %v180 = vld [vmem:[#allocation2 + $0x39c] sm:$0xff]
    %v181 = vld [vmem:[#allocation2 + $0x3a4] sm:$0xf]
    %v182 = vld [vmem:[#allocation2 + $0x3a8] sm:$0xff]
    %v183 = vld [vmem:[#allocation2 + $0x3b0] sm:$0xf]
    %v184 = vld [vmem:[#allocation2 + $0x3b4] sm:$0xff]
    %v185 = vld [vmem:[#allocation2 + $0x3bc] sm:$0xf]
    %v186 = vld [vmem:[#allocation2 + $0x3c0] sm:$0xff]
    %v187 = vld [vmem:[#allocation2 + $0x3c8] sm:$0xf]
    %v188 = vld [vmem:[#allocation2 + $0x3cc] sm:$0xff]
    %v189 = vld [vmem:[#allocation2 + $0x3d4] sm:$0xf]
    %v190 = vld [vmem:[#allocation2 + $0x3d8] sm:$0xff]
    %v191 = vld [vmem:[#allocation2 + $0x3e0] sm:$0xf]
    %v192 = vld [vmem:[#allocation2 + $0x3e4] sm:$0xff]
    %v193 = vld [vmem:[#allocation2 + $0x3ec] sm:$0xf]
    %v194 = vld [vmem:[#allocation2 + $0x3f0] sm:$0xff]
    %v195 = vld [vmem:[#allocation2 + $0x3f8] sm:$0xf]
    %v196 = vld [vmem:[#allocation2 + $0x3fc] sm:$0xff]
    %v197 = vld [vmem:[#allocation2 + $0x404] sm:$0xf]
    %v198 = vld [vmem:[#allocation2 + $0x408] sm:$0xff]
    %v199 = vld [vmem:[#allocation2 + $0x410] sm:$0xf]
    %v200 = vld [vmem:[#allocation2 + $0x414] sm:$0xff]
    %v201 = vld [vmem:[#allocation2 + $0x41c] sm:$0xf]
    %v202 = vld [vmem:[#allocation2 + $0x420] sm:$0xff]
    %v203 = vld [vmem:[#allocation2 + $0x428] sm:$0xf]
    %v204 = vld [vmem:[#allocation2 + $0x42c] sm:$0xff]
    %v205 = vld [vmem:[#allocation2 + $0x434] sm:$0xf]
    %v206 = vld [vmem:[#allocation2 + $0x438] sm:$0xff]
    %v207 = vld [vmem:[#allocation2 + $0x440] sm:$0xf]
    %v208 = vld [vmem:[#allocation2 + $0x444] sm:$0xff]
    %v209 = vld [vmem:[#allocation2 + $0x44c] sm:$0xf]
    %v210 = vld [vmem:[#allocation2 + $0x450] sm:$0xff]
    %v211 = vld [vmem:[#allocation2 + $0x458] sm:$0xf]
    %v212 = vld [vmem:[#allocation2 + $0x45c] sm:$0xff]
    %v213 = vld [vmem:[#allocation2 + $0x464] sm:$0xf]
    %v214 = vld [vmem:[#allocation2 + $0x468] sm:$0xff]
    %v215 = vld [vmem:[#allocation2 + $0x470] sm:$0xf]
    %v216 = vld [vmem:[#allocation2 + $0x474] sm:$0xff]
    %v217 = vld [vmem:[#allocation2 + $0x47c] sm:$0xf]
    %v218 = vld [vmem:[#allocation2 + $0x480] sm:$0xff]
    %v219 = vld [vmem:[#allocation2 + $0x488] sm:$0xf]
    %v220 = vld [vmem:[#allocation2 + $0x48c] sm:$0xff]
    %v221 = vld [vmem:[#allocation2 + $0x494] sm:$0xf]
    %v222 = vld [vmem:[#allocation2 + $0x498] sm:$0xff]
    %v223 = vld [vmem:[#allocation2 + $0x4a0] sm:$0xf]
    %v224 = vld [vmem:[#allocation2 + $0x4a4] sm:$0xff]
    %v225 = vld [vmem:[#allocation2 + $0x4ac] sm:$0xf]
    %v226 = vld [vmem:[#allocation2 + $0x4b0] sm:$0xff]
    %v227 = vld [vmem:[#allocation2 + $0x4b8] sm:$0xf]
    %v228 = vld [vmem:[#allocation2 + $0x4bc] sm:$0xff]
    %v229 = vld [vmem:[#allocation2 + $0x4c4] sm:$0xf]
    %v230 = vld [vmem:[#allocation2 + $0x4c8] sm:$0xff]
    %v231 = vld [vmem:[#allocation2 + $0x4d0] sm:$0xf]
    %v232 = vld [vmem:[#allocation2 + $0x4d4] sm:$0xff]
    %v233 = vld [vmem:[#allocation2 + $0x4dc] sm:$0xf]
    %v234 = vld [vmem:[#allocation2 + $0x4e0] sm:$0xff]
    %v235 = vld [vmem:[#allocation2 + $0x4e8] sm:$0xf]
    %v236 = vld [vmem:[#allocation2 + $0x4ec] sm:$0xff]
    %v237 = vld [vmem:[#allocation2 + $0x4f4] sm:$0xf]
    %v238 = vld [vmem:[#allocation2 + $0x4f8] sm:$0xff]
    %v239 = vld [vmem:[#allocation2 + $0x500] sm:$0xf]
    %v240 = vld [vmem:[#allocation2 + $0x504] sm:$0xff]
    %v241 = vld [vmem:[#allocation2 + $0x50c] sm:$0xf]
    %v242 = vld [vmem:[#allocation2 + $0x510] sm:$0xff]
    %v243 = vld [vmem:[#allocation2 + $0x518] sm:$0xf]
    %v244 = vld [vmem:[#allocation2 + $0x51c] sm:$0xff]
    %v245 = vld [vmem:[#allocation2 + $0x524] sm:$0xf]
    %v246 = vld [vmem:[#allocation2 + $0x528] sm:$0xff]
    %v247 = vld [vmem:[#allocation2 + $0x530] sm:$0xf]
    %v248 = vld [vmem:[#allocation2 + $0x534] sm:$0xff]
    %v249 = vld [vmem:[#allocation2 + $0x53c] sm:$0xf]
    %v250 = vld [vmem:[#allocation2 + $0x540] sm:$0xff]
    %v251 = vld [vmem:[#allocation2 + $0x548] sm:$0xf]
    %v252 = vld [vmem:[#allocation2 + $0x54c] sm:$0xff]
    %v253 = vld [vmem:[#allocation2 + $0x554] sm:$0xf]
    %v254 = vld [vmem:[#allocation2 + $0x558] sm:$0xff]
    %v255 = vld [vmem:[#allocation2 + $0x560] sm:$0xf]
    %v256 = vld [vmem:[#allocation2 + $0x564] sm:$0xff]
    %v257 = vld [vmem:[#allocation2 + $0x56c] sm:$0xf]
    %v258 = vld [vmem:[#allocation2 + $0x570] sm:$0xff]
    %v259 = vld [vmem:[#allocation2 + $0x578] sm:$0xf]
    %v260 = vld [vmem:[#allocation2 + $0x57c] sm:$0xff]
    %v261 = vld [vmem:[#allocation2 + $0x584] sm:$0xf]
    %v262 = vld [vmem:[#allocation2 + $0x588] sm:$0xff]
    %v263 = vld [vmem:[#allocation2 + $0x590] sm:$0xf]
    %v264 = vld [vmem:[#allocation2 + $0x594] sm:$0xff]
    %v265 = vld [vmem:[#allocation2 + $0x59c] sm:$0xf]
    %v266 = vld [vmem:[#allocation2 + $0x5a0] sm:$0xff]
    %v267 = vld [vmem:[#allocation2 + $0x5a8] sm:$0xf]
    %v268 = vld [vmem:[#allocation2 + $0x5ac] sm:$0xff]
    %v269 = vld [vmem:[#allocation2 + $0x5b4] sm:$0xf]
    %v270 = vld [vmem:[#allocation2 + $0x5b8] sm:$0xff]
    %v271 = vld [vmem:[#allocation2 + $0x5c0] sm:$0xf]
    %v272 = vld [vmem:[#allocation2 + $0x5c4] sm:$0xff]
    %v273 = vld [vmem:[#allocation2 + $0x5cc] sm:$0xf]
    %v274 = vld [vmem:[#allocation2 + $0x5d0] sm:$0xff]
    %v275 = vld [vmem:[#allocation2 + $0x5d8] sm:$0xf]
    %v276 = vld [vmem:[#allocation2 + $0x5dc] sm:$0xff]
    %v277 = vld [vmem:[#allocation2 + $0x5e4] sm:$0xf]
    %v278 = vld [vmem:[#allocation2 + $0x5e8] sm:$0xff]
    %v279 = vld [vmem:[#allocation2 + $0x5f0] sm:$0xf]
    %v280 = vld [vmem:[#allocation2 + $0x5f4] sm:$0xff]
    %v281 = vld [vmem:[#allocation2 + $0x5fc] sm:$0xf]
    %v282 = vld [vmem:[#allocation2 + $0x600] sm:$0xff]
    %v283 = vld [vmem:[#allocation2 + $0x608] sm:$0xf]
    %v284 = vld [vmem:[#allocation2 + $0x60c] sm:$0xff]
    %v285 = vld [vmem:[#allocation2 + $0x614] sm:$0xf]
    %v286 = vld [vmem:[#allocation2 + $0x618] sm:$0xff]
    %v287 = vld [vmem:[#allocation2 + $0x620] sm:$0xf]
    %v288 = vld [vmem:[#allocation2 + $0x624] sm:$0xff]
    %v289 = vld [vmem:[#allocation2 + $0x62c] sm:$0xf]
    %v290 = vld [vmem:[#allocation2 + $0x630] sm:$0xff]
    %v291 = vld [vmem:[#allocation2 + $0x638] sm:$0xf]
    %v292 = vld [vmem:[#allocation2 + $0x63c] sm:$0xff]
    %v293 = vld [vmem:[#allocation2 + $0x644] sm:$0xf]
    %v294 = vld [vmem:[#allocation2 + $0x648] sm:$0xff]
    %v295 = vld [vmem:[#allocation2 + $0x650] sm:$0xf]
    %v296 = vld [vmem:[#allocation2 + $0x654] sm:$0xff]
    %v297 = vld [vmem:[#allocation2 + $0x65c] sm:$0xf]
    %v298 = vld [vmem:[#allocation2 + $0x660] sm:$0xff]
    %v299 = vld [vmem:[#allocation2 + $0x668] sm:$0xf]
    %v300 = vld [vmem:[#allocation2 + $0x66c] sm:$0xff]
    %v301 = vld [vmem:[#allocation2 + $0x674] sm:$0xf]
    %v302 = vld [vmem:[#allocation2 + $0x678] sm:$0xff]
    %v303 = vld [vmem:[#allocation2 + $0x680] sm:$0xf]
    %v304 = vld [vmem:[#allocation2 + $0x684] sm:$0xff]
    %v305 = vld [vmem:[#allocation2 + $0x68c] sm:$0xf]
    %v306 = vld [vmem:[#allocation2 + $0x690] sm:$0xff]
    %v307 = vld [vmem:[#allocation2 + $0x698] sm:$0xf]
    %v308 = vld [vmem:[#allocation2 + $0x69c] sm:$0xff]
    %v309 = vld [vmem:[#allocation2 + $0x6a4] sm:$0xf]
    %v310 = vld [vmem:[#allocation2 + $0x6a8] sm:$0xff]
    %v311 = vld [vmem:[#allocation2 + $0x6b0] sm:$0xf]
    %v312 = vld [vmem:[#allocation2 + $0x6b4] sm:$0xff]
    %v313 = vld [vmem:[#allocation2 + $0x6bc] sm:$0xf]
    %v314 = vld [vmem:[#allocation2 + $0x6c0] sm:$0xff]
    %v315 = vld [vmem:[#allocation2 + $0x6c8] sm:$0xf]
    %v316 = vld [vmem:[#allocation2 + $0x6cc] sm:$0xff]
    %v317 = vld [vmem:[#allocation2 + $0x6d4] sm:$0xf]
    %v318 = vld [vmem:[#allocation2 + $0x6d8] sm:$0xff]
    %v319 = vld [vmem:[#allocation2 + $0x6e0] sm:$0xf]
    %v320 = vld [vmem:[#allocation2 + $0x6e4] sm:$0xff]
    %v321 = vld [vmem:[#allocation2 + $0x6ec] sm:$0xf]
    %v322 = vld [vmem:[#allocation2 + $0x6f0] sm:$0xff]
    %v323 = vld [vmem:[#allocation2 + $0x6f8] sm:$0xf]
    %v324 = vld [vmem:[#allocation2 + $0x6fc] sm:$0xff]
    %v325 = vld [vmem:[#allocation2 + $0x704] sm:$0xf]
    %v326 = vld [vmem:[#allocation2 + $0x708] sm:$0xff]
    %v327 = vld [vmem:[#allocation2 + $0x710] sm:$0xf]
    %v328 = vld [vmem:[#allocation2 + $0x714] sm:$0xff]
    %v329 = vld [vmem:[#allocation2 + $0x71c] sm:$0xf]
    %v330 = vld [vmem:[#allocation2 + $0x720] sm:$0xff]
    %v331 = vld [vmem:[#allocation2 + $0x728] sm:$0xf]
    %v332 = vld [vmem:[#allocation2 + $0x72c] sm:$0xff]
    %v333 = vld [vmem:[#allocation2 + $0x734] sm:$0xf]
    %v334 = vld [vmem:[#allocation2 + $0x738] sm:$0xff]
    %v335 = vld [vmem:[#allocation2 + $0x740] sm:$0xf]
    %v336 = vld [vmem:[#allocation2 + $0x744] sm:$0xff]
    %v337 = vld [vmem:[#allocation2 + $0x74c] sm:$0xf]
    %v338 = vld [vmem:[#allocation2 + $0x750] sm:$0xff]
    %v339 = vld [vmem:[#allocation2 + $0x758] sm:$0xf]
    %v340 = vld [vmem:[#allocation2 + $0x75c] sm:$0xff]
    %v341 = vld [vmem:[#allocation2 + $0x764] sm:$0xf]
    %v342 = vld [vmem:[#allocation2 + $0x768] sm:$0xff]
    %v343 = vld [vmem:[#allocation2 + $0x770] sm:$0xf]
    %v344 = vld [vmem:[#allocation2 + $0x774] sm:$0xff]
    %v345 = vld [vmem:[#allocation2 + $0x77c] sm:$0xf]
    %v346 = vld [vmem:[#allocation2 + $0x780] sm:$0xff]
    %v347 = vld [vmem:[#allocation2 + $0x788] sm:$0xf]
    %v348 = vld [vmem:[#allocation2 + $0x78c] sm:$0xff]
    %v349 = vld [vmem:[#allocation2 + $0x794] sm:$0xf]
    %v350 = vld [vmem:[#allocation2 + $0x798] sm:$0xff]
    %v351 = vld [vmem:[#allocation2 + $0x7a0] sm:$0xf]
    %v352 = vld [vmem:[#allocation2 + $0x7a4] sm:$0xff]
    %v353 = vld [vmem:[#allocation2 + $0x7ac] sm:$0xf]
    %v354 = vld [vmem:[#allocation2 + $0x7b0] sm:$0xff]
    %v355 = vld [vmem:[#allocation2 + $0x7b8] sm:$0xf]
    %v356 = vld [vmem:[#allocation2 + $0x7bc] sm:$0xff]
    %v357 = vld [vmem:[#allocation2 + $0x7c4] sm:$0xf]
    %v358 = vld [vmem:[#allocation2 + $0x7c8] sm:$0xff]
    %v359 = vld [vmem:[#allocation2 + $0x7d0] sm:$0xf]
    %v360 = vld [vmem:[#allocation2 + $0x7d4] sm:$0xff]
    %v361 = vld [vmem:[#allocation2 + $0x7dc] sm:$0xf]
    %v362 = vld [vmem:[#allocation2 + $0x7e0] sm:$0xff]
    %v363 = vld [vmem:[#allocation2 + $0x7e8] sm:$0xf]
    %v364 = vld [vmem:[#allocation2 + $0x7ec] sm:$0xff]
    %v365 = vld [vmem:[#allocation2 + $0x7f4] sm:$0xf]
    %v366 = vld [vmem:[#allocation2 + $0x7f8] sm:$0xff]
    %v367 = vld [vmem:[#allocation2 + $0x800] sm:$0xf]
    %v368 = vld [vmem:[#allocation2 + $0x804] sm:$0xff]
    %v369 = vld [vmem:[#allocation2 + $0x80c] sm:$0xf]
    %v370 = vld [vmem:[#allocation2 + $0x810] sm:$0xff]
    %v371 = vld [vmem:[#allocation2 + $0x818] sm:$0xf]
    %v372 = vld [vmem:[#allocation2 + $0x81c] sm:$0xff]
    %v373 = vld [vmem:[#allocation2 + $0x824] sm:$0xf]
    %v374 = vld [vmem:[#allocation2 + $0x828] sm:$0xff]
    %v375 = vld [vmem:[#allocation2 + $0x830] sm:$0xf]
    %v376 = vld [vmem:[#allocation2 + $0x834] sm:$0xff]
    %v377 = vld [vmem:[#allocation2 + $0x83c] sm:$0xf]
    %v378 = vld [vmem:[#allocation2 + $0x840] sm:$0xff]
    %v379 = vld [vmem:[#allocation2 + $0x848] sm:$0xf]
    %v380 = vld [vmem:[#allocation2 + $0x84c] sm:$0xff]
    %v381 = vld [vmem:[#allocation2 + $0x854] sm:$0xf]
    %v382 = vld [vmem:[#allocation2 + $0x858] sm:$0xff]
    %v383 = vld [vmem:[#allocation2 + $0x860] sm:$0xf]
    %v384 = vld [vmem:[#allocation2 + $0x864] sm:$0xff]
    %v385 = vld [vmem:[#allocation2 + $0x86c] sm:$0xf]
    %v386 = vld [vmem:[#allocation2 + $0x870] sm:$0xff]
    %v387 = vld [vmem:[#allocation2 + $0x878] sm:$0xf]
    %v388 = vld [vmem:[#allocation2 + $0x87c] sm:$0xff]
    %v389 = vld [vmem:[#allocation2 + $0x884] sm:$0xf]
    %v390 = vld [vmem:[#allocation2 + $0x888] sm:$0xff]
    %v391 = vld [vmem:[#allocation2 + $0x890] sm:$0xf]
    %v392 = vld [vmem:[#allocation2 + $0x894] sm:$0xff]
    %v393 = vld [vmem:[#allocation2 + $0x89c] sm:$0xf]
    %v394 = vld [vmem:[#allocation2 + $0x8a0] sm:$0xff]
    %v395 = vld [vmem:[#allocation2 + $0x8a8] sm:$0xf]
    %v396 = vld [vmem:[#allocation2 + $0x8ac] sm:$0xff]
    %v397 = vld [vmem:[#allocation2 + $0x8b4] sm:$0xf]
    %v398 = vld [vmem:[#allocation2 + $0x8b8] sm:$0xff]
    %v399 = vld [vmem:[#allocation2 + $0x8c0] sm:$0xf]
    %v400 = vld [vmem:[#allocation2 + $0x8c4] sm:$0xff]
    %v401 = vld [vmem:[#allocation2 + $0x8cc] sm:$0xf]
    %v402 = vld [vmem:[#allocation2 + $0x8d0] sm:$0xff]
    %v403 = vld [vmem:[#allocation2 + $0x8d8] sm:$0xf]
    %v404 = vld [vmem:[#allocation2 + $0x8dc] sm:$0xff]
    %v405 = vld [vmem:[#allocation2 + $0x8e4] sm:$0xf]
    %v406 = vld [vmem:[#allocation2 + $0x8e8] sm:$0xff]
    %v407 = vld [vmem:[#allocation2 + $0x8f0] sm:$0xf]
    %v408 = vld [vmem:[#allocation2 + $0x8f4] sm:$0xff]
    %v409 = vld [vmem:[#allocation2 + $0x8fc] sm:$0xf]
    %v410 = vld [vmem:[#allocation2 + $0x900] sm:$0xff]
    %v411 = vld [vmem:[#allocation2 + $0x908] sm:$0xf]
    %v412 = vld [vmem:[#allocation2 + $0x90c] sm:$0xff]
    %v413 = vld [vmem:[#allocation2 + $0x914] sm:$0xf]
    %v414 = vld [vmem:[#allocation2 + $0x918] sm:$0xff]
    %v415 = vld [vmem:[#allocation2 + $0x920] sm:$0xf]
    %v416 = vld [vmem:[#allocation2 + $0x924] sm:$0xff]
    %v417 = vld [vmem:[#allocation2 + $0x92c] sm:$0xf]
    %v418 = vld [vmem:[#allocation2 + $0x930] sm:$0xff]
    %v419 = vld [vmem:[#allocation2 + $0x938] sm:$0xf]
    %v420 = vld [vmem:[#allocation2 + $0x93c] sm:$0xff]
    %v421 = vld [vmem:[#allocation2 + $0x944] sm:$0xf]
    %v422 = vld [vmem:[#allocation2 + $0x948] sm:$0xff]
    %v423 = vld [vmem:[#allocation2 + $0x950] sm:$0xf]
    %v424 = vld [vmem:[#allocation2 + $0x954] sm:$0xff]
    %v425 = vld [vmem:[#allocation2 + $0x95c] sm:$0xf]
    %v426 = vld [vmem:[#allocation2 + $0x960] sm:$0xff]
    %v427 = vld [vmem:[#allocation2 + $0x968] sm:$0xf]
    %v428 = vld [vmem:[#allocation2 + $0x96c] sm:$0xff]
    %v429 = vld [vmem:[#allocation2 + $0x974] sm:$0xf]
    %v430 = vld [vmem:[#allocation2 + $0x978] sm:$0xff]
    %v431 = vld [vmem:[#allocation2 + $0x980] sm:$0xf]
    %v432 = vld [vmem:[#allocation2 + $0x984] sm:$0xff]
    %v433 = vld [vmem:[#allocation2 + $0x98c] sm:$0xf]
    %v434 = vld [vmem:[#allocation2 + $0x990] sm:$0xff]
    %v435 = vld [vmem:[#allocation2 + $0x998] sm:$0xf]
    %v436 = vld [vmem:[#allocation2 + $0x99c] sm:$0xff]
    %v437 = vld [vmem:[#allocation2 + $0x9a4] sm:$0xf]
    %v438 = vld [vmem:[#allocation2 + $0x9a8] sm:$0xff]
    %v439 = vld [vmem:[#allocation2 + $0x9b0] sm:$0xf]
    %v440 = vld [vmem:[#allocation2 + $0x9b4] sm:$0xff]
    %v441 = vld [vmem:[#allocation2 + $0x9bc] sm:$0xf]
    %v442 = vld [vmem:[#allocation2 + $0x9c0] sm:$0xff]
    %v443 = vld [vmem:[#allocation2 + $0x9c8] sm:$0xf]
    %v444 = vld [vmem:[#allocation2 + $0x9cc] sm:$0xff]
    %v445 = vld [vmem:[#allocation2 + $0x9d4] sm:$0xf]
    %v446 = vld [vmem:[#allocation2 + $0x9d8] sm:$0xff]
    %v447 = vld [vmem:[#allocation2 + $0x9e0] sm:$0xf]
    %v448 = vld [vmem:[#allocation2 + $0x9e4] sm:$0xff]
    %v449 = vld [vmem:[#allocation2 + $0x9ec] sm:$0xf]
    %v450 = vld [vmem:[#allocation2 + $0x9f0] sm:$0xff]
    %v451 = vld [vmem:[#allocation2 + $0x9f8] sm:$0xf]
    %v452 = vld [vmem:[#allocation2 + $0x9fc] sm:$0xff]
    %v453 = vld [vmem:[#allocation2 + $0xa04] sm:$0xf]
    %v454 = vld [vmem:[#allocation2 + $0xa08] sm:$0xff]
    %v455 = vld [vmem:[#allocation2 + $0xa10] sm:$0xf]
    %v456 = vld [vmem:[#allocation2 + $0xa14] sm:$0xff]
    %v457 = vld [vmem:[#allocation2 + $0xa1c] sm:$0xf]
    %v458 = vld [vmem:[#allocation2 + $0xa20] sm:$0xff]
    %v459 = vld [vmem:[#allocation2 + $0xa28] sm:$0xf]
    %v460 = vld [vmem:[#allocation2 + $0xa2c] sm:$0xff]
    %v461 = vld [vmem:[#allocation2 + $0xa34] sm:$0xf]
    %v462 = vld [vmem:[#allocation2 + $0xa38] sm:$0xff]
    %v463 = vld [vmem:[#allocation2 + $0xa40] sm:$0xf]
    %v464 = vld [vmem:[#allocation2 + $0xa44] sm:$0xff]
    %v465 = vld [vmem:[#allocation2 + $0xa4c] sm:$0xf]
    %v466 = vld [vmem:[#allocation2 + $0xa50] sm:$0xff]
    %v467 = vld [vmem:[#allocation2 + $0xa58] sm:$0xf]
    %v468 = vld [vmem:[#allocation2 + $0xa5c] sm:$0xff]
    %v469 = vld [vmem:[#allocation2 + $0xa64] sm:$0xf]
    %v470 = vld [vmem:[#allocation2 + $0xa68] sm:$0xff]
    %v471 = vld [vmem:[#allocation2 + $0xa70] sm:$0xf]
    %v472 = vld [vmem:[#allocation2 + $0xa74] sm:$0xff]
    %v473 = vld [vmem:[#allocation2 + $0xa7c] sm:$0xf]
    %v474 = vld [vmem:[#allocation2 + $0xa80] sm:$0xff]
    %v475 = vld [vmem:[#allocation2 + $0xa88] sm:$0xf]
    %v476 = vld [vmem:[#allocation2 + $0xa8c] sm:$0xff]
    %v477 = vld [vmem:[#allocation2 + $0xa94] sm:$0xf]
    %v478 = vld [vmem:[#allocation2 + $0xa98] sm:$0xff]
    %v479 = vld [vmem:[#allocation2 + $0xaa0] sm:$0xf]
    %v480 = vld [vmem:[#allocation2 + $0xaa4] sm:$0xff]
    %v481 = vld [vmem:[#allocation2 + $0xaac] sm:$0xf]
    %v482 = vld [vmem:[#allocation2 + $0xab0] sm:$0xff]
    %v483 = vld [vmem:[#allocation2 + $0xab8] sm:$0xf]
    %v484 = vld [vmem:[#allocation2 + $0xabc] sm:$0xff]
    %v485 = vld [vmem:[#allocation2 + $0xac4] sm:$0xf]
    %v486 = vld [vmem:[#allocation2 + $0xac8] sm:$0xff]
    %v487 = vld [vmem:[#allocation2 + $0xad0] sm:$0xf]
    %v488 = vld [vmem:[#allocation2 + $0xad4] sm:$0xff]
    %v489 = vld [vmem:[#allocation2 + $0xadc] sm:$0xf]
    %v490 = vld [vmem:[#allocation2 + $0xae0] sm:$0xff]
    %v491 = vld [vmem:[#allocation2 + $0xae8] sm:$0xf]
    %v492 = vld [vmem:[#allocation2 + $0xaec] sm:$0xff]
    %v493 = vld [vmem:[#allocation2 + $0xaf4] sm:$0xf]
    %v494 = vld [vmem:[#allocation2 + $0xaf8] sm:$0xff]
    %v495 = vld [vmem:[#allocation2 + $0xb00] sm:$0xf]
    %v496 = vld [vmem:[#allocation2 + $0xb04] sm:$0xff]
    %v497 = vld [vmem:[#allocation2 + $0xb0c] sm:$0xf]
    %v498 = vld [vmem:[#allocation2 + $0xb10] sm:$0xff]
    %v499 = vld [vmem:[#allocation2 + $0xb18] sm:$0xf]
    %v500 = vld [vmem:[#allocation2 + $0xb1c] sm:$0xff]
    %v501 = vld [vmem:[#allocation2 + $0xb24] sm:$0xf]
    %v502 = vld [vmem:[#allocation2 + $0xb28] sm:$0xff]
    %v503 = vld [vmem:[#allocation2 + $0xb30] sm:$0xf]
    %v504 = vld [vmem:[#allocation2 + $0xb34] sm:$0xff]
    %v505 = vld [vmem:[#allocation2 + $0xb3c] sm:$0xf]
    %v506 = vld [vmem:[#allocation2 + $0xb40] sm:$0xff]
    %v507 = vld [vmem:[#allocation2 + $0xb48] sm:$0xf]
    %v508 = vld [vmem:[#allocation2 + $0xb4c] sm:$0xff]
    %v509 = vld [vmem:[#allocation2 + $0xb54] sm:$0xf]
    %v510 = vld [vmem:[#allocation2 + $0xb58] sm:$0xff]
    %v511 = vld [vmem:[#allocation2 + $0xb60] sm:$0xf]
    %v512 = vld [vmem:[#allocation2 + $0xb64] sm:$0xff]
    %v513 = vld [vmem:[#allocation2 + $0xb6c] sm:$0xf]
    %v514 = vld [vmem:[#allocation2 + $0xb70] sm:$0xff]
    %v515 = vld [vmem:[#allocation2 + $0xb78] sm:$0xf]
    %v516 = vld [vmem:[#allocation2 + $0xb7c] sm:$0xff]
    %v517 = vld [vmem:[#allocation2 + $0xb84] sm:$0xf]
    %v518 = vld [vmem:[#allocation2 + $0xb88] sm:$0xff]
    %v519 = vld [vmem:[#allocation2 + $0xb90] sm:$0xf]
    %v520 = vld [vmem:[#allocation2 + $0xb94] sm:$0xff]
    %v521 = vld [vmem:[#allocation2 + $0xb9c] sm:$0xf]
    %v522 = vld [vmem:[#allocation2 + $0xba0] sm:$0xff]
    %v523 = vld [vmem:[#allocation2 + $0xba8] sm:$0xf]
    %v524 = vld [vmem:[#allocation2 + $0xbac] sm:$0xff]
    %v525 = vld [vmem:[#allocation2 + $0xbb4] sm:$0xf]
    %v526 = vld [vmem:[#allocation2 + $0xbb8] sm:$0xff]
    %v527 = vld [vmem:[#allocation2 + $0xbc0] sm:$0xf]
    %v528 = vld [vmem:[#allocation2 + $0xbc4] sm:$0xff]
    %v529 = vld [vmem:[#allocation2 + $0xbcc] sm:$0xf]
    %v530 = vld [vmem:[#allocation2 + $0xbd0] sm:$0xff]
    %v531 = vld [vmem:[#allocation2 + $0xbd8] sm:$0xf]
    %v532 = vld [vmem:[#allocation2 + $0xbdc] sm:$0xff]
    %v533 = vld [vmem:[#allocation2 + $0xbe4] sm:$0xf]
    %v534 = vld [vmem:[#allocation2 + $0xbe8] sm:$0xff]
    %v535 = vld [vmem:[#allocation2 + $0xbf0] sm:$0xf]
    %v536 = vld [vmem:[#allocation2 + $0xbf4] sm:$0xff]
    %v537 = vld [vmem:[#allocation2 + $0xbfc] sm:$0xf]
    %v538 = vld [vmem:[#allocation2 + $0xc00] sm:$0xff]
    %v539 = vld [vmem:[#allocation2 + $0xc08] sm:$0xf]
    %v540 = vld [vmem:[#allocation2 + $0xc0c] sm:$0xff]
    %v541 = vld [vmem:[#allocation2 + $0xc14] sm:$0xf]
    %v542 = vld [vmem:[#allocation2 + $0xc18] sm:$0xff]
    %v543 = vld [vmem:[#allocation2 + $0xc20] sm:$0xf]
    %v544 = vld [vmem:[#allocation2 + $0xc24] sm:$0xff]
    %v545 = vld [vmem:[#allocation2 + $0xc2c] sm:$0xf]
    %v546 = vld [vmem:[#allocation2 + $0xc30] sm:$0xff]
    %v547 = vld [vmem:[#allocation2 + $0xc38] sm:$0xf]
    %v548 = vld [vmem:[#allocation2 + $0xc3c] sm:$0xff]
    %v549 = vld [vmem:[#allocation2 + $0xc44] sm:$0xf]
    %v550 = vld [vmem:[#allocation2 + $0xc48] sm:$0xff]
    %v551 = vld [vmem:[#allocation2 + $0xc50] sm:$0xf]
    %v552 = vld [vmem:[#allocation2 + $0xc54] sm:$0xff]
    %v553 = vld [vmem:[#allocation2 + $0xc5c] sm:$0xf]
    %v554 = vld [vmem:[#allocation2 + $0xc60] sm:$0xff]
    %v555 = vld [vmem:[#allocation2 + $0xc68] sm:$0xf]
    %v556 = vld [vmem:[#allocation2 + $0xc6c] sm:$0xff]
    %v557 = vld [vmem:[#allocation2 + $0xc74] sm:$0xf]
    %v558 = vld [vmem:[#allocation2 + $0xc78] sm:$0xff]
    %v559 = vld [vmem:[#allocation2 + $0xc80] sm:$0xf]
    %v560 = vld [vmem:[#allocation2 + $0xc84] sm:$0xff]
    %v561 = vld [vmem:[#allocation2 + $0xc8c] sm:$0xf]
    %v562 = vld [vmem:[#allocation2 + $0xc90] sm:$0xff]
    %v563 = vld [vmem:[#allocation2 + $0xc98] sm:$0xf]
    %v564 = vld [vmem:[#allocation2 + $0xc9c] sm:$0xff]
    %v565 = vld [vmem:[#allocation2 + $0xca4] sm:$0xf]
    %v566 = vld [vmem:[#allocation2 + $0xca8] sm:$0xff]
    %v567 = vld [vmem:[#allocation2 + $0xcb0] sm:$0xf]
    %v568 = vld [vmem:[#allocation2 + $0xcb4] sm:$0xff]
    %v569 = vld [vmem:[#allocation2 + $0xcbc] sm:$0xf]
    %v570 = vld [vmem:[#allocation2 + $0xcc0] sm:$0xff]
    %v571 = vld [vmem:[#allocation2 + $0xcc8] sm:$0xf]
    %v572 = vld [vmem:[#allocation2 + $0xccc] sm:$0xff]
    %v573 = vld [vmem:[#allocation2 + $0xcd4] sm:$0xf]
    %v574 = vld [vmem:[#allocation2 + $0xcd8] sm:$0xff]
    %v575 = vld [vmem:[#allocation2 + $0xce0] sm:$0xf]
    %v576 = vld [vmem:[#allocation2 + $0xce4] sm:$0xff]
    %v577 = vld [vmem:[#allocation2 + $0xcec] sm:$0xf]
    %v578 = vld [vmem:[#allocation2 + $0xcf0] sm:$0xff]
    %v579 = vld [vmem:[#allocation2 + $0xcf8] sm:$0xf]
    %v580 = vld [vmem:[#allocation2 + $0xcfc] sm:$0xff]
    %v581 = vld [vmem:[#allocation2 + $0xd04] sm:$0xf]
    %v582 = vld [vmem:[#allocation2 + $0xd08] sm:$0xff]
    %v583 = vld [vmem:[#allocation2 + $0xd10] sm:$0xf]
    %v584 = vld [vmem:[#allocation2 + $0xd14] sm:$0xff]
    %v585 = vld [vmem:[#allocation2 + $0xd1c] sm:$0xf]
    %v586 = vld [vmem:[#allocation2 + $0xd20] sm:$0xff]
    %v587 = vld [vmem:[#allocation2 + $0xd28] sm:$0xf]
    %v588 = vld [vmem:[#allocation2 + $0xd2c] sm:$0xff]
    %v589 = vld [vmem:[#allocation2 + $0xd34] sm:$0xf]
    %v590 = vld [vmem:[#allocation2 + $0xd38] sm:$0xff]
    %v591 = vld [vmem:[#allocation2 + $0xd40] sm:$0xf]
    %v592 = vld [vmem:[#allocation2 + $0xd44] sm:$0xff]
    %v593 = vld [vmem:[#allocation2 + $0xd4c] sm:$0xf]
    %v594 = vld [vmem:[#allocation2 + $0xd50] sm:$0xff]
    %v595 = vld [vmem:[#allocation2 + $0xd58] sm:$0xf]
    %v596 = vld [vmem:[#allocation2 + $0xd5c] sm:$0xff]
    %v597 = vld [vmem:[#allocation2 + $0xd64] sm:$0xf]
    %v598 = vld [vmem:[#allocation2 + $0xd68] sm:$0xff]
    %v599 = vld [vmem:[#allocation2 + $0xd70] sm:$0xf]
    %v600 = vld [vmem:[#allocation2 + $0xd74] sm:$0xff]
    %v601 = vld [vmem:[#allocation2 + $0xd7c] sm:$0xf]
    %v602 = vld [vmem:[%s0] sm:$0xf]
    %v603 = vld [vmem:[%s0 + $0x4] sm:$0xf]
    %v604 = vld [vmem:[%s0 + $0x8] sm:$0xf]
    %v605 = vld [vmem:[%s0 + $0xc] sm:$0xf]
    %v606 = vld [vmem:[%s0 + $0x10] sm:$0xf]
    %v607 = vld [vmem:[%s0 + $0x14] sm:$0xf]
    %v608 = vld [vmem:[%s0 + $0x18] sm:$0xf]
    %v609 = vld [vmem:[%s0 + $0x1c] sm:$0xf]
    %v610 = vld [vmem:[%s0 + $0x20] sm:$0xf]
    %v611 = vld [vmem:[%s0 + $0x24] sm:$0xf]
    %v612 = vld [vmem:[%s0 + $0x28] sm:$0xf]
    %v613 = vld [vmem:[%s0 + $0x2c] sm:$0xf]
    %v614 = vld [vmem:[%s0 + $0x30] sm:$0xf]
    %v615 = vld [vmem:[%s0 + $0x34] sm:$0xf]
    %v616 = vld [vmem:[%s0 + $0x38] sm:$0xf]
    %v617 = vld [vmem:[%s0 + $0x3c] sm:$0xf]
    %v618 = vld [vmem:[%s0 + $0x40] sm:$0xf]
    %v619 = vld [vmem:[%s0 + $0x44] sm:$0xf]
    %v620 = vld [vmem:[%s0 + $0x48] sm:$0xf]
    %v621 = vld [vmem:[%s0 + $0x4c] sm:$0xf]
    %v622 = vld [vmem:[%s0 + $0x50] sm:$0xf]
    %v623 = vld [vmem:[%s0 + $0x54] sm:$0xf]
    %v624 = vld [vmem:[%s0 + $0x58] sm:$0xf]
    %v625 = vld [vmem:[%s0 + $0x5c] sm:$0xf]
    %v626 = vld [vmem:[%s0 + $0x60] sm:$0xf]
    %v627 = vld [vmem:[%s0 + $0x64] sm:$0xf]
    %v628 = vld [vmem:[%s0 + $0x68] sm:$0xf]
    %v629 = vld [vmem:[%s0 + $0x6c] sm:$0xf]
    %v630 = vld [vmem:[%s0 + $0x70] sm:$0xf]
    %v631 = vld [vmem:[%s0 + $0x74] sm:$0xf]
    %v632 = vld [vmem:[%s0 + $0x78] sm:$0xf]
    %v633 = vld [vmem:[%s0 + $0x7c] sm:$0xf]
    %v634 = vld [vmem:[%s0 + $0x80] sm:$0xf]
    %v635 = vld [vmem:[%s0 + $0x84] sm:$0xf]
    %v636 = vld [vmem:[%s0 + $0x88] sm:$0xf]
    %v637 = vld [vmem:[%s0 + $0x8c] sm:$0xf]
    %v638 = vld [vmem:[%s0 + $0x90] sm:$0xf]
    %v639 = vld [vmem:[%s0 + $0x94] sm:$0xf]
    %v640 = vld [vmem:[%s0 + $0x98] sm:$0xf]
    %v641 = vld [vmem:[%s0 + $0x9c] sm:$0xf]
    %v642 = vld [vmem:[%s0 + $0xa0] sm:$0xf]
    %v643 = vld [vmem:[%s0 + $0xa4] sm:$0xf]
    %v644 = vld [vmem:[%s0 + $0xa8] sm:$0xf]
    %v645 = vld [vmem:[%s0 + $0xac] sm:$0xf]
    %v646 = vld [vmem:[%s0 + $0xb0] sm:$0xf]
    %v647 = vld [vmem:[%s0 + $0xb4] sm:$0xf]
    %v648 = vld [vmem:[%s0 + $0xb8] sm:$0xf]
    %v649 = vld [vmem:[%s0 + $0xbc] sm:$0xf]
    %v1226 = vunpack.c.l.b16 %v26
    %v1227 = vunpack.c.h.b16 %v26
    %v1228 = vunpack.c.l.b16 %v27
    %v1229 = vunpack.c.l.b16 %v28
    %v1230 = vunpack.c.h.b16 %v28
    %v1231 = vunpack.c.l.b16 %v29
    %v1232 = vunpack.c.l.b16 %v30
    %v1233 = vunpack.c.h.b16 %v30
    %v1234 = vunpack.c.l.b16 %v31
    %v1235 = vunpack.c.l.b16 %v32
    %v1236 = vunpack.c.h.b16 %v32
    %v1237 = vunpack.c.l.b16 %v33
    %v1238 = vunpack.c.l.b16 %v34
    %v1239 = vunpack.c.h.b16 %v34
    %v1240 = vunpack.c.l.b16 %v35
    %v1241 = vunpack.c.l.b16 %v36
    %v1242 = vunpack.c.h.b16 %v36
    %v1243 = vunpack.c.l.b16 %v37
    %v1244 = vunpack.c.l.b16 %v38
    %v1245 = vunpack.c.h.b16 %v38
    %v1246 = vunpack.c.l.b16 %v39
    %v1247 = vunpack.c.l.b16 %v40
    %v1248 = vunpack.c.h.b16 %v40
    %v1249 = vunpack.c.l.b16 %v41
    %v1250 = vunpack.c.l.b16 %v42
    %v1251 = vunpack.c.h.b16 %v42
    %v1252 = vunpack.c.l.b16 %v43
    %v1253 = vunpack.c.l.b16 %v44
    %v1254 = vunpack.c.h.b16 %v44
    %v1255 = vunpack.c.l.b16 %v45
    %v1256 = vunpack.c.l.b16 %v46
    %v1257 = vunpack.c.h.b16 %v46
    %v1258 = vunpack.c.l.b16 %v47
    %v1259 = vunpack.c.l.b16 %v48
    %v1260 = vunpack.c.h.b16 %v48
    %v1261 = vunpack.c.l.b16 %v49
    %v1262 = vunpack.c.l.b16 %v50
    %v1263 = vunpack.c.h.b16 %v50
    %v1264 = vunpack.c.l.b16 %v51
    %v1265 = vunpack.c.l.b16 %v52
    %v1266 = vunpack.c.h.b16 %v52
    %v1267 = vunpack.c.l.b16 %v53
    %v1268 = vunpack.c.l.b16 %v54
    %v1269 = vunpack.c.h.b16 %v54
    %v1270 = vunpack.c.l.b16 %v55
    %v1271 = vunpack.c.l.b16 %v56
    %v1272 = vunpack.c.h.b16 %v56
    %v1273 = vunpack.c.l.b16 %v57
    %v1274 = vunpack.c.l.b16 %v58
    %v1275 = vunpack.c.h.b16 %v58
    %v1276 = vunpack.c.l.b16 %v59
    %v1277 = vunpack.c.l.b16 %v60
    %v1278 = vunpack.c.h.b16 %v60
    %v1279 = vunpack.c.l.b16 %v61
    %v1280 = vunpack.c.l.b16 %v62
    %v1281 = vunpack.c.h.b16 %v62
    %v1282 = vunpack.c.l.b16 %v63
    %v1283 = vunpack.c.l.b16 %v64
    %v1284 = vunpack.c.h.b16 %v64
    %v1285 = vunpack.c.l.b16 %v65
    %v1286 = vunpack.c.l.b16 %v66
    %v1287 = vunpack.c.h.b16 %v66
    %v1288 = vunpack.c.l.b16 %v67
    %v1289 = vunpack.c.l.b16 %v68
    %v1290 = vunpack.c.h.b16 %v68
    %v1291 = vunpack.c.l.b16 %v69
    %v1292 = vunpack.c.l.b16 %v70
    %v1293 = vunpack.c.h.b16 %v70
    %v1294 = vunpack.c.l.b16 %v71
    %v1295 = vunpack.c.l.b16 %v72
    %v1296 = vunpack.c.h.b16 %v72
    %v1297 = vunpack.c.l.b16 %v73
    %v1298 = vunpack.c.l.b16 %v74
    %v1299 = vunpack.c.h.b16 %v74
    %v1300 = vunpack.c.l.b16 %v75
    %v1301 = vunpack.c.l.b16 %v76
    %v1302 = vunpack.c.h.b16 %v76
    %v1303 = vunpack.c.l.b16 %v77
    %v1304 = vunpack.c.l.b16 %v78
    %v1305 = vunpack.c.h.b16 %v78
    %v1306 = vunpack.c.l.b16 %v79
    %v1307 = vunpack.c.l.b16 %v80
    %v1308 = vunpack.c.h.b16 %v80
    %v1309 = vunpack.c.l.b16 %v81
    %v1310 = vunpack.c.l.b16 %v82
    %v1311 = vunpack.c.h.b16 %v82
    %v1312 = vunpack.c.l.b16 %v83
    %v1313 = vunpack.c.l.b16 %v84
    %v1314 = vunpack.c.h.b16 %v84
    %v1315 = vunpack.c.l.b16 %v85
    %v1316 = vunpack.c.l.b16 %v86
    %v1317 = vunpack.c.h.b16 %v86
    %v1318 = vunpack.c.l.b16 %v87
    %v1319 = vunpack.c.l.b16 %v88
    %v1320 = vunpack.c.h.b16 %v88
    %v1321 = vunpack.c.l.b16 %v89
    %v1322 = vunpack.c.l.b16 %v90
    %v1323 = vunpack.c.h.b16 %v90
    %v1324 = vunpack.c.l.b16 %v91
    %v1325 = vunpack.c.l.b16 %v92
    %v1326 = vunpack.c.h.b16 %v92
    %v1327 = vunpack.c.l.b16 %v93
    %v1328 = vunpack.c.l.b16 %v94
    %v1329 = vunpack.c.h.b16 %v94
    %v1330 = vunpack.c.l.b16 %v95
    %v1331 = vunpack.c.l.b16 %v96
    %v1332 = vunpack.c.h.b16 %v96
    %v1333 = vunpack.c.l.b16 %v97
    %v1334 = vunpack.c.l.b16 %v98
    %v1335 = vunpack.c.h.b16 %v98
    %v1336 = vunpack.c.l.b16 %v99
    %v1337 = vunpack.c.l.b16 %v100
    %v1338 = vunpack.c.h.b16 %v100
    %v1339 = vunpack.c.l.b16 %v101
    %v1340 = vunpack.c.l.b16 %v102
    %v1341 = vunpack.c.h.b16 %v102
    %v1342 = vunpack.c.l.b16 %v103
    %v1343 = vunpack.c.l.b16 %v104
    %v1344 = vunpack.c.h.b16 %v104
    %v1345 = vunpack.c.l.b16 %v105
    %v1346 = vunpack.c.l.b16 %v106
    %v1347 = vunpack.c.h.b16 %v106
    %v1348 = vunpack.c.l.b16 %v107
    %v1349 = vunpack.c.l.b16 %v108
    %v1350 = vunpack.c.h.b16 %v108
    %v1351 = vunpack.c.l.b16 %v109
    %v1352 = vunpack.c.l.b16 %v110
    %v1353 = vunpack.c.h.b16 %v110
    %v1354 = vunpack.c.l.b16 %v111
    %v1355 = vunpack.c.l.b16 %v112
    %v1356 = vunpack.c.h.b16 %v112
    %v1357 = vunpack.c.l.b16 %v113
    %v1358 = vunpack.c.l.b16 %v114
    %v1359 = vunpack.c.h.b16 %v114
    %v1360 = vunpack.c.l.b16 %v115
    %v1361 = vunpack.c.l.b16 %v116
    %v1362 = vunpack.c.h.b16 %v116
    %v1363 = vunpack.c.l.b16 %v117
    %v1364 = vunpack.c.l.b16 %v118
    %v1365 = vunpack.c.h.b16 %v118
    %v1366 = vunpack.c.l.b16 %v119
    %v1367 = vunpack.c.l.b16 %v120
    %v1368 = vunpack.c.h.b16 %v120
    %v1369 = vunpack.c.l.b16 %v121
    %v1370 = vunpack.c.l.b16 %v122
    %v1371 = vunpack.c.h.b16 %v122
    %v1372 = vunpack.c.l.b16 %v123
    %v1373 = vunpack.c.l.b16 %v124
    %v1374 = vunpack.c.h.b16 %v124
    %v1375 = vunpack.c.l.b16 %v125
    %v1376 = vunpack.c.l.b16 %v126
    %v1377 = vunpack.c.h.b16 %v126
    %v1378 = vunpack.c.l.b16 %v127
    %v1379 = vunpack.c.l.b16 %v128
    %v1380 = vunpack.c.h.b16 %v128
    %v1381 = vunpack.c.l.b16 %v129
    %v1382 = vunpack.c.l.b16 %v130
    %v1383 = vunpack.c.h.b16 %v130
    %v1384 = vunpack.c.l.b16 %v131
    %v1385 = vunpack.c.l.b16 %v132
    %v1386 = vunpack.c.h.b16 %v132
    %v1387 = vunpack.c.l.b16 %v133
    %v1388 = vunpack.c.l.b16 %v134
    %v1389 = vunpack.c.h.b16 %v134
    %v1390 = vunpack.c.l.b16 %v135
    %v1391 = vunpack.c.l.b16 %v136
    %v1392 = vunpack.c.h.b16 %v136
    %v1393 = vunpack.c.l.b16 %v137
    %v1394 = vunpack.c.l.b16 %v138
    %v1395 = vunpack.c.h.b16 %v138
    %v1396 = vunpack.c.l.b16 %v139
    %v1397 = vunpack.c.l.b16 %v140
    %v1398 = vunpack.c.h.b16 %v140
    %v1399 = vunpack.c.l.b16 %v141
    %v1400 = vunpack.c.l.b16 %v142
    %v1401 = vunpack.c.h.b16 %v142
    %v1402 = vunpack.c.l.b16 %v143
    %v1403 = vunpack.c.l.b16 %v144
    %v1404 = vunpack.c.h.b16 %v144
    %v1405 = vunpack.c.l.b16 %v145
    %v1406 = vunpack.c.l.b16 %v146
    %v1407 = vunpack.c.h.b16 %v146
    %v1408 = vunpack.c.l.b16 %v147
    %v1409 = vunpack.c.l.b16 %v148
    %v1410 = vunpack.c.h.b16 %v148
    %v1411 = vunpack.c.l.b16 %v149
    %v1412 = vunpack.c.l.b16 %v150
    %v1413 = vunpack.c.h.b16 %v150
    %v1414 = vunpack.c.l.b16 %v151
    %v1415 = vunpack.c.l.b16 %v152
    %v1416 = vunpack.c.h.b16 %v152
    %v1417 = vunpack.c.l.b16 %v153
    %v1418 = vunpack.c.l.b16 %v154
    %v1419 = vunpack.c.h.b16 %v154
    %v1420 = vunpack.c.l.b16 %v155
    %v1421 = vunpack.c.l.b16 %v156
    %v1422 = vunpack.c.h.b16 %v156
    %v1423 = vunpack.c.l.b16 %v157
    %v1424 = vunpack.c.l.b16 %v158
    %v1425 = vunpack.c.h.b16 %v158
    %v1426 = vunpack.c.l.b16 %v159
    %v1427 = vunpack.c.l.b16 %v160
    %v1428 = vunpack.c.h.b16 %v160
    %v1429 = vunpack.c.l.b16 %v161
    %v1430 = vunpack.c.l.b16 %v162
    %v1431 = vunpack.c.h.b16 %v162
    %v1432 = vunpack.c.l.b16 %v163
    %v1433 = vunpack.c.l.b16 %v164
    %v1434 = vunpack.c.h.b16 %v164
    %v1435 = vunpack.c.l.b16 %v165
    %v1436 = vunpack.c.l.b16 %v166
    %v1437 = vunpack.c.h.b16 %v166
    %v1438 = vunpack.c.l.b16 %v167
    %v1439 = vunpack.c.l.b16 %v168
    %v1440 = vunpack.c.h.b16 %v168
    %v1441 = vunpack.c.l.b16 %v169
    %v1442 = vunpack.c.l.b16 %v170
    %v1443 = vunpack.c.h.b16 %v170
    %v1444 = vunpack.c.l.b16 %v171
    %v1445 = vunpack.c.l.b16 %v172
    %v1446 = vunpack.c.h.b16 %v172
    %v1447 = vunpack.c.l.b16 %v173
    %v1448 = vunpack.c.l.b16 %v174
    %v1449 = vunpack.c.h.b16 %v174
    %v1450 = vunpack.c.l.b16 %v175
    %v1451 = vunpack.c.l.b16 %v176
    %v1452 = vunpack.c.h.b16 %v176
    %v1453 = vunpack.c.l.b16 %v177
    %v1454 = vunpack.c.l.b16 %v178
    %v1455 = vunpack.c.h.b16 %v178
    %v1456 = vunpack.c.l.b16 %v179
    %v1457 = vunpack.c.l.b16 %v180
    %v1458 = vunpack.c.h.b16 %v180
    %v1459 = vunpack.c.l.b16 %v181
    %v1460 = vunpack.c.l.b16 %v182
    %v1461 = vunpack.c.h.b16 %v182
    %v1462 = vunpack.c.l.b16 %v183
    %v1463 = vunpack.c.l.b16 %v184
    %v1464 = vunpack.c.h.b16 %v184
    %v1465 = vunpack.c.l.b16 %v185
    %v1466 = vunpack.c.l.b16 %v186
    %v1467 = vunpack.c.h.b16 %v186
    %v1468 = vunpack.c.l.b16 %v187
    %v1469 = vunpack.c.l.b16 %v188
    %v1470 = vunpack.c.h.b16 %v188
    %v1471 = vunpack.c.l.b16 %v189
    %v1472 = vunpack.c.l.b16 %v190
    %v1473 = vunpack.c.h.b16 %v190
    %v1474 = vunpack.c.l.b16 %v191
    %v1475 = vunpack.c.l.b16 %v192
    %v1476 = vunpack.c.h.b16 %v192
    %v1477 = vunpack.c.l.b16 %v193
    %v1478 = vunpack.c.l.b16 %v194
    %v1479 = vunpack.c.h.b16 %v194
    %v1480 = vunpack.c.l.b16 %v195
    %v1481 = vunpack.c.l.b16 %v196
    %v1482 = vunpack.c.h.b16 %v196
    %v1483 = vunpack.c.l.b16 %v197
    %v1484 = vunpack.c.l.b16 %v198
    %v1485 = vunpack.c.h.b16 %v198
    %v1486 = vunpack.c.l.b16 %v199
    %v1487 = vunpack.c.l.b16 %v200
    %v1488 = vunpack.c.h.b16 %v200
    %v1489 = vunpack.c.l.b16 %v201
    %v1490 = vunpack.c.l.b16 %v202
    %v1491 = vunpack.c.h.b16 %v202
    %v1492 = vunpack.c.l.b16 %v203
    %v1493 = vunpack.c.l.b16 %v204
    %v1494 = vunpack.c.h.b16 %v204
    %v1495 = vunpack.c.l.b16 %v205
    %v1496 = vunpack.c.l.b16 %v206
    %v1497 = vunpack.c.h.b16 %v206
    %v1498 = vunpack.c.l.b16 %v207
    %v1499 = vunpack.c.l.b16 %v208
    %v1500 = vunpack.c.h.b16 %v208
    %v1501 = vunpack.c.l.b16 %v209
    %v1502 = vunpack.c.l.b16 %v210
    %v1503 = vunpack.c.h.b16 %v210
    %v1504 = vunpack.c.l.b16 %v211
    %v1505 = vunpack.c.l.b16 %v212
    %v1506 = vunpack.c.h.b16 %v212
    %v1507 = vunpack.c.l.b16 %v213
    %v1508 = vunpack.c.l.b16 %v214
    %v1509 = vunpack.c.h.b16 %v214
    %v1510 = vunpack.c.l.b16 %v215
    %v1511 = vunpack.c.l.b16 %v216
    %v1512 = vunpack.c.h.b16 %v216
    %v1513 = vunpack.c.l.b16 %v217
    %v1514 = vunpack.c.l.b16 %v218
    %v1515 = vunpack.c.h.b16 %v218
    %v1516 = vunpack.c.l.b16 %v219
    %v1517 = vunpack.c.l.b16 %v220
    %v1518 = vunpack.c.h.b16 %v220
    %v1519 = vunpack.c.l.b16 %v221
    %v1520 = vunpack.c.l.b16 %v222
    %v1521 = vunpack.c.h.b16 %v222
    %v1522 = vunpack.c.l.b16 %v223
    %v1523 = vunpack.c.l.b16 %v224
    %v1524 = vunpack.c.h.b16 %v224
    %v1525 = vunpack.c.l.b16 %v225
    %v1526 = vunpack.c.l.b16 %v226
    %v1527 = vunpack.c.h.b16 %v226
    %v1528 = vunpack.c.l.b16 %v227
    %v1529 = vunpack.c.l.b16 %v228
    %v1530 = vunpack.c.h.b16 %v228
    %v1531 = vunpack.c.l.b16 %v229
    %v1532 = vunpack.c.l.b16 %v230
    %v1533 = vunpack.c.h.b16 %v230
    %v1534 = vunpack.c.l.b16 %v231
    %v1535 = vunpack.c.l.b16 %v232
    %v1536 = vunpack.c.h.b16 %v232
    %v1537 = vunpack.c.l.b16 %v233
    %v1538 = vunpack.c.l.b16 %v234
    %v1539 = vunpack.c.h.b16 %v234
    %v1540 = vunpack.c.l.b16 %v235
    %v1541 = vunpack.c.l.b16 %v236
    %v1542 = vunpack.c.h.b16 %v236
    %v1543 = vunpack.c.l.b16 %v237
    %v1544 = vunpack.c.l.b16 %v238
    %v1545 = vunpack.c.h.b16 %v238
    %v1546 = vunpack.c.l.b16 %v239
    %v1547 = vunpack.c.l.b16 %v240
    %v1548 = vunpack.c.h.b16 %v240
    %v1549 = vunpack.c.l.b16 %v241
    %v1550 = vunpack.c.l.b16 %v242
    %v1551 = vunpack.c.h.b16 %v242
    %v1552 = vunpack.c.l.b16 %v243
    %v1553 = vunpack.c.l.b16 %v244
    %v1554 = vunpack.c.h.b16 %v244
    %v1555 = vunpack.c.l.b16 %v245
    %v1556 = vunpack.c.l.b16 %v246
    %v1557 = vunpack.c.h.b16 %v246
    %v1558 = vunpack.c.l.b16 %v247
    %v1559 = vunpack.c.l.b16 %v248
    %v1560 = vunpack.c.h.b16 %v248
    %v1561 = vunpack.c.l.b16 %v249
    %v1562 = vunpack.c.l.b16 %v250
    %v1563 = vunpack.c.h.b16 %v250
    %v1564 = vunpack.c.l.b16 %v251
    %v1565 = vunpack.c.l.b16 %v252
    %v1566 = vunpack.c.h.b16 %v252
    %v1567 = vunpack.c.l.b16 %v253
    %v1568 = vunpack.c.l.b16 %v254
    %v1569 = vunpack.c.h.b16 %v254
    %v1570 = vunpack.c.l.b16 %v255
    %v1571 = vunpack.c.l.b16 %v256
    %v1572 = vunpack.c.h.b16 %v256
    %v1573 = vunpack.c.l.b16 %v257
    %v1574 = vunpack.c.l.b16 %v258
    %v1575 = vunpack.c.h.b16 %v258
    %v1576 = vunpack.c.l.b16 %v259
    %v1577 = vunpack.c.l.b16 %v260
    %v1578 = vunpack.c.h.b16 %v260
    %v1579 = vunpack.c.l.b16 %v261
    %v1580 = vunpack.c.l.b16 %v262
    %v1581 = vunpack.c.h.b16 %v262
    %v1582 = vunpack.c.l.b16 %v263
    %v1583 = vunpack.c.l.b16 %v264
    %v1584 = vunpack.c.h.b16 %v264
    %v1585 = vunpack.c.l.b16 %v265
    %v1586 = vunpack.c.l.b16 %v266
    %v1587 = vunpack.c.h.b16 %v266
    %v1588 = vunpack.c.l.b16 %v267
    %v1589 = vunpack.c.l.b16 %v268
    %v1590 = vunpack.c.h.b16 %v268
    %v1591 = vunpack.c.l.b16 %v269
    %v1592 = vunpack.c.l.b16 %v270
    %v1593 = vunpack.c.h.b16 %v270
    %v1594 = vunpack.c.l.b16 %v271
    %v1595 = vunpack.c.l.b16 %v272
    %v1596 = vunpack.c.h.b16 %v272
    %v1597 = vunpack.c.l.b16 %v273
    %v1598 = vunpack.c.l.b16 %v274
    %v1599 = vunpack.c.h.b16 %v274
    %v1600 = vunpack.c.l.b16 %v275
    %v1601 = vunpack.c.l.b16 %v276
    %v1602 = vunpack.c.h.b16 %v276
    %v1603 = vunpack.c.l.b16 %v277
    %v1604 = vunpack.c.l.b16 %v278
    %v1605 = vunpack.c.h.b16 %v278
    %v1606 = vunpack.c.l.b16 %v279
    %v1607 = vunpack.c.l.b16 %v280
    %v1608 = vunpack.c.h.b16 %v280
    %v1609 = vunpack.c.l.b16 %v281
    %v1610 = vunpack.c.l.b16 %v282
    %v1611 = vunpack.c.h.b16 %v282
    %v1612 = vunpack.c.l.b16 %v283
    %v1613 = vunpack.c.l.b16 %v284
    %v1614 = vunpack.c.h.b16 %v284
    %v1615 = vunpack.c.l.b16 %v285
    %v1616 = vunpack.c.l.b16 %v286
    %v1617 = vunpack.c.h.b16 %v286
    %v1618 = vunpack.c.l.b16 %v287
    %v1619 = vunpack.c.l.b16 %v288
    %v1620 = vunpack.c.h.b16 %v288
    %v1621 = vunpack.c.l.b16 %v289
    %v1622 = vunpack.c.l.b16 %v290
    %v1623 = vunpack.c.h.b16 %v290
    %v1624 = vunpack.c.l.b16 %v291
    %v1625 = vunpack.c.l.b16 %v292
    %v1626 = vunpack.c.h.b16 %v292
    %v1627 = vunpack.c.l.b16 %v293
    %v1628 = vunpack.c.l.b16 %v294
    %v1629 = vunpack.c.h.b16 %v294
    %v1630 = vunpack.c.l.b16 %v295
    %v1631 = vunpack.c.l.b16 %v296
    %v1632 = vunpack.c.h.b16 %v296
    %v1633 = vunpack.c.l.b16 %v297
    %v1634 = vunpack.c.l.b16 %v298
    %v1635 = vunpack.c.h.b16 %v298
    %v1636 = vunpack.c.l.b16 %v299
    %v1637 = vunpack.c.l.b16 %v300
    %v1638 = vunpack.c.h.b16 %v300
    %v1639 = vunpack.c.l.b16 %v301
    %v1640 = vunpack.c.l.b16 %v302
    %v1641 = vunpack.c.h.b16 %v302
    %v1642 = vunpack.c.l.b16 %v303
    %v1643 = vunpack.c.l.b16 %v304
    %v1644 = vunpack.c.h.b16 %v304
    %v1645 = vunpack.c.l.b16 %v305
    %v1646 = vunpack.c.l.b16 %v306
    %v1647 = vunpack.c.h.b16 %v306
    %v1648 = vunpack.c.l.b16 %v307
    %v1649 = vunpack.c.l.b16 %v308
    %v1650 = vunpack.c.h.b16 %v308
    %v1651 = vunpack.c.l.b16 %v309
    %v1652 = vunpack.c.l.b16 %v310
    %v1653 = vunpack.c.h.b16 %v310
    %v1654 = vunpack.c.l.b16 %v311
    %v1655 = vunpack.c.l.b16 %v312
    %v1656 = vunpack.c.h.b16 %v312
    %v1657 = vunpack.c.l.b16 %v313
    %v1658 = vunpack.c.l.b16 %v314
    %v1659 = vunpack.c.h.b16 %v314
    %v1660 = vunpack.c.l.b16 %v315
    %v1661 = vunpack.c.l.b16 %v316
    %v1662 = vunpack.c.h.b16 %v316
    %v1663 = vunpack.c.l.b16 %v317
    %v1664 = vunpack.c.l.b16 %v318
    %v1665 = vunpack.c.h.b16 %v318
    %v1666 = vunpack.c.l.b16 %v319
    %v1667 = vunpack.c.l.b16 %v320
    %v1668 = vunpack.c.h.b16 %v320
    %v1669 = vunpack.c.l.b16 %v321
    %v1670 = vunpack.c.l.b16 %v322
    %v1671 = vunpack.c.h.b16 %v322
    %v1672 = vunpack.c.l.b16 %v323
    %v1673 = vunpack.c.l.b16 %v324
    %v1674 = vunpack.c.h.b16 %v324
    %v1675 = vunpack.c.l.b16 %v325
    %v1676 = vunpack.c.l.b16 %v326
    %v1677 = vunpack.c.h.b16 %v326
    %v1678 = vunpack.c.l.b16 %v327
    %v1679 = vunpack.c.l.b16 %v328
    %v1680 = vunpack.c.h.b16 %v328
    %v1681 = vunpack.c.l.b16 %v329
    %v1682 = vunpack.c.l.b16 %v330
    %v1683 = vunpack.c.h.b16 %v330
    %v1684 = vunpack.c.l.b16 %v331
    %v1685 = vunpack.c.l.b16 %v332
    %v1686 = vunpack.c.h.b16 %v332
    %v1687 = vunpack.c.l.b16 %v333
    %v1688 = vunpack.c.l.b16 %v334
    %v1689 = vunpack.c.h.b16 %v334
    %v1690 = vunpack.c.l.b16 %v335
    %v1691 = vunpack.c.l.b16 %v336
    %v1692 = vunpack.c.h.b16 %v336
    %v1693 = vunpack.c.l.b16 %v337
    %v1694 = vunpack.c.l.b16 %v338
    %v1695 = vunpack.c.h.b16 %v338
    %v1696 = vunpack.c.l.b16 %v339
    %v1697 = vunpack.c.l.b16 %v340
    %v1698 = vunpack.c.h.b16 %v340
    %v1699 = vunpack.c.l.b16 %v341
    %v1700 = vunpack.c.l.b16 %v342
    %v1701 = vunpack.c.h.b16 %v342
    %v1702 = vunpack.c.l.b16 %v343
    %v1703 = vunpack.c.l.b16 %v344
    %v1704 = vunpack.c.h.b16 %v344
    %v1705 = vunpack.c.l.b16 %v345
    %v1706 = vunpack.c.l.b16 %v346
    %v1707 = vunpack.c.h.b16 %v346
    %v1708 = vunpack.c.l.b16 %v347
    %v1709 = vunpack.c.l.b16 %v348
    %v1710 = vunpack.c.h.b16 %v348
    %v1711 = vunpack.c.l.b16 %v349
    %v1712 = vunpack.c.l.b16 %v350
    %v1713 = vunpack.c.h.b16 %v350
    %v1714 = vunpack.c.l.b16 %v351
    %v1715 = vunpack.c.l.b16 %v352
    %v1716 = vunpack.c.h.b16 %v352
    %v1717 = vunpack.c.l.b16 %v353
    %v1718 = vunpack.c.l.b16 %v354
    %v1719 = vunpack.c.h.b16 %v354
    %v1720 = vunpack.c.l.b16 %v355
    %v1721 = vunpack.c.l.b16 %v356
    %v1722 = vunpack.c.h.b16 %v356
    %v1723 = vunpack.c.l.b16 %v357
    %v1724 = vunpack.c.l.b16 %v358
    %v1725 = vunpack.c.h.b16 %v358
    %v1726 = vunpack.c.l.b16 %v359
    %v1727 = vunpack.c.l.b16 %v360
    %v1728 = vunpack.c.h.b16 %v360
    %v1729 = vunpack.c.l.b16 %v361
    %v1730 = vunpack.c.l.b16 %v362
    %v1731 = vunpack.c.h.b16 %v362
    %v1732 = vunpack.c.l.b16 %v363
    %v1733 = vunpack.c.l.b16 %v364
    %v1734 = vunpack.c.h.b16 %v364
    %v1735 = vunpack.c.l.b16 %v365
    %v1736 = vunpack.c.l.b16 %v366
    %v1737 = vunpack.c.h.b16 %v366
    %v1738 = vunpack.c.l.b16 %v367
    %v1739 = vunpack.c.l.b16 %v368
    %v1740 = vunpack.c.h.b16 %v368
    %v1741 = vunpack.c.l.b16 %v369
    %v1742 = vunpack.c.l.b16 %v370
    %v1743 = vunpack.c.h.b16 %v370
    %v1744 = vunpack.c.l.b16 %v371
    %v1745 = vunpack.c.l.b16 %v372
    %v1746 = vunpack.c.h.b16 %v372
    %v1747 = vunpack.c.l.b16 %v373
    %v1748 = vunpack.c.l.b16 %v374
    %v1749 = vunpack.c.h.b16 %v374
    %v1750 = vunpack.c.l.b16 %v375
    %v1751 = vunpack.c.l.b16 %v376
    %v1752 = vunpack.c.h.b16 %v376
    %v1753 = vunpack.c.l.b16 %v377
    %v1754 = vunpack.c.l.b16 %v378
    %v1755 = vunpack.c.h.b16 %v378
    %v1756 = vunpack.c.l.b16 %v379
    %v1757 = vunpack.c.l.b16 %v380
    %v1758 = vunpack.c.h.b16 %v380
    %v1759 = vunpack.c.l.b16 %v381
    %v1760 = vunpack.c.l.b16 %v382
    %v1761 = vunpack.c.h.b16 %v382
    %v1762 = vunpack.c.l.b16 %v383
    %v1763 = vunpack.c.l.b16 %v384
    %v1764 = vunpack.c.h.b16 %v384
    %v1765 = vunpack.c.l.b16 %v385
    %v1766 = vunpack.c.l.b16 %v386
    %v1767 = vunpack.c.h.b16 %v386
    %v1768 = vunpack.c.l.b16 %v387
    %v1769 = vunpack.c.l.b16 %v388
    %v1770 = vunpack.c.h.b16 %v388
    %v1771 = vunpack.c.l.b16 %v389
    %v1772 = vunpack.c.l.b16 %v390
    %v1773 = vunpack.c.h.b16 %v390
    %v1774 = vunpack.c.l.b16 %v391
    %v1775 = vunpack.c.l.b16 %v392
    %v1776 = vunpack.c.h.b16 %v392
    %v1777 = vunpack.c.l.b16 %v393
    %v1778 = vunpack.c.l.b16 %v394
    %v1779 = vunpack.c.h.b16 %v394
    %v1780 = vunpack.c.l.b16 %v395
    %v1781 = vunpack.c.l.b16 %v396
    %v1782 = vunpack.c.h.b16 %v396
    %v1783 = vunpack.c.l.b16 %v397
    %v1784 = vunpack.c.l.b16 %v398
    %v1785 = vunpack.c.h.b16 %v398
    %v1786 = vunpack.c.l.b16 %v399
    %v1787 = vunpack.c.l.b16 %v400
    %v1788 = vunpack.c.h.b16 %v400
    %v1789 = vunpack.c.l.b16 %v401
    %v1790 = vunpack.c.l.b16 %v402
    %v1791 = vunpack.c.h.b16 %v402
    %v1792 = vunpack.c.l.b16 %v403
    %v1793 = vunpack.c.l.b16 %v404
    %v1794 = vunpack.c.h.b16 %v404
    %v1795 = vunpack.c.l.b16 %v405
    %v1796 = vunpack.c.l.b16 %v406
    %v1797 = vunpack.c.h.b16 %v406
    %v1798 = vunpack.c.l.b16 %v407
    %v1799 = vunpack.c.l.b16 %v408
    %v1800 = vunpack.c.h.b16 %v408
    %v1801 = vunpack.c.l.b16 %v409
    %v1802 = vunpack.c.l.b16 %v410
    %v1803 = vunpack.c.h.b16 %v410
    %v1804 = vunpack.c.l.b16 %v411
    %v1805 = vunpack.c.l.b16 %v412
    %v1806 = vunpack.c.h.b16 %v412
    %v1807 = vunpack.c.l.b16 %v413
    %v1808 = vunpack.c.l.b16 %v414
    %v1809 = vunpack.c.h.b16 %v414
    %v1810 = vunpack.c.l.b16 %v415
    %v1811 = vunpack.c.l.b16 %v416
    %v1812 = vunpack.c.h.b16 %v416
    %v1813 = vunpack.c.l.b16 %v417
    %v1814 = vunpack.c.l.b16 %v418
    %v1815 = vunpack.c.h.b16 %v418
    %v1816 = vunpack.c.l.b16 %v419
    %v1817 = vunpack.c.l.b16 %v420
    %v1818 = vunpack.c.h.b16 %v420
    %v1819 = vunpack.c.l.b16 %v421
    %v1820 = vunpack.c.l.b16 %v422
    %v1821 = vunpack.c.h.b16 %v422
    %v1822 = vunpack.c.l.b16 %v423
    %v1823 = vunpack.c.l.b16 %v424
    %v1824 = vunpack.c.h.b16 %v424
    %v1825 = vunpack.c.l.b16 %v425
    %v1826 = vunpack.c.l.b16 %v426
    %v1827 = vunpack.c.h.b16 %v426
    %v1828 = vunpack.c.l.b16 %v427
    %v1829 = vunpack.c.l.b16 %v428
    %v1830 = vunpack.c.h.b16 %v428
    %v1831 = vunpack.c.l.b16 %v429
    %v1832 = vunpack.c.l.b16 %v430
    %v1833 = vunpack.c.h.b16 %v430
    %v1834 = vunpack.c.l.b16 %v431
    %v1835 = vunpack.c.l.b16 %v432
    %v1836 = vunpack.c.h.b16 %v432
    %v1837 = vunpack.c.l.b16 %v433
    %v1838 = vunpack.c.l.b16 %v434
    %v1839 = vunpack.c.h.b16 %v434
    %v1840 = vunpack.c.l.b16 %v435
    %v1841 = vunpack.c.l.b16 %v436
    %v1842 = vunpack.c.h.b16 %v436
    %v1843 = vunpack.c.l.b16 %v437
    %v1844 = vunpack.c.l.b16 %v438
    %v1845 = vunpack.c.h.b16 %v438
    %v1846 = vunpack.c.l.b16 %v439
    %v1847 = vunpack.c.l.b16 %v440
    %v1848 = vunpack.c.h.b16 %v440
    %v1849 = vunpack.c.l.b16 %v441
    %v1850 = vunpack.c.l.b16 %v442
    %v1851 = vunpack.c.h.b16 %v442
    %v1852 = vunpack.c.l.b16 %v443
    %v1853 = vunpack.c.l.b16 %v444
    %v1854 = vunpack.c.h.b16 %v444
    %v1855 = vunpack.c.l.b16 %v445
    %v1856 = vunpack.c.l.b16 %v446
    %v1857 = vunpack.c.h.b16 %v446
    %v1858 = vunpack.c.l.b16 %v447
    %v1859 = vunpack.c.l.b16 %v448
    %v1860 = vunpack.c.h.b16 %v448
    %v1861 = vunpack.c.l.b16 %v449
    %v1862 = vunpack.c.l.b16 %v450
    %v1863 = vunpack.c.h.b16 %v450
    %v1864 = vunpack.c.l.b16 %v451
    %v1865 = vunpack.c.l.b16 %v452
    %v1866 = vunpack.c.h.b16 %v452
    %v1867 = vunpack.c.l.b16 %v453
    %v1868 = vunpack.c.l.b16 %v454
    %v1869 = vunpack.c.h.b16 %v454
    %v1870 = vunpack.c.l.b16 %v455
    %v1871 = vunpack.c.l.b16 %v456
    %v1872 = vunpack.c.h.b16 %v456
    %v1873 = vunpack.c.l.b16 %v457
    %v1874 = vunpack.c.l.b16 %v458
    %v1875 = vunpack.c.h.b16 %v458
    %v1876 = vunpack.c.l.b16 %v459
    %v1877 = vunpack.c.l.b16 %v460
    %v1878 = vunpack.c.h.b16 %v460
    %v1879 = vunpack.c.l.b16 %v461
    %v1880 = vunpack.c.l.b16 %v462
    %v1881 = vunpack.c.h.b16 %v462
    %v1882 = vunpack.c.l.b16 %v463
    %v1883 = vunpack.c.l.b16 %v464
    %v1884 = vunpack.c.h.b16 %v464
    %v1885 = vunpack.c.l.b16 %v465
    %v1886 = vunpack.c.l.b16 %v466
    %v1887 = vunpack.c.h.b16 %v466
    %v1888 = vunpack.c.l.b16 %v467
    %v1889 = vunpack.c.l.b16 %v468
    %v1890 = vunpack.c.h.b16 %v468
    %v1891 = vunpack.c.l.b16 %v469
    %v1892 = vunpack.c.l.b16 %v470
    %v1893 = vunpack.c.h.b16 %v470
    %v1894 = vunpack.c.l.b16 %v471
    %v1895 = vunpack.c.l.b16 %v472
    %v1896 = vunpack.c.h.b16 %v472
    %v1897 = vunpack.c.l.b16 %v473
    %v1898 = vunpack.c.l.b16 %v474
    %v1899 = vunpack.c.h.b16 %v474
    %v1900 = vunpack.c.l.b16 %v475
    %v1901 = vunpack.c.l.b16 %v476
    %v1902 = vunpack.c.h.b16 %v476
    %v1903 = vunpack.c.l.b16 %v477
    %v1904 = vunpack.c.l.b16 %v478
    %v1905 = vunpack.c.h.b16 %v478
    %v1906 = vunpack.c.l.b16 %v479
    %v1907 = vunpack.c.l.b16 %v480
    %v1908 = vunpack.c.h.b16 %v480
    %v1909 = vunpack.c.l.b16 %v481
    %v1910 = vunpack.c.l.b16 %v482
    %v1911 = vunpack.c.h.b16 %v482
    %v1912 = vunpack.c.l.b16 %v483
    %v1913 = vunpack.c.l.b16 %v484
    %v1914 = vunpack.c.h.b16 %v484
    %v1915 = vunpack.c.l.b16 %v485
    %v1916 = vunpack.c.l.b16 %v486
    %v1917 = vunpack.c.h.b16 %v486
    %v1918 = vunpack.c.l.b16 %v487
    %v1919 = vunpack.c.l.b16 %v488
    %v1920 = vunpack.c.h.b16 %v488
    %v1921 = vunpack.c.l.b16 %v489
    %v1922 = vunpack.c.l.b16 %v490
    %v1923 = vunpack.c.h.b16 %v490
    %v1924 = vunpack.c.l.b16 %v491
    %v1925 = vunpack.c.l.b16 %v492
    %v1926 = vunpack.c.h.b16 %v492
    %v1927 = vunpack.c.l.b16 %v493
    %v1928 = vunpack.c.l.b16 %v494
    %v1929 = vunpack.c.h.b16 %v494
    %v1930 = vunpack.c.l.b16 %v495
    %v1931 = vunpack.c.l.b16 %v496
    %v1932 = vunpack.c.h.b16 %v496
    %v1933 = vunpack.c.l.b16 %v497
    %v1934 = vunpack.c.l.b16 %v498
    %v1935 = vunpack.c.h.b16 %v498
    %v1936 = vunpack.c.l.b16 %v499
    %v1937 = vunpack.c.l.b16 %v500
    %v1938 = vunpack.c.h.b16 %v500
    %v1939 = vunpack.c.l.b16 %v501
    %v1940 = vunpack.c.l.b16 %v502
    %v1941 = vunpack.c.h.b16 %v502
    %v1942 = vunpack.c.l.b16 %v503
    %v1943 = vunpack.c.l.b16 %v504
    %v1944 = vunpack.c.h.b16 %v504
    %v1945 = vunpack.c.l.b16 %v505
    %v1946 = vunpack.c.l.b16 %v506
    %v1947 = vunpack.c.h.b16 %v506
    %v1948 = vunpack.c.l.b16 %v507
    %v1949 = vunpack.c.l.b16 %v508
    %v1950 = vunpack.c.h.b16 %v508
    %v1951 = vunpack.c.l.b16 %v509
    %v1952 = vunpack.c.l.b16 %v510
    %v1953 = vunpack.c.h.b16 %v510
    %v1954 = vunpack.c.l.b16 %v511
    %v1955 = vunpack.c.l.b16 %v512
    %v1956 = vunpack.c.h.b16 %v512
    %v1957 = vunpack.c.l.b16 %v513
    %v1958 = vunpack.c.l.b16 %v514
    %v1959 = vunpack.c.h.b16 %v514
    %v1960 = vunpack.c.l.b16 %v515
    %v1961 = vunpack.c.l.b16 %v516
    %v1962 = vunpack.c.h.b16 %v516
    %v1963 = vunpack.c.l.b16 %v517
    %v1964 = vunpack.c.l.b16 %v518
    %v1965 = vunpack.c.h.b16 %v518
    %v1966 = vunpack.c.l.b16 %v519
    %v1967 = vunpack.c.l.b16 %v520
    %v1968 = vunpack.c.h.b16 %v520
    %v1969 = vunpack.c.l.b16 %v521
    %v1970 = vunpack.c.l.b16 %v522
    %v1971 = vunpack.c.h.b16 %v522
    %v1972 = vunpack.c.l.b16 %v523
    %v1973 = vunpack.c.l.b16 %v524
    %v1974 = vunpack.c.h.b16 %v524
    %v1975 = vunpack.c.l.b16 %v525
    %v1976 = vunpack.c.l.b16 %v526
    %v1977 = vunpack.c.h.b16 %v526
    %v1978 = vunpack.c.l.b16 %v527
    %v1979 = vunpack.c.l.b16 %v528
    %v1980 = vunpack.c.h.b16 %v528
    %v1981 = vunpack.c.l.b16 %v529
    %v1982 = vunpack.c.l.b16 %v530
    %v1983 = vunpack.c.h.b16 %v530
    %v1984 = vunpack.c.l.b16 %v531
    %v1985 = vunpack.c.l.b16 %v532
    %v1986 = vunpack.c.h.b16 %v532
    %v1987 = vunpack.c.l.b16 %v533
    %v1988 = vunpack.c.l.b16 %v534
    %v1989 = vunpack.c.h.b16 %v534
    %v1990 = vunpack.c.l.b16 %v535
    %v1991 = vunpack.c.l.b16 %v536
    %v1992 = vunpack.c.h.b16 %v536
    %v1993 = vunpack.c.l.b16 %v537
    %v1994 = vunpack.c.l.b16 %v538
    %v1995 = vunpack.c.h.b16 %v538
    %v1996 = vunpack.c.l.b16 %v539
    %v1997 = vunpack.c.l.b16 %v540
    %v1998 = vunpack.c.h.b16 %v540
    %v1999 = vunpack.c.l.b16 %v541
    %v2000 = vunpack.c.l.b16 %v542
    %v2001 = vunpack.c.h.b16 %v542
    %v2002 = vunpack.c.l.b16 %v543
    %v2003 = vunpack.c.l.b16 %v544
    %v2004 = vunpack.c.h.b16 %v544
    %v2005 = vunpack.c.l.b16 %v545
    %v2006 = vunpack.c.l.b16 %v546
    %v2007 = vunpack.c.h.b16 %v546
    %v2008 = vunpack.c.l.b16 %v547
    %v2009 = vunpack.c.l.b16 %v548
    %v2010 = vunpack.c.h.b16 %v548
    %v2011 = vunpack.c.l.b16 %v549
    %v2012 = vunpack.c.l.b16 %v550
    %v2013 = vunpack.c.h.b16 %v550
    %v2014 = vunpack.c.l.b16 %v551
    %v2015 = vunpack.c.l.b16 %v552
    %v2016 = vunpack.c.h.b16 %v552
    %v2017 = vunpack.c.l.b16 %v553
    %v2018 = vunpack.c.l.b16 %v554
    %v2019 = vunpack.c.h.b16 %v554
    %v2020 = vunpack.c.l.b16 %v555
    %v2021 = vunpack.c.l.b16 %v556
    %v2022 = vunpack.c.h.b16 %v556
    %v2023 = vunpack.c.l.b16 %v557
    %v2024 = vunpack.c.l.b16 %v558
    %v2025 = vunpack.c.h.b16 %v558
    %v2026 = vunpack.c.l.b16 %v559
    %v2027 = vunpack.c.l.b16 %v560
    %v2028 = vunpack.c.h.b16 %v560
    %v2029 = vunpack.c.l.b16 %v561
    %v2030 = vunpack.c.l.b16 %v562
    %v2031 = vunpack.c.h.b16 %v562
    %v2032 = vunpack.c.l.b16 %v563
    %v2033 = vunpack.c.l.b16 %v564
    %v2034 = vunpack.c.h.b16 %v564
    %v2035 = vunpack.c.l.b16 %v565
    %v2036 = vunpack.c.l.b16 %v566
    %v2037 = vunpack.c.h.b16 %v566
    %v2038 = vunpack.c.l.b16 %v567
    %v2039 = vunpack.c.l.b16 %v568
    %v2040 = vunpack.c.h.b16 %v568
    %v2041 = vunpack.c.l.b16 %v569
    %v2042 = vunpack.c.l.b16 %v570
    %v2043 = vunpack.c.h.b16 %v570
    %v2044 = vunpack.c.l.b16 %v571
    %v2045 = vunpack.c.l.b16 %v572
    %v2046 = vunpack.c.h.b16 %v572
    %v2047 = vunpack.c.l.b16 %v573
    %v2048 = vunpack.c.l.b16 %v574
    %v2049 = vunpack.c.h.b16 %v574
    %v2050 = vunpack.c.l.b16 %v575
    %v2051 = vunpack.c.l.b16 %v576
    %v2052 = vunpack.c.h.b16 %v576
    %v2053 = vunpack.c.l.b16 %v577
    %v2054 = vunpack.c.l.b16 %v578
    %v2055 = vunpack.c.h.b16 %v578
    %v2056 = vunpack.c.l.b16 %v579
    %v2057 = vunpack.c.l.b16 %v580
    %v2058 = vunpack.c.h.b16 %v580
    %v2059 = vunpack.c.l.b16 %v581
    %v2060 = vunpack.c.l.b16 %v582
    %v2061 = vunpack.c.h.b16 %v582
    %v2062 = vunpack.c.l.b16 %v583
    %v2063 = vunpack.c.l.b16 %v584
    %v2064 = vunpack.c.h.b16 %v584
    %v2065 = vunpack.c.l.b16 %v585
    %v2066 = vunpack.c.l.b16 %v586
    %v2067 = vunpack.c.h.b16 %v586
    %v2068 = vunpack.c.l.b16 %v587
    %v2069 = vunpack.c.l.b16 %v588
    %v2070 = vunpack.c.h.b16 %v588
    %v2071 = vunpack.c.l.b16 %v589
    %v2072 = vunpack.c.l.b16 %v590
    %v2073 = vunpack.c.h.b16 %v590
    %v2074 = vunpack.c.l.b16 %v591
    %v2075 = vunpack.c.l.b16 %v592
    %v2076 = vunpack.c.h.b16 %v592
    %v2077 = vunpack.c.l.b16 %v593
    %v2078 = vunpack.c.l.b16 %v594
    %v2079 = vunpack.c.h.b16 %v594
    %v2080 = vunpack.c.l.b16 %v595
    %v2081 = vunpack.c.l.b16 %v596
    %v2082 = vunpack.c.h.b16 %v596
    %v2083 = vunpack.c.l.b16 %v597
    %v2084 = vunpack.c.l.b16 %v598
    %v2085 = vunpack.c.h.b16 %v598
    %v2086 = vunpack.c.l.b16 %v599
    %v2087 = vunpack.c.l.b16 %v600
    %v2088 = vunpack.c.h.b16 %v600
    %v2089 = vunpack.c.l.b16 %v601
    %v2090 = vpack.c.b16 %v1229, %v1226
    %v2091 = vpack.c.b16 %v1230, %v1227
    %v2092 = vpack.c.b16 %v1231, %v1228
    %v2093 = vpack.c.b16 %v1235, %v1232
    %v2094 = vpack.c.b16 %v1236, %v1233
    %v2095 = vpack.c.b16 %v1237, %v1234
    %v2096 = vpack.c.b16 %v1241, %v1238
    %v2097 = vpack.c.b16 %v1242, %v1239
    %v2098 = vpack.c.b16 %v1243, %v1240
    %v2099 = vpack.c.b16 %v1247, %v1244
    %v2100 = vpack.c.b16 %v1248, %v1245
    %v2101 = vpack.c.b16 %v1249, %v1246
    %v2102 = vpack.c.b16 %v1253, %v1250
    %v2103 = vpack.c.b16 %v1254, %v1251
    %v2104 = vpack.c.b16 %v1255, %v1252
    %v2105 = vpack.c.b16 %v1259, %v1256
    %v2106 = vpack.c.b16 %v1260, %v1257
    %v2107 = vpack.c.b16 %v1261, %v1258
    %v2108 = vpack.c.b16 %v1265, %v1262
    %v2109 = vpack.c.b16 %v1266, %v1263
    %v2110 = vpack.c.b16 %v1267, %v1264
    %v2111 = vpack.c.b16 %v1271, %v1268
    %v2112 = vpack.c.b16 %v1272, %v1269
    %v2113 = vpack.c.b16 %v1273, %v1270
    %v2114 = vpack.c.b16 %v1277, %v1274
    %v2115 = vpack.c.b16 %v1278, %v1275
    %v2116 = vpack.c.b16 %v1279, %v1276
    %v2117 = vpack.c.b16 %v1283, %v1280
    %v2118 = vpack.c.b16 %v1284, %v1281
    %v2119 = vpack.c.b16 %v1285, %v1282
    %v2120 = vpack.c.b16 %v1289, %v1286
    %v2121 = vpack.c.b16 %v1290, %v1287
    %v2122 = vpack.c.b16 %v1291, %v1288
    %v2123 = vpack.c.b16 %v1295, %v1292
    %v2124 = vpack.c.b16 %v1296, %v1293
    %v2125 = vpack.c.b16 %v1297, %v1294
    %v2126 = vpack.c.b16 %v1301, %v1298
    %v2127 = vpack.c.b16 %v1302, %v1299
    %v2128 = vpack.c.b16 %v1303, %v1300
    %v2129 = vpack.c.b16 %v1307, %v1304
    %v2130 = vpack.c.b16 %v1308, %v1305
    %v2131 = vpack.c.b16 %v1309, %v1306
    %v2132 = vpack.c.b16 %v1313, %v1310
    %v2133 = vpack.c.b16 %v1314, %v1311
    %v2134 = vpack.c.b16 %v1315, %v1312
    %v2135 = vpack.c.b16 %v1319, %v1316
    %v2136 = vpack.c.b16 %v1320, %v1317
    %v2137 = vpack.c.b16 %v1321, %v1318
    %v2138 = vpack.c.b16 %v1325, %v1322
    %v2139 = vpack.c.b16 %v1326, %v1323
    %v2140 = vpack.c.b16 %v1327, %v1324
    %v2141 = vpack.c.b16 %v1331, %v1328
    %v2142 = vpack.c.b16 %v1332, %v1329
    %v2143 = vpack.c.b16 %v1333, %v1330
    %v2144 = vpack.c.b16 %v1337, %v1334
    %v2145 = vpack.c.b16 %v1338, %v1335
    %v2146 = vpack.c.b16 %v1339, %v1336
    %v2147 = vpack.c.b16 %v1343, %v1340
    %v2148 = vpack.c.b16 %v1344, %v1341
    %v2149 = vpack.c.b16 %v1345, %v1342
    %v2150 = vpack.c.b16 %v1349, %v1346
    %v2151 = vpack.c.b16 %v1350, %v1347
    %v2152 = vpack.c.b16 %v1351, %v1348
    %v2153 = vpack.c.b16 %v1355, %v1352
    %v2154 = vpack.c.b16 %v1356, %v1353
    %v2155 = vpack.c.b16 %v1357, %v1354
    %v2156 = vpack.c.b16 %v1361, %v1358
    %v2157 = vpack.c.b16 %v1362, %v1359
    %v2158 = vpack.c.b16 %v1363, %v1360
    %v2159 = vpack.c.b16 %v1367, %v1364
    %v2160 = vpack.c.b16 %v1368, %v1365
    %v2161 = vpack.c.b16 %v1369, %v1366
    %v2162 = vpack.c.b16 %v1373, %v1370
    %v2163 = vpack.c.b16 %v1374, %v1371
    %v2164 = vpack.c.b16 %v1375, %v1372
    %v2165 = vpack.c.b16 %v1379, %v1376
    %v2166 = vpack.c.b16 %v1380, %v1377
    %v2167 = vpack.c.b16 %v1381, %v1378
    %v2168 = vpack.c.b16 %v1385, %v1382
    %v2169 = vpack.c.b16 %v1386, %v1383
    %v2170 = vpack.c.b16 %v1387, %v1384
    %v2171 = vpack.c.b16 %v1391, %v1388
    %v2172 = vpack.c.b16 %v1392, %v1389
    %v2173 = vpack.c.b16 %v1393, %v1390
    %v2174 = vpack.c.b16 %v1397, %v1394
    %v2175 = vpack.c.b16 %v1398, %v1395
    %v2176 = vpack.c.b16 %v1399, %v1396
    %v2177 = vpack.c.b16 %v1403, %v1400
    %v2178 = vpack.c.b16 %v1404, %v1401
    %v2179 = vpack.c.b16 %v1405, %v1402
    %v2180 = vpack.c.b16 %v1409, %v1406
    %v2181 = vpack.c.b16 %v1410, %v1407
    %v2182 = vpack.c.b16 %v1411, %v1408
    %v2183 = vpack.c.b16 %v1415, %v1412
    %v2184 = vpack.c.b16 %v1416, %v1413
    %v2185 = vpack.c.b16 %v1417, %v1414
    %v2186 = vpack.c.b16 %v1421, %v1418
    %v2187 = vpack.c.b16 %v1422, %v1419
    %v2188 = vpack.c.b16 %v1423, %v1420
    %v2189 = vpack.c.b16 %v1427, %v1424
    %v2190 = vpack.c.b16 %v1428, %v1425
    %v2191 = vpack.c.b16 %v1429, %v1426
    %v2192 = vpack.c.b16 %v1433, %v1430
    %v2193 = vpack.c.b16 %v1434, %v1431
    %v2194 = vpack.c.b16 %v1435, %v1432
    %v2195 = vpack.c.b16 %v1439, %v1436
    %v2196 = vpack.c.b16 %v1440, %v1437
    %v2197 = vpack.c.b16 %v1441, %v1438
    %v2198 = vpack.c.b16 %v1445, %v1442
    %v2199 = vpack.c.b16 %v1446, %v1443
    %v2200 = vpack.c.b16 %v1447, %v1444
    %v2201 = vpack.c.b16 %v1451, %v1448
    %v2202 = vpack.c.b16 %v1452, %v1449
    %v2203 = vpack.c.b16 %v1453, %v1450
    %v2204 = vpack.c.b16 %v1457, %v1454
    %v2205 = vpack.c.b16 %v1458, %v1455
    %v2206 = vpack.c.b16 %v1459, %v1456
    %v2207 = vpack.c.b16 %v1463, %v1460
    %v2208 = vpack.c.b16 %v1464, %v1461
    %v2209 = vpack.c.b16 %v1465, %v1462
    %v2210 = vpack.c.b16 %v1469, %v1466
    %v2211 = vpack.c.b16 %v1470, %v1467
    %v2212 = vpack.c.b16 %v1471, %v1468
    %v2213 = vpack.c.b16 %v1475, %v1472
    %v2214 = vpack.c.b16 %v1476, %v1473
    %v2215 = vpack.c.b16 %v1477, %v1474
    %v2216 = vpack.c.b16 %v1481, %v1478
    %v2217 = vpack.c.b16 %v1482, %v1479
    %v2218 = vpack.c.b16 %v1483, %v1480
    %v2219 = vpack.c.b16 %v1487, %v1484
    %v2220 = vpack.c.b16 %v1488, %v1485
    %v2221 = vpack.c.b16 %v1489, %v1486
    %v2222 = vpack.c.b16 %v1493, %v1490
    %v2223 = vpack.c.b16 %v1494, %v1491
    %v2224 = vpack.c.b16 %v1495, %v1492
    %v2225 = vpack.c.b16 %v1499, %v1496
    %v2226 = vpack.c.b16 %v1500, %v1497
    %v2227 = vpack.c.b16 %v1501, %v1498
    %v2228 = vpack.c.b16 %v1505, %v1502
    %v2229 = vpack.c.b16 %v1506, %v1503
    %v2230 = vpack.c.b16 %v1507, %v1504
    %v2231 = vpack.c.b16 %v1511, %v1508
    %v2232 = vpack.c.b16 %v1512, %v1509
    %v2233 = vpack.c.b16 %v1513, %v1510
    %v2234 = vpack.c.b16 %v1517, %v1514
    %v2235 = vpack.c.b16 %v1518, %v1515
    %v2236 = vpack.c.b16 %v1519, %v1516
    %v2237 = vpack.c.b16 %v1523, %v1520
    %v2238 = vpack.c.b16 %v1524, %v1521
    %v2239 = vpack.c.b16 %v1525, %v1522
    %v2240 = vpack.c.b16 %v1529, %v1526
    %v2241 = vpack.c.b16 %v1530, %v1527
    %v2242 = vpack.c.b16 %v1531, %v1528
    %v2243 = vpack.c.b16 %v1535, %v1532
    %v2244 = vpack.c.b16 %v1536, %v1533
    %v2245 = vpack.c.b16 %v1537, %v1534
    %v2246 = vpack.c.b16 %v1541, %v1538
    %v2247 = vpack.c.b16 %v1542, %v1539
    %v2248 = vpack.c.b16 %v1543, %v1540
    %v2249 = vpack.c.b16 %v1547, %v1544
    %v2250 = vpack.c.b16 %v1548, %v1545
    %v2251 = vpack.c.b16 %v1549, %v1546
    %v2252 = vpack.c.b16 %v1553, %v1550
    %v2253 = vpack.c.b16 %v1554, %v1551
    %v2254 = vpack.c.b16 %v1555, %v1552
    %v2255 = vpack.c.b16 %v1559, %v1556
    %v2256 = vpack.c.b16 %v1560, %v1557
    %v2257 = vpack.c.b16 %v1561, %v1558
    %v2258 = vpack.c.b16 %v1565, %v1562
    %v2259 = vpack.c.b16 %v1566, %v1563
    %v2260 = vpack.c.b16 %v1567, %v1564
    %v2261 = vpack.c.b16 %v1571, %v1568
    %v2262 = vpack.c.b16 %v1572, %v1569
    %v2263 = vpack.c.b16 %v1573, %v1570
    %v2264 = vpack.c.b16 %v1577, %v1574
    %v2265 = vpack.c.b16 %v1578, %v1575
    %v2266 = vpack.c.b16 %v1579, %v1576
    %v2267 = vpack.c.b16 %v1583, %v1580
    %v2268 = vpack.c.b16 %v1584, %v1581
    %v2269 = vpack.c.b16 %v1585, %v1582
    %v2270 = vpack.c.b16 %v1589, %v1586
    %v2271 = vpack.c.b16 %v1590, %v1587
    %v2272 = vpack.c.b16 %v1591, %v1588
    %v2273 = vpack.c.b16 %v1595, %v1592
    %v2274 = vpack.c.b16 %v1596, %v1593
    %v2275 = vpack.c.b16 %v1597, %v1594
    %v2276 = vpack.c.b16 %v1601, %v1598
    %v2277 = vpack.c.b16 %v1602, %v1599
    %v2278 = vpack.c.b16 %v1603, %v1600
    %v2279 = vpack.c.b16 %v1607, %v1604
    %v2280 = vpack.c.b16 %v1608, %v1605
    %v2281 = vpack.c.b16 %v1609, %v1606
    %v2282 = vpack.c.b16 %v1613, %v1610
    %v2283 = vpack.c.b16 %v1614, %v1611
    %v2284 = vpack.c.b16 %v1615, %v1612
    %v2285 = vpack.c.b16 %v1619, %v1616
    %v2286 = vpack.c.b16 %v1620, %v1617
    %v2287 = vpack.c.b16 %v1621, %v1618
    %v2288 = vpack.c.b16 %v1625, %v1622
    %v2289 = vpack.c.b16 %v1626, %v1623
    %v2290 = vpack.c.b16 %v1627, %v1624
    %v2291 = vpack.c.b16 %v1631, %v1628
    %v2292 = vpack.c.b16 %v1632, %v1629
    %v2293 = vpack.c.b16 %v1633, %v1630
    %v2294 = vpack.c.b16 %v1637, %v1634
    %v2295 = vpack.c.b16 %v1638, %v1635
    %v2296 = vpack.c.b16 %v1639, %v1636
    %v2297 = vpack.c.b16 %v1643, %v1640
    %v2298 = vpack.c.b16 %v1644, %v1641
    %v2299 = vpack.c.b16 %v1645, %v1642
    %v2300 = vpack.c.b16 %v1649, %v1646
    %v2301 = vpack.c.b16 %v1650, %v1647
    %v2302 = vpack.c.b16 %v1651, %v1648
    %v2303 = vpack.c.b16 %v1655, %v1652
    %v2304 = vpack.c.b16 %v1656, %v1653
    %v2305 = vpack.c.b16 %v1657, %v1654
    %v2306 = vpack.c.b16 %v1661, %v1658
    %v2307 = vpack.c.b16 %v1662, %v1659
    %v2308 = vpack.c.b16 %v1663, %v1660
    %v2309 = vpack.c.b16 %v1667, %v1664
    %v2310 = vpack.c.b16 %v1668, %v1665
    %v2311 = vpack.c.b16 %v1669, %v1666
    %v2312 = vpack.c.b16 %v1673, %v1670
    %v2313 = vpack.c.b16 %v1674, %v1671
    %v2314 = vpack.c.b16 %v1675, %v1672
    %v2315 = vpack.c.b16 %v1679, %v1676
    %v2316 = vpack.c.b16 %v1680, %v1677
    %v2317 = vpack.c.b16 %v1681, %v1678
    %v2318 = vpack.c.b16 %v1685, %v1682
    %v2319 = vpack.c.b16 %v1686, %v1683
    %v2320 = vpack.c.b16 %v1687, %v1684
    %v2321 = vpack.c.b16 %v1691, %v1688
    %v2322 = vpack.c.b16 %v1692, %v1689
    %v2323 = vpack.c.b16 %v1693, %v1690
    %v2324 = vpack.c.b16 %v1697, %v1694
    %v2325 = vpack.c.b16 %v1698, %v1695
    %v2326 = vpack.c.b16 %v1699, %v1696
    %v2327 = vpack.c.b16 %v1703, %v1700
    %v2328 = vpack.c.b16 %v1704, %v1701
    %v2329 = vpack.c.b16 %v1705, %v1702
    %v2330 = vpack.c.b16 %v1709, %v1706
    %v2331 = vpack.c.b16 %v1710, %v1707
    %v2332 = vpack.c.b16 %v1711, %v1708
    %v2333 = vpack.c.b16 %v1715, %v1712
    %v2334 = vpack.c.b16 %v1716, %v1713
    %v2335 = vpack.c.b16 %v1717, %v1714
    %v2336 = vpack.c.b16 %v1721, %v1718
    %v2337 = vpack.c.b16 %v1722, %v1719
    %v2338 = vpack.c.b16 %v1723, %v1720
    %v2339 = vpack.c.b16 %v1727, %v1724
    %v2340 = vpack.c.b16 %v1728, %v1725
    %v2341 = vpack.c.b16 %v1729, %v1726
    %v2342 = vpack.c.b16 %v1733, %v1730
    %v2343 = vpack.c.b16 %v1734, %v1731
    %v2344 = vpack.c.b16 %v1735, %v1732
    %v2345 = vpack.c.b16 %v1739, %v1736
    %v2346 = vpack.c.b16 %v1740, %v1737
    %v2347 = vpack.c.b16 %v1741, %v1738
    %v2348 = vpack.c.b16 %v1745, %v1742
    %v2349 = vpack.c.b16 %v1746, %v1743
    %v2350 = vpack.c.b16 %v1747, %v1744
    %v2351 = vpack.c.b16 %v1751, %v1748
    %v2352 = vpack.c.b16 %v1752, %v1749
    %v2353 = vpack.c.b16 %v1753, %v1750
    %v2354 = vpack.c.b16 %v1757, %v1754
    %v2355 = vpack.c.b16 %v1758, %v1755
    %v2356 = vpack.c.b16 %v1759, %v1756
    %v2357 = vpack.c.b16 %v1763, %v1760
    %v2358 = vpack.c.b16 %v1764, %v1761
    %v2359 = vpack.c.b16 %v1765, %v1762
    %v2360 = vpack.c.b16 %v1769, %v1766
    %v2361 = vpack.c.b16 %v1770, %v1767
    %v2362 = vpack.c.b16 %v1771, %v1768
    %v2363 = vpack.c.b16 %v1775, %v1772
    %v2364 = vpack.c.b16 %v1776, %v1773
    %v2365 = vpack.c.b16 %v1777, %v1774
    %v2366 = vpack.c.b16 %v1781, %v1778
    %v2367 = vpack.c.b16 %v1782, %v1779
    %v2368 = vpack.c.b16 %v1783, %v1780
    %v2369 = vpack.c.b16 %v1787, %v1784
    %v2370 = vpack.c.b16 %v1788, %v1785
    %v2371 = vpack.c.b16 %v1789, %v1786
    %v2372 = vpack.c.b16 %v1793, %v1790
    %v2373 = vpack.c.b16 %v1794, %v1791
    %v2374 = vpack.c.b16 %v1795, %v1792
    %v2375 = vpack.c.b16 %v1799, %v1796
    %v2376 = vpack.c.b16 %v1800, %v1797
    %v2377 = vpack.c.b16 %v1801, %v1798
    %v2378 = vpack.c.b16 %v1805, %v1802
    %v2379 = vpack.c.b16 %v1806, %v1803
    %v2380 = vpack.c.b16 %v1807, %v1804
    %v2381 = vpack.c.b16 %v1811, %v1808
    %v2382 = vpack.c.b16 %v1812, %v1809
    %v2383 = vpack.c.b16 %v1813, %v1810
    %v2384 = vpack.c.b16 %v1817, %v1814
    %v2385 = vpack.c.b16 %v1818, %v1815
    %v2386 = vpack.c.b16 %v1819, %v1816
    %v2387 = vpack.c.b16 %v1823, %v1820
    %v2388 = vpack.c.b16 %v1824, %v1821
    %v2389 = vpack.c.b16 %v1825, %v1822
    %v2390 = vpack.c.b16 %v1829, %v1826
    %v2391 = vpack.c.b16 %v1830, %v1827
    %v2392 = vpack.c.b16 %v1831, %v1828
    %v2393 = vpack.c.b16 %v1835, %v1832
    %v2394 = vpack.c.b16 %v1836, %v1833
    %v2395 = vpack.c.b16 %v1837, %v1834
    %v2396 = vpack.c.b16 %v1841, %v1838
    %v2397 = vpack.c.b16 %v1842, %v1839
    %v2398 = vpack.c.b16 %v1843, %v1840
    %v2399 = vpack.c.b16 %v1847, %v1844
    %v2400 = vpack.c.b16 %v1848, %v1845
    %v2401 = vpack.c.b16 %v1849, %v1846
    %v2402 = vpack.c.b16 %v1853, %v1850
    %v2403 = vpack.c.b16 %v1854, %v1851
    %v2404 = vpack.c.b16 %v1855, %v1852
    %v2405 = vpack.c.b16 %v1859, %v1856
    %v2406 = vpack.c.b16 %v1860, %v1857
    %v2407 = vpack.c.b16 %v1861, %v1858
    %v2408 = vpack.c.b16 %v1865, %v1862
    %v2409 = vpack.c.b16 %v1866, %v1863
    %v2410 = vpack.c.b16 %v1867, %v1864
    %v2411 = vpack.c.b16 %v1871, %v1868
    %v2412 = vpack.c.b16 %v1872, %v1869
    %v2413 = vpack.c.b16 %v1873, %v1870
    %v2414 = vpack.c.b16 %v1877, %v1874
    %v2415 = vpack.c.b16 %v1878, %v1875
    %v2416 = vpack.c.b16 %v1879, %v1876
    %v2417 = vpack.c.b16 %v1883, %v1880
    %v2418 = vpack.c.b16 %v1884, %v1881
    %v2419 = vpack.c.b16 %v1885, %v1882
    %v2420 = vpack.c.b16 %v1889, %v1886
    %v2421 = vpack.c.b16 %v1890, %v1887
    %v2422 = vpack.c.b16 %v1891, %v1888
    %v2423 = vpack.c.b16 %v1895, %v1892
    %v2424 = vpack.c.b16 %v1896, %v1893
    %v2425 = vpack.c.b16 %v1897, %v1894
    %v2426 = vpack.c.b16 %v1901, %v1898
    %v2427 = vpack.c.b16 %v1902, %v1899
    %v2428 = vpack.c.b16 %v1903, %v1900
    %v2429 = vpack.c.b16 %v1907, %v1904
    %v2430 = vpack.c.b16 %v1908, %v1905
    %v2431 = vpack.c.b16 %v1909, %v1906
    %v2432 = vpack.c.b16 %v1913, %v1910
    %v2433 = vpack.c.b16 %v1914, %v1911
    %v2434 = vpack.c.b16 %v1915, %v1912
    %v2435 = vpack.c.b16 %v1919, %v1916
    %v2436 = vpack.c.b16 %v1920, %v1917
    %v2437 = vpack.c.b16 %v1921, %v1918
    %v2438 = vpack.c.b16 %v1925, %v1922
    %v2439 = vpack.c.b16 %v1926, %v1923
    %v2440 = vpack.c.b16 %v1927, %v1924
    %v2441 = vpack.c.b16 %v1931, %v1928
    %v2442 = vpack.c.b16 %v1932, %v1929
    %v2443 = vpack.c.b16 %v1933, %v1930
    %v2444 = vpack.c.b16 %v1937, %v1934
    %v2445 = vpack.c.b16 %v1938, %v1935
    %v2446 = vpack.c.b16 %v1939, %v1936
    %v2447 = vpack.c.b16 %v1943, %v1940
    %v2448 = vpack.c.b16 %v1944, %v1941
    %v2449 = vpack.c.b16 %v1945, %v1942
    %v2450 = vpack.c.b16 %v1949, %v1946
    %v2451 = vpack.c.b16 %v1950, %v1947
    %v2452 = vpack.c.b16 %v1951, %v1948
    %v2453 = vpack.c.b16 %v1955, %v1952
    %v2454 = vpack.c.b16 %v1956, %v1953
    %v2455 = vpack.c.b16 %v1957, %v1954
    %v2456 = vpack.c.b16 %v1961, %v1958
    %v2457 = vpack.c.b16 %v1962, %v1959
    %v2458 = vpack.c.b16 %v1963, %v1960
    %v2459 = vpack.c.b16 %v1967, %v1964
    %v2460 = vpack.c.b16 %v1968, %v1965
    %v2461 = vpack.c.b16 %v1969, %v1966
    %v2462 = vpack.c.b16 %v1973, %v1970
    %v2463 = vpack.c.b16 %v1974, %v1971
    %v2464 = vpack.c.b16 %v1975, %v1972
    %v2465 = vpack.c.b16 %v1979, %v1976
    %v2466 = vpack.c.b16 %v1980, %v1977
    %v2467 = vpack.c.b16 %v1981, %v1978
    %v2468 = vpack.c.b16 %v1985, %v1982
    %v2469 = vpack.c.b16 %v1986, %v1983
    %v2470 = vpack.c.b16 %v1987, %v1984
    %v2471 = vpack.c.b16 %v1991, %v1988
    %v2472 = vpack.c.b16 %v1992, %v1989
    %v2473 = vpack.c.b16 %v1993, %v1990
    %v2474 = vpack.c.b16 %v1997, %v1994
    %v2475 = vpack.c.b16 %v1998, %v1995
    %v2476 = vpack.c.b16 %v1999, %v1996
    %v2477 = vpack.c.b16 %v2003, %v2000
    %v2478 = vpack.c.b16 %v2004, %v2001
    %v2479 = vpack.c.b16 %v2005, %v2002
    %v2480 = vpack.c.b16 %v2009, %v2006
    %v2481 = vpack.c.b16 %v2010, %v2007
    %v2482 = vpack.c.b16 %v2011, %v2008
    %v2483 = vpack.c.b16 %v2015, %v2012
    %v2484 = vpack.c.b16 %v2016, %v2013
    %v2485 = vpack.c.b16 %v2017, %v2014
    %v2486 = vpack.c.b16 %v2021, %v2018
    %v2487 = vpack.c.b16 %v2022, %v2019
    %v2488 = vpack.c.b16 %v2023, %v2020
    %v2489 = vpack.c.b16 %v2027, %v2024
    %v2490 = vpack.c.b16 %v2028, %v2025
    %v2491 = vpack.c.b16 %v2029, %v2026
    %v2492 = vpack.c.b16 %v2033, %v2030
    %v2493 = vpack.c.b16 %v2034, %v2031
    %v2494 = vpack.c.b16 %v2035, %v2032
    %v2495 = vpack.c.b16 %v2039, %v2036
    %v2496 = vpack.c.b16 %v2040, %v2037
    %v2497 = vpack.c.b16 %v2041, %v2038
    %v2498 = vpack.c.b16 %v2045, %v2042
    %v2499 = vpack.c.b16 %v2046, %v2043
    %v2500 = vpack.c.b16 %v2047, %v2044
    %v2501 = vpack.c.b16 %v2051, %v2048
    %v2502 = vpack.c.b16 %v2052, %v2049
    %v2503 = vpack.c.b16 %v2053, %v2050
    %v2504 = vpack.c.b16 %v2057, %v2054
    %v2505 = vpack.c.b16 %v2058, %v2055
    %v2506 = vpack.c.b16 %v2059, %v2056
    %v2507 = vpack.c.b16 %v2063, %v2060
    %v2508 = vpack.c.b16 %v2064, %v2061
    %v2509 = vpack.c.b16 %v2065, %v2062
    %v2510 = vpack.c.b16 %v2069, %v2066
    %v2511 = vpack.c.b16 %v2070, %v2067
    %v2512 = vpack.c.b16 %v2071, %v2068
    %v2513 = vpack.c.b16 %v2075, %v2072
    %v2514 = vpack.c.b16 %v2076, %v2073
    %v2515 = vpack.c.b16 %v2077, %v2074
    %v2516 = vpack.c.b16 %v2081, %v2078
    %v2517 = vpack.c.b16 %v2082, %v2079
    %v2518 = vpack.c.b16 %v2083, %v2080
    %v2519 = vpack.c.b16 %v2087, %v2084
    %v2520 = vpack.c.b16 %v2088, %v2085
    %v2521 = vpack.c.b16 %v2089, %v2086
    %v3002 = vunpack.c.l.b16 %v602
    %v3003 = vunpack.c.l.b16 %v603
    %v3004 = vunpack.c.l.b16 %v604
    %v3005 = vunpack.c.l.b16 %v605
    %v3006 = vunpack.c.l.b16 %v606
    %v3007 = vunpack.c.l.b16 %v607
    %v3008 = vunpack.c.l.b16 %v608
    %v3009 = vunpack.c.l.b16 %v609
    %v3010 = vunpack.c.l.b16 %v610
    %v3011 = vunpack.c.l.b16 %v611
    %v3012 = vunpack.c.l.b16 %v612
    %v3013 = vunpack.c.l.b16 %v613
    %v3014 = vunpack.c.l.b16 %v614
    %v3015 = vunpack.c.l.b16 %v615
    %v3016 = vunpack.c.l.b16 %v616
    %v3017 = vunpack.c.l.b16 %v617
    %v3018 = vunpack.c.l.b16 %v618
    %v3019 = vunpack.c.l.b16 %v619
    %v3020 = vunpack.c.l.b16 %v620
    %v3021 = vunpack.c.l.b16 %v621
    %v3022 = vunpack.c.l.b16 %v622
    %v3023 = vunpack.c.l.b16 %v623
    %v3024 = vunpack.c.l.b16 %v624
    %v3025 = vunpack.c.l.b16 %v625
    %v3026 = vunpack.c.l.b16 %v626
    %v3027 = vunpack.c.l.b16 %v627
    %v3028 = vunpack.c.l.b16 %v628
    %v3029 = vunpack.c.l.b16 %v629
    %v3030 = vunpack.c.l.b16 %v630
    %v3031 = vunpack.c.l.b16 %v631
    %v3032 = vunpack.c.l.b16 %v632
    %v3033 = vunpack.c.l.b16 %v633
    %v3034 = vunpack.c.l.b16 %v634
    %v3035 = vunpack.c.l.b16 %v635
    %v3036 = vunpack.c.l.b16 %v636
    %v3037 = vunpack.c.l.b16 %v637
    %v3038 = vunpack.c.l.b16 %v638
    %v3039 = vunpack.c.l.b16 %v639
    %v3040 = vunpack.c.l.b16 %v640
    %v3041 = vunpack.c.l.b16 %v641
    %v3042 = vunpack.c.l.b16 %v642
    %v3043 = vunpack.c.l.b16 %v643
    %v3044 = vunpack.c.l.b16 %v644
    %v3045 = vunpack.c.l.b16 %v645
    %v3046 = vunpack.c.l.b16 %v646
    %v3047 = vunpack.c.l.b16 %v647
    %v3048 = vunpack.c.l.b16 %v648
    %v3049 = vunpack.c.l.b16 %v649
    %v3050 = vpack.c.b16 %v3003, %v3002
    %v3051 = vpack.c.b16 %v3005, %v3004
    %v3052 = vpack.c.b16 %v3007, %v3006
    %v3053 = vpack.c.b16 %v3009, %v3008
    %v3054 = vpack.c.b16 %v3011, %v3010
    %v3055 = vpack.c.b16 %v3013, %v3012
    %v3056 = vpack.c.b16 %v3015, %v3014
    %v3057 = vpack.c.b16 %v3017, %v3016
    %v3058 = vpack.c.b16 %v3019, %v3018
    %v3059 = vpack.c.b16 %v3021, %v3020
    %v3060 = vpack.c.b16 %v3023, %v3022
    %v3061 = vpack.c.b16 %v3025, %v3024
    %v3062 = vpack.c.b16 %v3027, %v3026
    %v3063 = vpack.c.b16 %v3029, %v3028
    %v3064 = vpack.c.b16 %v3031, %v3030
    %v3065 = vpack.c.b16 %v3033, %v3032
    %v3066 = vpack.c.b16 %v3035, %v3034
    %v3067 = vpack.c.b16 %v3037, %v3036
    %v3068 = vpack.c.b16 %v3039, %v3038
    %v3069 = vpack.c.b16 %v3041, %v3040
    %v3070 = vpack.c.b16 %v3043, %v3042
    %v3071 = vpack.c.b16 %v3045, %v3044
    %v3072 = vpack.c.b16 %v3047, %v3046
    %v3073 = vpack.c.b16 %v3049, %v3048
    %3098 = vmatprep.subr.bf16.mxu0 0
    %3099 = vmatpush1.bf16.msra.mxu0 %v3057
    %3100 = vmatprep.subr.bf16.mxu0 0
    %3101 = vmatpush1.bf16.msra.mxu0 %v3056
    %3102 = vmatprep.subr.bf16.mxu0 0
    %3103 = vmatpush1.bf16.msra.mxu0 %v3055
    %3104 = vmatprep.subr.bf16.mxu0 0
    %3105 = vmatpush1.bf16.msra.mxu0 %v3054
    %3106 = vmatprep.subr.bf16.mxu0 0
    %3107 = vmatpush1.bf16.msra.mxu0 %v3053
    %3108 = vmatprep.subr.bf16.mxu0 0
    %3109 = vmatpush1.bf16.msra.mxu0 %v3052
    %3110 = vmatprep.subr.bf16.mxu0 0
    %3111 = vmatpush1.bf16.msra.mxu0 %v3051
    %3112 = vmatprep.subr.bf16.mxu0 0
    %3113 = vmatpush1.bf16.msra.mxu0 %v3050
    %3114 = vmatprep.subr.bf16.mxu0 0
    %3115 = vmatpush2.bf16.msra.mxu0 %v3065
    %3116 = vmatprep.subr.bf16.mxu0 0
    %3117 = vmatpush2.bf16.msra.mxu0 %v3064
    %3118 = vmatprep.subr.bf16.mxu0 0
    %3119 = vmatpush2.bf16.msra.mxu0 %v3063
    %3120 = vmatprep.subr.bf16.mxu0 0
    %3121 = vmatpush2.bf16.msra.mxu0 %v3062
    %3122 = vmatprep.subr.bf16.mxu0 0
    %3123 = vmatpush2.bf16.msra.mxu0 %v3061
    %3124 = vmatprep.subr.bf16.mxu0 0
    %3125 = vmatpush2.bf16.msra.mxu0 %v3060
    %3126 = vmatprep.subr.bf16.mxu0 0
    %3127 = vmatpush2.bf16.msra.mxu0 %v3059
    %3128 = vmatprep.subr.bf16.mxu0 0
    %3129 = vmatpush2.bf16.msra.mxu0 %v3058
    %3130 = vmatprep.mubr.bf16.mxu0 %v2091
    %3131 = vmatmul.mubr.bf16.gmra.mxu0 %v2090
    %v3132 = vpop.f32.mrf.mxu0
    %v3133 = vadd.f32 0.0, %v3132
    %v3134 = vpop.f32.mrf.mxu0
    %v3135 = vpop.f32.mrf.mxu0
    %v3136 = vadd.f32 0.0, %v3135
    %v3137 = vpop.f32.mrf.mxu0
    %3138 = vmatprep.mubr.bf16.mxu0 %v2094
    %3139 = vmatmul.mubr.bf16.gmra.mxu0 %v2093
    %v3140 = vpop.f32.mrf.mxu0
    %v3141 = vadd.f32 0.0, %v3140
    %v3142 = vpop.f32.mrf.mxu0
    %v3143 = vpop.f32.mrf.mxu0
    %v3144 = vadd.f32 0.0, %v3143
    %v3145 = vpop.f32.mrf.mxu0
    %3146 = vmatprep.mubr.bf16.mxu0 %v2097
    %3147 = vmatmul.mubr.bf16.gmra.mxu0 %v2096
    %v3148 = vpop.f32.mrf.mxu0
    %v3149 = vadd.f32 0.0, %v3148
    %v3150 = vpop.f32.mrf.mxu0
    %v3151 = vpop.f32.mrf.mxu0
    %v3152 = vadd.f32 0.0, %v3151
    %v3153 = vpop.f32.mrf.mxu0
    %3154 = vmatprep.mubr.bf16.mxu0 %v2100
    %3155 = vmatmul.mubr.bf16.gmra.mxu0 %v2099
    %v3156 = vpop.f32.mrf.mxu0
    %v3157 = vadd.f32 0.0, %v3156
    %v3158 = vpop.f32.mrf.mxu0
    %v3159 = vpop.f32.mrf.mxu0
    %v3160 = vadd.f32 0.0, %v3159
    %v3161 = vpop.f32.mrf.mxu0
    %3162 = vmatprep.mubr.bf16.mxu0 %v2103
    %3163 = vmatmul.mubr.bf16.gmra.mxu0 %v2102
    %v3164 = vpop.f32.mrf.mxu0
    %v3165 = vadd.f32 0.0, %v3164
    %v3166 = vpop.f32.mrf.mxu0
    %v3167 = vpop.f32.mrf.mxu0
    %v3168 = vadd.f32 0.0, %v3167
    %v3169 = vpop.f32.mrf.mxu0
    %3170 = vmatprep.mubr.bf16.mxu0 %v2106
    %3171 = vmatmul.mubr.bf16.gmra.mxu0 %v2105
    %v3172 = vpop.f32.mrf.mxu0
    %v3173 = vadd.f32 0.0, %v3172
    %v3174 = vpop.f32.mrf.mxu0
    %v3175 = vpop.f32.mrf.mxu0
    %v3176 = vadd.f32 0.0, %v3175
    %v3177 = vpop.f32.mrf.mxu0
    %3178 = vmatprep.mubr.bf16.mxu0 %v2109
    %3179 = vmatmul.mubr.bf16.gmra.mxu0 %v2108
    %v3180 = vpop.f32.mrf.mxu0
    %v3181 = vadd.f32 0.0, %v3180
    %v3182 = vpop.f32.mrf.mxu0
    %v3183 = vpop.f32.mrf.mxu0
    %v3184 = vadd.f32 0.0, %v3183
    %v3185 = vpop.f32.mrf.mxu0
    %3186 = vmatprep.mubr.bf16.mxu0 %v2112
    %3187 = vmatmul.mubr.bf16.gmra.mxu0 %v2111
    %v3188 = vpop.f32.mrf.mxu0
    %v3189 = vadd.f32 0.0, %v3188
    %v3190 = vpop.f32.mrf.mxu0
    %v3191 = vpop.f32.mrf.mxu0
    %v3192 = vadd.f32 0.0, %v3191
    %v3193 = vpop.f32.mrf.mxu0
    %3194 = vmatprep.mubr.bf16.mxu0 %v2115
    %3195 = vmatmul.mubr.bf16.gmra.mxu0 %v2114
    %v3196 = vpop.f32.mrf.mxu0
    %v3197 = vadd.f32 0.0, %v3196
    %v3198 = vpop.f32.mrf.mxu0
    %v3199 = vpop.f32.mrf.mxu0
    %v3200 = vadd.f32 0.0, %v3199
    %v3201 = vpop.f32.mrf.mxu0
    %3202 = vmatprep.mubr.bf16.mxu0 %v2118
    %3203 = vmatmul.mubr.bf16.gmra.mxu0 %v2117
    %v3204 = vpop.f32.mrf.mxu0
    %v3205 = vadd.f32 0.0, %v3204
    %v3206 = vpop.f32.mrf.mxu0
    %v3207 = vpop.f32.mrf.mxu0
    %v3208 = vadd.f32 0.0, %v3207
    %v3209 = vpop.f32.mrf.mxu0
    %3210 = vmatprep.mubr.bf16.mxu0 %v2121
    %3211 = vmatmul.mubr.bf16.gmra.mxu0 %v2120
    %v3212 = vpop.f32.mrf.mxu0
    %v3213 = vadd.f32 0.0, %v3212
    %v3214 = vpop.f32.mrf.mxu0
    %v3215 = vpop.f32.mrf.mxu0
    %v3216 = vadd.f32 0.0, %v3215
    %v3217 = vpop.f32.mrf.mxu0
    %3218 = vmatprep.mubr.bf16.mxu0 %v2124
    %3219 = vmatmul.mubr.bf16.gmra.mxu0 %v2123
    %v3220 = vpop.f32.mrf.mxu0
    %v3221 = vadd.f32 0.0, %v3220
    %v3222 = vpop.f32.mrf.mxu0
    %v3223 = vpop.f32.mrf.mxu0
    %v3224 = vadd.f32 0.0, %v3223
    %v3225 = vpop.f32.mrf.mxu0
    %3226 = vmatprep.mubr.bf16.mxu0 %v2127
    %3227 = vmatmul.mubr.bf16.gmra.mxu0 %v2126
    %v3228 = vpop.f32.mrf.mxu0
    %v3229 = vadd.f32 0.0, %v3228
    %v3230 = vpop.f32.mrf.mxu0
    %v3231 = vpop.f32.mrf.mxu0
    %v3232 = vadd.f32 0.0, %v3231
    %v3233 = vpop.f32.mrf.mxu0
    %3234 = vmatprep.mubr.bf16.mxu0 %v2130
    %3235 = vmatmul.mubr.bf16.gmra.mxu0 %v2129
    %v3236 = vpop.f32.mrf.mxu0
    %v3237 = vadd.f32 0.0, %v3236
    %v3238 = vpop.f32.mrf.mxu0
    %v3239 = vpop.f32.mrf.mxu0
    %v3240 = vadd.f32 0.0, %v3239
    %v3241 = vpop.f32.mrf.mxu0
    %3242 = vmatprep.mubr.bf16.mxu0 %v2133
    %3243 = vmatmul.mubr.bf16.gmra.mxu0 %v2132
    %v3244 = vpop.f32.mrf.mxu0
    %v3245 = vadd.f32 0.0, %v3244
    %v3246 = vpop.f32.mrf.mxu0
    %v3247 = vpop.f32.mrf.mxu0
    %v3248 = vadd.f32 0.0, %v3247
    %v3249 = vpop.f32.mrf.mxu0
    %3250 = vmatprep.mubr.bf16.mxu0 %v2136
    %3251 = vmatmul.mubr.bf16.gmra.mxu0 %v2135
    %v3252 = vpop.f32.mrf.mxu0
    %v3253 = vadd.f32 0.0, %v3252
    %v3254 = vpop.f32.mrf.mxu0
    %v3255 = vpop.f32.mrf.mxu0
    %v3256 = vadd.f32 0.0, %v3255
    %v3257 = vpop.f32.mrf.mxu0
    %3258 = vmatprep.mubr.bf16.mxu0 %v2139
    %3259 = vmatmul.mubr.bf16.gmra.mxu0 %v2138
    %v3260 = vpop.f32.mrf.mxu0
    %v3261 = vadd.f32 0.0, %v3260
    %v3262 = vpop.f32.mrf.mxu0
    %v3263 = vpop.f32.mrf.mxu0
    %v3264 = vadd.f32 0.0, %v3263
    %v3265 = vpop.f32.mrf.mxu0
    %3266 = vmatprep.mubr.bf16.mxu0 %v2142
    %3267 = vmatmul.mubr.bf16.gmra.mxu0 %v2141
    %v3268 = vpop.f32.mrf.mxu0
    %v3269 = vadd.f32 0.0, %v3268
    %v3270 = vpop.f32.mrf.mxu0
    %v3271 = vpop.f32.mrf.mxu0
    %v3272 = vadd.f32 0.0, %v3271
    %v3273 = vpop.f32.mrf.mxu0
    %3274 = vmatprep.mubr.bf16.mxu0 %v2145
    %3275 = vmatmul.mubr.bf16.gmra.mxu0 %v2144
    %v3276 = vpop.f32.mrf.mxu0
    %v3277 = vadd.f32 0.0, %v3276
    %v3278 = vpop.f32.mrf.mxu0
    %v3279 = vpop.f32.mrf.mxu0
    %v3280 = vadd.f32 0.0, %v3279
    %v3281 = vpop.f32.mrf.mxu0
    %3282 = vmatprep.mubr.bf16.mxu0 %v2148
    %3283 = vmatmul.mubr.bf16.gmra.mxu0 %v2147
    %v3284 = vpop.f32.mrf.mxu0
    %v3285 = vadd.f32 0.0, %v3284
    %v3286 = vpop.f32.mrf.mxu0
    %v3287 = vpop.f32.mrf.mxu0
    %v3288 = vadd.f32 0.0, %v3287
    %v3289 = vpop.f32.mrf.mxu0
    %3290 = vmatprep.mubr.bf16.mxu0 %v2151
    %3291 = vmatmul.mubr.bf16.gmra.mxu0 %v2150
    %v3292 = vpop.f32.mrf.mxu0
    %v3293 = vadd.f32 0.0, %v3292
    %v3294 = vpop.f32.mrf.mxu0
    %v3295 = vpop.f32.mrf.mxu0
    %v3296 = vadd.f32 0.0, %v3295
    %v3297 = vpop.f32.mrf.mxu0
    %3298 = vmatprep.mubr.bf16.mxu0 %v2154
    %3299 = vmatmul.mubr.bf16.gmra.mxu0 %v2153
    %v3300 = vpop.f32.mrf.mxu0
    %v3301 = vadd.f32 0.0, %v3300
    %v3302 = vpop.f32.mrf.mxu0
    %v3303 = vpop.f32.mrf.mxu0
    %v3304 = vadd.f32 0.0, %v3303
    %v3305 = vpop.f32.mrf.mxu0
    %3306 = vmatprep.mubr.bf16.mxu0 %v2157
    %3307 = vmatmul.mubr.bf16.gmra.mxu0 %v2156
    %v3308 = vpop.f32.mrf.mxu0
    %v3309 = vadd.f32 0.0, %v3308
    %v3310 = vpop.f32.mrf.mxu0
    %v3311 = vpop.f32.mrf.mxu0
    %v3312 = vadd.f32 0.0, %v3311
    %v3313 = vpop.f32.mrf.mxu0
    %3314 = vmatprep.mubr.bf16.mxu0 %v2160
    %3315 = vmatmul.mubr.bf16.gmra.mxu0 %v2159
    %v3316 = vpop.f32.mrf.mxu0
    %v3317 = vadd.f32 0.0, %v3316
    %v3318 = vpop.f32.mrf.mxu0
    %v3319 = vpop.f32.mrf.mxu0
    %v3320 = vadd.f32 0.0, %v3319
    %v3321 = vpop.f32.mrf.mxu0
    %3322 = vmatprep.mubr.bf16.mxu0 %v2163
    %3323 = vmatmul.mubr.bf16.gmra.mxu0 %v2162
    %v3324 = vpop.f32.mrf.mxu0
    %v3325 = vadd.f32 0.0, %v3324
    %v3326 = vpop.f32.mrf.mxu0
    %v3327 = vpop.f32.mrf.mxu0
    %v3328 = vadd.f32 0.0, %v3327
    %v3329 = vpop.f32.mrf.mxu0
    %3330 = vmatprep.mubr.bf16.mxu0 %v2166
    %3331 = vmatmul.mubr.bf16.gmra.mxu0 %v2165
    %v3332 = vpop.f32.mrf.mxu0
    %v3333 = vadd.f32 0.0, %v3332
    %v3334 = vpop.f32.mrf.mxu0
    %v3335 = vpop.f32.mrf.mxu0
    %v3336 = vadd.f32 0.0, %v3335
    %v3337 = vpop.f32.mrf.mxu0
    %3338 = vmatprep.mubr.bf16.mxu0 %v2169
    %3339 = vmatmul.mubr.bf16.gmra.mxu0 %v2168
    %v3340 = vpop.f32.mrf.mxu0
    %v3341 = vadd.f32 0.0, %v3340
    %v3342 = vpop.f32.mrf.mxu0
    %v3343 = vpop.f32.mrf.mxu0
    %v3344 = vadd.f32 0.0, %v3343
    %v3345 = vpop.f32.mrf.mxu0
    %3346 = vmatprep.mubr.bf16.mxu0 %v2172
    %3347 = vmatmul.mubr.bf16.gmra.mxu0 %v2171
    %v3348 = vpop.f32.mrf.mxu0
    %v3349 = vadd.f32 0.0, %v3348
    %v3350 = vpop.f32.mrf.mxu0
    %v3351 = vpop.f32.mrf.mxu0
    %v3352 = vadd.f32 0.0, %v3351
    %v3353 = vpop.f32.mrf.mxu0
    %3354 = vmatprep.mubr.bf16.mxu0 %v2175
    %3355 = vmatmul.mubr.bf16.gmra.mxu0 %v2174
    %v3356 = vpop.f32.mrf.mxu0
    %v3357 = vadd.f32 0.0, %v3356
    %v3358 = vpop.f32.mrf.mxu0
    %v3359 = vpop.f32.mrf.mxu0
    %v3360 = vadd.f32 0.0, %v3359
    %v3361 = vpop.f32.mrf.mxu0
    %3362 = vmatprep.mubr.bf16.mxu0 %v2178
    %3363 = vmatmul.mubr.bf16.gmra.mxu0 %v2177
    %v3364 = vpop.f32.mrf.mxu0
    %v3365 = vadd.f32 0.0, %v3364
    %v3366 = vpop.f32.mrf.mxu0
    %v3367 = vpop.f32.mrf.mxu0
    %v3368 = vadd.f32 0.0, %v3367
    %v3369 = vpop.f32.mrf.mxu0
    %3370 = vmatprep.mubr.bf16.mxu0 %v2181
    %3371 = vmatmul.mubr.bf16.gmra.mxu0 %v2180
    %v3372 = vpop.f32.mrf.mxu0
    %v3373 = vadd.f32 0.0, %v3372
    %v3374 = vpop.f32.mrf.mxu0
    %v3375 = vpop.f32.mrf.mxu0
    %v3376 = vadd.f32 0.0, %v3375
    %v3377 = vpop.f32.mrf.mxu0
    %3378 = vmatprep.mubr.bf16.mxu0 %v2184
    %3379 = vmatmul.mubr.bf16.gmra.mxu0 %v2183
    %v3380 = vpop.f32.mrf.mxu0
    %v3381 = vadd.f32 0.0, %v3380
    %v3382 = vpop.f32.mrf.mxu0
    %v3383 = vpop.f32.mrf.mxu0
    %v3384 = vadd.f32 0.0, %v3383
    %v3385 = vpop.f32.mrf.mxu0
    %3386 = vmatprep.mubr.bf16.mxu0 %v2187
    %3387 = vmatmul.mubr.bf16.gmra.mxu0 %v2186
    %v3388 = vpop.f32.mrf.mxu0
    %v3389 = vadd.f32 0.0, %v3388
    %v3390 = vpop.f32.mrf.mxu0
    %v3391 = vpop.f32.mrf.mxu0
    %v3392 = vadd.f32 0.0, %v3391
    %v3393 = vpop.f32.mrf.mxu0
    %3394 = vmatprep.mubr.bf16.mxu0 %v2190
    %3395 = vmatmul.mubr.bf16.gmra.mxu0 %v2189
    %v3396 = vpop.f32.mrf.mxu0
    %v3397 = vadd.f32 0.0, %v3396
    %v3398 = vpop.f32.mrf.mxu0
    %v3399 = vpop.f32.mrf.mxu0
    %v3400 = vadd.f32 0.0, %v3399
    %v3401 = vpop.f32.mrf.mxu0
    %3402 = vmatprep.mubr.bf16.mxu0 %v2193
    %3403 = vmatmul.mubr.bf16.gmra.mxu0 %v2192
    %v3404 = vpop.f32.mrf.mxu0
    %v3405 = vadd.f32 0.0, %v3404
    %v3406 = vpop.f32.mrf.mxu0
    %v3407 = vpop.f32.mrf.mxu0
    %v3408 = vadd.f32 0.0, %v3407
    %v3409 = vpop.f32.mrf.mxu0
    %3410 = vmatprep.mubr.bf16.mxu0 %v2196
    %3411 = vmatmul.mubr.bf16.gmra.mxu0 %v2195
    %v3412 = vpop.f32.mrf.mxu0
    %v3413 = vadd.f32 0.0, %v3412
    %v3414 = vpop.f32.mrf.mxu0
    %v3415 = vpop.f32.mrf.mxu0
    %v3416 = vadd.f32 0.0, %v3415
    %v3417 = vpop.f32.mrf.mxu0
    %3418 = vmatprep.mubr.bf16.mxu0 %v2199
    %3419 = vmatmul.mubr.bf16.gmra.mxu0 %v2198
    %v3420 = vpop.f32.mrf.mxu0
    %v3421 = vadd.f32 0.0, %v3420
    %v3422 = vpop.f32.mrf.mxu0
    %v3423 = vpop.f32.mrf.mxu0
    %v3424 = vadd.f32 0.0, %v3423
    %v3425 = vpop.f32.mrf.mxu0
    %3426 = vmatprep.mubr.bf16.mxu0 %v2202
    %3427 = vmatmul.mubr.bf16.gmra.mxu0 %v2201
    %v3428 = vpop.f32.mrf.mxu0
    %v3429 = vadd.f32 0.0, %v3428
    %v3430 = vpop.f32.mrf.mxu0
    %v3431 = vpop.f32.mrf.mxu0
    %v3432 = vadd.f32 0.0, %v3431
    %v3433 = vpop.f32.mrf.mxu0
    %3434 = vmatprep.mubr.bf16.mxu0 %v2205
    %3435 = vmatmul.mubr.bf16.gmra.mxu0 %v2204
    %v3436 = vpop.f32.mrf.mxu0
    %v3437 = vadd.f32 0.0, %v3436
    %v3438 = vpop.f32.mrf.mxu0
    %v3439 = vpop.f32.mrf.mxu0
    %v3440 = vadd.f32 0.0, %v3439
    %v3441 = vpop.f32.mrf.mxu0
    %3442 = vmatprep.mubr.bf16.mxu0 %v2208
    %3443 = vmatmul.mubr.bf16.gmra.mxu0 %v2207
    %v3444 = vpop.f32.mrf.mxu0
    %v3445 = vadd.f32 0.0, %v3444
    %v3446 = vpop.f32.mrf.mxu0
    %v3447 = vpop.f32.mrf.mxu0
    %v3448 = vadd.f32 0.0, %v3447
    %v3449 = vpop.f32.mrf.mxu0
    %3450 = vmatprep.mubr.bf16.mxu0 %v2211
    %3451 = vmatmul.mubr.bf16.gmra.mxu0 %v2210
    %v3452 = vpop.f32.mrf.mxu0
    %v3453 = vadd.f32 0.0, %v3452
    %v3454 = vpop.f32.mrf.mxu0
    %v3455 = vpop.f32.mrf.mxu0
    %v3456 = vadd.f32 0.0, %v3455
    %v3457 = vpop.f32.mrf.mxu0
    %3458 = vmatprep.mubr.bf16.mxu0 %v2214
    %3459 = vmatmul.mubr.bf16.gmra.mxu0 %v2213
    %v3460 = vpop.f32.mrf.mxu0
    %v3461 = vadd.f32 0.0, %v3460
    %v3462 = vpop.f32.mrf.mxu0
    %v3463 = vpop.f32.mrf.mxu0
    %v3464 = vadd.f32 0.0, %v3463
    %v3465 = vpop.f32.mrf.mxu0
    %3466 = vmatprep.mubr.bf16.mxu0 %v2217
    %3467 = vmatmul.mubr.bf16.gmra.mxu0 %v2216
    %v3468 = vpop.f32.mrf.mxu0
    %v3469 = vadd.f32 0.0, %v3468
    %v3470 = vpop.f32.mrf.mxu0
    %v3471 = vpop.f32.mrf.mxu0
    %v3472 = vadd.f32 0.0, %v3471
    %v3473 = vpop.f32.mrf.mxu0
    %3474 = vmatprep.mubr.bf16.mxu0 %v2220
    %3475 = vmatmul.mubr.bf16.gmra.mxu0 %v2219
    %v3476 = vpop.f32.mrf.mxu0
    %v3477 = vadd.f32 0.0, %v3476
    %v3478 = vpop.f32.mrf.mxu0
    %v3479 = vpop.f32.mrf.mxu0
    %v3480 = vadd.f32 0.0, %v3479
    %v3481 = vpop.f32.mrf.mxu0
    %3482 = vmatprep.mubr.bf16.mxu0 %v2223
    %3483 = vmatmul.mubr.bf16.gmra.mxu0 %v2222
    %v3484 = vpop.f32.mrf.mxu0
    %v3485 = vadd.f32 0.0, %v3484
    %v3486 = vpop.f32.mrf.mxu0
    %v3487 = vpop.f32.mrf.mxu0
    %v3488 = vadd.f32 0.0, %v3487
    %v3489 = vpop.f32.mrf.mxu0
    %3490 = vmatprep.mubr.bf16.mxu0 %v2226
    %3491 = vmatmul.mubr.bf16.gmra.mxu0 %v2225
    %v3492 = vpop.f32.mrf.mxu0
    %v3493 = vadd.f32 0.0, %v3492
    %v3494 = vpop.f32.mrf.mxu0
    %v3495 = vpop.f32.mrf.mxu0
    %v3496 = vadd.f32 0.0, %v3495
    %v3497 = vpop.f32.mrf.mxu0
    %3498 = vmatprep.mubr.bf16.mxu0 %v2229
    %3499 = vmatmul.mubr.bf16.gmra.mxu0 %v2228
    %v3500 = vpop.f32.mrf.mxu0
    %v3501 = vadd.f32 0.0, %v3500
    %v3502 = vpop.f32.mrf.mxu0
    %v3503 = vpop.f32.mrf.mxu0
    %v3504 = vadd.f32 0.0, %v3503
    %v3505 = vpop.f32.mrf.mxu0
    %3506 = vmatprep.mubr.bf16.mxu0 %v2232
    %3507 = vmatmul.mubr.bf16.gmra.mxu0 %v2231
    %v3508 = vpop.f32.mrf.mxu0
    %v3509 = vadd.f32 0.0, %v3508
    %v3510 = vpop.f32.mrf.mxu0
    %v3511 = vpop.f32.mrf.mxu0
    %v3512 = vadd.f32 0.0, %v3511
    %v3513 = vpop.f32.mrf.mxu0
    %3514 = vmatprep.mubr.bf16.mxu0 %v2235
    %3515 = vmatmul.mubr.bf16.gmra.mxu0 %v2234
    %v3516 = vpop.f32.mrf.mxu0
    %v3517 = vadd.f32 0.0, %v3516
    %v3518 = vpop.f32.mrf.mxu0
    %v3519 = vpop.f32.mrf.mxu0
    %v3520 = vadd.f32 0.0, %v3519
    %v3521 = vpop.f32.mrf.mxu0
    %3522 = vmatprep.mubr.bf16.mxu0 %v2238
    %3523 = vmatmul.mubr.bf16.gmra.mxu0 %v2237
    %v3524 = vpop.f32.mrf.mxu0
    %v3525 = vadd.f32 0.0, %v3524
    %v3526 = vpop.f32.mrf.mxu0
    %v3527 = vpop.f32.mrf.mxu0
    %v3528 = vadd.f32 0.0, %v3527
    %v3529 = vpop.f32.mrf.mxu0
    %3530 = vmatprep.mubr.bf16.mxu0 %v2241
    %3531 = vmatmul.mubr.bf16.gmra.mxu0 %v2240
    %v3532 = vpop.f32.mrf.mxu0
    %v3533 = vadd.f32 0.0, %v3532
    %v3534 = vpop.f32.mrf.mxu0
    %v3535 = vpop.f32.mrf.mxu0
    %v3536 = vadd.f32 0.0, %v3535
    %v3537 = vpop.f32.mrf.mxu0
    %3538 = vmatprep.mubr.bf16.mxu0 %v2244
    %3539 = vmatmul.mubr.bf16.gmra.mxu0 %v2243
    %v3540 = vpop.f32.mrf.mxu0
    %v3541 = vadd.f32 0.0, %v3540
    %v3542 = vpop.f32.mrf.mxu0
    %v3543 = vpop.f32.mrf.mxu0
    %v3544 = vadd.f32 0.0, %v3543
    %v3545 = vpop.f32.mrf.mxu0
    %3546 = vmatprep.mubr.bf16.mxu0 %v2247
    %3547 = vmatmul.mubr.bf16.gmra.mxu0 %v2246
    %v3548 = vpop.f32.mrf.mxu0
    %v3549 = vadd.f32 0.0, %v3548
    %v3550 = vpop.f32.mrf.mxu0
    %v3551 = vpop.f32.mrf.mxu0
    %v3552 = vadd.f32 0.0, %v3551
    %v3553 = vpop.f32.mrf.mxu0
    %3554 = vmatprep.mubr.bf16.mxu0 %v2250
    %3555 = vmatmul.mubr.bf16.gmra.mxu0 %v2249
    %v3556 = vpop.f32.mrf.mxu0
    %v3557 = vadd.f32 0.0, %v3556
    %v3558 = vpop.f32.mrf.mxu0
    %v3559 = vpop.f32.mrf.mxu0
    %v3560 = vadd.f32 0.0, %v3559
    %v3561 = vpop.f32.mrf.mxu0
    %3562 = vmatprep.mubr.bf16.mxu0 %v2253
    %3563 = vmatmul.mubr.bf16.gmra.mxu0 %v2252
    %v3564 = vpop.f32.mrf.mxu0
    %v3565 = vadd.f32 0.0, %v3564
    %v3566 = vpop.f32.mrf.mxu0
    %v3567 = vpop.f32.mrf.mxu0
    %v3568 = vadd.f32 0.0, %v3567
    %v3569 = vpop.f32.mrf.mxu0
    %3570 = vmatprep.mubr.bf16.mxu0 %v2256
    %3571 = vmatmul.mubr.bf16.gmra.mxu0 %v2255
    %v3572 = vpop.f32.mrf.mxu0
    %v3573 = vadd.f32 0.0, %v3572
    %v3574 = vpop.f32.mrf.mxu0
    %v3575 = vpop.f32.mrf.mxu0
    %v3576 = vadd.f32 0.0, %v3575
    %v3577 = vpop.f32.mrf.mxu0
    %3578 = vmatprep.mubr.bf16.mxu0 %v2259
    %3579 = vmatmul.mubr.bf16.gmra.mxu0 %v2258
    %v3580 = vpop.f32.mrf.mxu0
    %v3581 = vadd.f32 0.0, %v3580
    %v3582 = vpop.f32.mrf.mxu0
    %v3583 = vpop.f32.mrf.mxu0
    %v3584 = vadd.f32 0.0, %v3583
    %v3585 = vpop.f32.mrf.mxu0
    %3586 = vmatprep.mubr.bf16.mxu0 %v2262
    %3587 = vmatmul.mubr.bf16.gmra.mxu0 %v2261
    %v3588 = vpop.f32.mrf.mxu0
    %v3589 = vadd.f32 0.0, %v3588
    %v3590 = vpop.f32.mrf.mxu0
    %v3591 = vpop.f32.mrf.mxu0
    %v3592 = vadd.f32 0.0, %v3591
    %v3593 = vpop.f32.mrf.mxu0
    %3594 = vmatprep.mubr.bf16.mxu0 %v2265
    %3595 = vmatmul.mubr.bf16.gmra.mxu0 %v2264
    %v3596 = vpop.f32.mrf.mxu0
    %v3597 = vadd.f32 0.0, %v3596
    %v3598 = vpop.f32.mrf.mxu0
    %v3599 = vpop.f32.mrf.mxu0
    %v3600 = vadd.f32 0.0, %v3599
    %v3601 = vpop.f32.mrf.mxu0
    %3602 = vmatprep.mubr.bf16.mxu0 %v2268
    %3603 = vmatmul.mubr.bf16.gmra.mxu0 %v2267
    %v3604 = vpop.f32.mrf.mxu0
    %v3605 = vadd.f32 0.0, %v3604
    %v3606 = vpop.f32.mrf.mxu0
    %v3607 = vpop.f32.mrf.mxu0
    %v3608 = vadd.f32 0.0, %v3607
    %v3609 = vpop.f32.mrf.mxu0
    %3610 = vmatprep.mubr.bf16.mxu0 %v2271
    %3611 = vmatmul.mubr.bf16.gmra.mxu0 %v2270
    %v3612 = vpop.f32.mrf.mxu0
    %v3613 = vadd.f32 0.0, %v3612
    %v3614 = vpop.f32.mrf.mxu0
    %v3615 = vpop.f32.mrf.mxu0
    %v3616 = vadd.f32 0.0, %v3615
    %v3617 = vpop.f32.mrf.mxu0
    %3618 = vmatprep.mubr.bf16.mxu0 %v2274
    %3619 = vmatmul.mubr.bf16.gmra.mxu0 %v2273
    %v3620 = vpop.f32.mrf.mxu0
    %v3621 = vadd.f32 0.0, %v3620
    %v3622 = vpop.f32.mrf.mxu0
    %v3623 = vpop.f32.mrf.mxu0
    %v3624 = vadd.f32 0.0, %v3623
    %v3625 = vpop.f32.mrf.mxu0
    %3626 = vmatprep.mubr.bf16.mxu0 %v2277
    %3627 = vmatmul.mubr.bf16.gmra.mxu0 %v2276
    %v3628 = vpop.f32.mrf.mxu0
    %v3629 = vadd.f32 0.0, %v3628
    %v3630 = vpop.f32.mrf.mxu0
    %v3631 = vpop.f32.mrf.mxu0
    %v3632 = vadd.f32 0.0, %v3631
    %v3633 = vpop.f32.mrf.mxu0
    %3634 = vmatprep.mubr.bf16.mxu0 %v2280
    %3635 = vmatmul.mubr.bf16.gmra.mxu0 %v2279
    %v3636 = vpop.f32.mrf.mxu0
    %v3637 = vadd.f32 0.0, %v3636
    %v3638 = vpop.f32.mrf.mxu0
    %v3639 = vpop.f32.mrf.mxu0
    %v3640 = vadd.f32 0.0, %v3639
    %v3641 = vpop.f32.mrf.mxu0
    %3642 = vmatprep.mubr.bf16.mxu0 %v2283
    %3643 = vmatmul.mubr.bf16.gmra.mxu0 %v2282
    %v3644 = vpop.f32.mrf.mxu0
    %v3645 = vadd.f32 0.0, %v3644
    %v3646 = vpop.f32.mrf.mxu0
    %v3647 = vpop.f32.mrf.mxu0
    %v3648 = vadd.f32 0.0, %v3647
    %v3649 = vpop.f32.mrf.mxu0
    %3650 = vmatprep.mubr.bf16.mxu0 %v2286
    %3651 = vmatmul.mubr.bf16.gmra.mxu0 %v2285
    %v3652 = vpop.f32.mrf.mxu0
    %v3653 = vadd.f32 0.0, %v3652
    %v3654 = vpop.f32.mrf.mxu0
    %v3655 = vpop.f32.mrf.mxu0
    %v3656 = vadd.f32 0.0, %v3655
    %v3657 = vpop.f32.mrf.mxu0
    %3658 = vmatprep.mubr.bf16.mxu0 %v2289
    %3659 = vmatmul.mubr.bf16.gmra.mxu0 %v2288
    %v3660 = vpop.f32.mrf.mxu0
    %v3661 = vadd.f32 0.0, %v3660
    %v3662 = vpop.f32.mrf.mxu0
    %v3663 = vpop.f32.mrf.mxu0
    %v3664 = vadd.f32 0.0, %v3663
    %v3665 = vpop.f32.mrf.mxu0
    %3666 = vmatprep.mubr.bf16.mxu0 %v2292
    %3667 = vmatmul.mubr.bf16.gmra.mxu0 %v2291
    %v3668 = vpop.f32.mrf.mxu0
    %v3669 = vadd.f32 0.0, %v3668
    %v3670 = vpop.f32.mrf.mxu0
    %v3671 = vpop.f32.mrf.mxu0
    %v3672 = vadd.f32 0.0, %v3671
    %v3673 = vpop.f32.mrf.mxu0
    %3674 = vmatprep.mubr.bf16.mxu0 %v2295
    %3675 = vmatmul.mubr.bf16.gmra.mxu0 %v2294
    %v3676 = vpop.f32.mrf.mxu0
    %v3677 = vadd.f32 0.0, %v3676
    %v3678 = vpop.f32.mrf.mxu0
    %v3679 = vpop.f32.mrf.mxu0
    %v3680 = vadd.f32 0.0, %v3679
    %v3681 = vpop.f32.mrf.mxu0
    %3682 = vmatprep.mubr.bf16.mxu0 %v2298
    %3683 = vmatmul.mubr.bf16.gmra.mxu0 %v2297
    %v3684 = vpop.f32.mrf.mxu0
    %v3685 = vadd.f32 0.0, %v3684
    %v3686 = vpop.f32.mrf.mxu0
    %v3687 = vpop.f32.mrf.mxu0
    %v3688 = vadd.f32 0.0, %v3687
    %v3689 = vpop.f32.mrf.mxu0
    %3690 = vmatprep.mubr.bf16.mxu0 %v2301
    %3691 = vmatmul.mubr.bf16.gmra.mxu0 %v2300
    %v3692 = vpop.f32.mrf.mxu0
    %v3693 = vadd.f32 0.0, %v3692
    %v3694 = vpop.f32.mrf.mxu0
    %v3695 = vpop.f32.mrf.mxu0
    %v3696 = vadd.f32 0.0, %v3695
    %v3697 = vpop.f32.mrf.mxu0
    %3698 = vmatprep.mubr.bf16.mxu0 %v2304
    %3699 = vmatmul.mubr.bf16.gmra.mxu0 %v2303
    %v3700 = vpop.f32.mrf.mxu0
    %v3701 = vadd.f32 0.0, %v3700
    %v3702 = vpop.f32.mrf.mxu0
    %v3703 = vpop.f32.mrf.mxu0
    %v3704 = vadd.f32 0.0, %v3703
    %v3705 = vpop.f32.mrf.mxu0
    %3706 = vmatprep.mubr.bf16.mxu0 %v2307
    %3707 = vmatmul.mubr.bf16.gmra.mxu0 %v2306
    %v3708 = vpop.f32.mrf.mxu0
    %v3709 = vadd.f32 0.0, %v3708
    %v3710 = vpop.f32.mrf.mxu0
    %v3711 = vpop.f32.mrf.mxu0
    %v3712 = vadd.f32 0.0, %v3711
    %v3713 = vpop.f32.mrf.mxu0
    %3714 = vmatprep.mubr.bf16.mxu0 %v2310
    %3715 = vmatmul.mubr.bf16.gmra.mxu0 %v2309
    %v3716 = vpop.f32.mrf.mxu0
    %v3717 = vadd.f32 0.0, %v3716
    %v3718 = vpop.f32.mrf.mxu0
    %v3719 = vpop.f32.mrf.mxu0
    %v3720 = vadd.f32 0.0, %v3719
    %v3721 = vpop.f32.mrf.mxu0
    %3722 = vmatprep.mubr.bf16.mxu0 %v2313
    %3723 = vmatmul.mubr.bf16.gmra.mxu0 %v2312
    %v3724 = vpop.f32.mrf.mxu0
    %v3725 = vadd.f32 0.0, %v3724
    %v3726 = vpop.f32.mrf.mxu0
    %v3727 = vpop.f32.mrf.mxu0
    %v3728 = vadd.f32 0.0, %v3727
    %v3729 = vpop.f32.mrf.mxu0
    %3730 = vmatprep.mubr.bf16.mxu0 %v2316
    %3731 = vmatmul.mubr.bf16.gmra.mxu0 %v2315
    %v3732 = vpop.f32.mrf.mxu0
    %v3733 = vadd.f32 0.0, %v3732
    %v3734 = vpop.f32.mrf.mxu0
    %v3735 = vpop.f32.mrf.mxu0
    %v3736 = vadd.f32 0.0, %v3735
    %v3737 = vpop.f32.mrf.mxu0
    %3738 = vmatprep.mubr.bf16.mxu0 %v2319
    %3739 = vmatmul.mubr.bf16.gmra.mxu0 %v2318
    %v3740 = vpop.f32.mrf.mxu0
    %v3741 = vadd.f32 0.0, %v3740
    %v3742 = vpop.f32.mrf.mxu0
    %v3743 = vpop.f32.mrf.mxu0
    %v3744 = vadd.f32 0.0, %v3743
    %v3745 = vpop.f32.mrf.mxu0
    %3746 = vmatprep.mubr.bf16.mxu0 %v2322
    %3747 = vmatmul.mubr.bf16.gmra.mxu0 %v2321
    %v3748 = vpop.f32.mrf.mxu0
    %v3749 = vadd.f32 0.0, %v3748
    %v3750 = vpop.f32.mrf.mxu0
    %v3751 = vpop.f32.mrf.mxu0
    %v3752 = vadd.f32 0.0, %v3751
    %v3753 = vpop.f32.mrf.mxu0
    %3754 = vmatprep.mubr.bf16.mxu0 %v2325
    %3755 = vmatmul.mubr.bf16.gmra.mxu0 %v2324
    %v3756 = vpop.f32.mrf.mxu0
    %v3757 = vadd.f32 0.0, %v3756
    %v3758 = vpop.f32.mrf.mxu0
    %v3759 = vpop.f32.mrf.mxu0
    %v3760 = vadd.f32 0.0, %v3759
    %v3761 = vpop.f32.mrf.mxu0
    %3762 = vmatprep.mubr.bf16.mxu0 %v2328
    %3763 = vmatmul.mubr.bf16.gmra.mxu0 %v2327
    %v3764 = vpop.f32.mrf.mxu0
    %v3765 = vadd.f32 0.0, %v3764
    %v3766 = vpop.f32.mrf.mxu0
    %v3767 = vpop.f32.mrf.mxu0
    %v3768 = vadd.f32 0.0, %v3767
    %v3769 = vpop.f32.mrf.mxu0
    %3770 = vmatprep.mubr.bf16.mxu0 %v2331
    %3771 = vmatmul.mubr.bf16.gmra.mxu0 %v2330
    %v3772 = vpop.f32.mrf.mxu0
    %v3773 = vadd.f32 0.0, %v3772
    %v3774 = vpop.f32.mrf.mxu0
    %v3775 = vpop.f32.mrf.mxu0
    %v3776 = vadd.f32 0.0, %v3775
    %v3777 = vpop.f32.mrf.mxu0
    %3778 = vmatprep.mubr.bf16.mxu0 %v2334
    %3779 = vmatmul.mubr.bf16.gmra.mxu0 %v2333
    %v3780 = vpop.f32.mrf.mxu0
    %v3781 = vadd.f32 0.0, %v3780
    %v3782 = vpop.f32.mrf.mxu0
    %v3783 = vpop.f32.mrf.mxu0
    %v3784 = vadd.f32 0.0, %v3783
    %v3785 = vpop.f32.mrf.mxu0
    %3786 = vmatprep.mubr.bf16.mxu0 %v2337
    %3787 = vmatmul.mubr.bf16.gmra.mxu0 %v2336
    %v3788 = vpop.f32.mrf.mxu0
    %v3789 = vadd.f32 0.0, %v3788
    %v3790 = vpop.f32.mrf.mxu0
    %v3791 = vpop.f32.mrf.mxu0
    %v3792 = vadd.f32 0.0, %v3791
    %v3793 = vpop.f32.mrf.mxu0
    %3794 = vmatprep.mubr.bf16.mxu0 %v2340
    %3795 = vmatmul.mubr.bf16.gmra.mxu0 %v2339
    %v3796 = vpop.f32.mrf.mxu0
    %v3797 = vadd.f32 0.0, %v3796
    %v3798 = vpop.f32.mrf.mxu0
    %v3799 = vpop.f32.mrf.mxu0
    %v3800 = vadd.f32 0.0, %v3799
    %v3801 = vpop.f32.mrf.mxu0
    %3802 = vmatprep.mubr.bf16.mxu0 %v2343
    %3803 = vmatmul.mubr.bf16.gmra.mxu0 %v2342
    %v3804 = vpop.f32.mrf.mxu0
    %v3805 = vadd.f32 0.0, %v3804
    %v3806 = vpop.f32.mrf.mxu0
    %v3807 = vpop.f32.mrf.mxu0
    %v3808 = vadd.f32 0.0, %v3807
    %v3809 = vpop.f32.mrf.mxu0
    %3810 = vmatprep.mubr.bf16.mxu0 %v2346
    %3811 = vmatmul.mubr.bf16.gmra.mxu0 %v2345
    %v3812 = vpop.f32.mrf.mxu0
    %v3813 = vadd.f32 0.0, %v3812
    %v3814 = vpop.f32.mrf.mxu0
    %v3815 = vpop.f32.mrf.mxu0
    %v3816 = vadd.f32 0.0, %v3815
    %v3817 = vpop.f32.mrf.mxu0
    %3818 = vmatprep.mubr.bf16.mxu0 %v2349
    %3819 = vmatmul.mubr.bf16.gmra.mxu0 %v2348
    %v3820 = vpop.f32.mrf.mxu0
    %v3821 = vadd.f32 0.0, %v3820
    %v3822 = vpop.f32.mrf.mxu0
    %v3823 = vpop.f32.mrf.mxu0
    %v3824 = vadd.f32 0.0, %v3823
    %v3825 = vpop.f32.mrf.mxu0
    %3826 = vmatprep.mubr.bf16.mxu0 %v2352
    %3827 = vmatmul.mubr.bf16.gmra.mxu0 %v2351
    %v3828 = vpop.f32.mrf.mxu0
    %v3829 = vadd.f32 0.0, %v3828
    %v3830 = vpop.f32.mrf.mxu0
    %v3831 = vpop.f32.mrf.mxu0
    %v3832 = vadd.f32 0.0, %v3831
    %v3833 = vpop.f32.mrf.mxu0
    %3834 = vmatprep.mubr.bf16.mxu0 %v2355
    %3835 = vmatmul.mubr.bf16.gmra.mxu0 %v2354
    %v3836 = vpop.f32.mrf.mxu0
    %v3837 = vadd.f32 0.0, %v3836
    %v3838 = vpop.f32.mrf.mxu0
    %v3839 = vpop.f32.mrf.mxu0
    %v3840 = vadd.f32 0.0, %v3839
    %v3841 = vpop.f32.mrf.mxu0
    %3842 = vmatprep.mubr.bf16.mxu0 %v2358
    %3843 = vmatmul.mubr.bf16.gmra.mxu0 %v2357
    %v3844 = vpop.f32.mrf.mxu0
    %v3845 = vadd.f32 0.0, %v3844
    %v3846 = vpop.f32.mrf.mxu0
    %v3847 = vpop.f32.mrf.mxu0
    %v3848 = vadd.f32 0.0, %v3847
    %v3849 = vpop.f32.mrf.mxu0
    %3850 = vmatprep.mubr.bf16.mxu0 %v2361
    %3851 = vmatmul.mubr.bf16.gmra.mxu0 %v2360
    %v3852 = vpop.f32.mrf.mxu0
    %v3853 = vadd.f32 0.0, %v3852
    %v3854 = vpop.f32.mrf.mxu0
    %v3855 = vpop.f32.mrf.mxu0
    %v3856 = vadd.f32 0.0, %v3855
    %v3857 = vpop.f32.mrf.mxu0
    %3858 = vmatprep.mubr.bf16.mxu0 %v2364
    %3859 = vmatmul.mubr.bf16.gmra.mxu0 %v2363
    %v3860 = vpop.f32.mrf.mxu0
    %v3861 = vadd.f32 0.0, %v3860
    %v3862 = vpop.f32.mrf.mxu0
    %v3863 = vpop.f32.mrf.mxu0
    %v3864 = vadd.f32 0.0, %v3863
    %v3865 = vpop.f32.mrf.mxu0
    %3866 = vmatprep.mubr.bf16.mxu0 %v2367
    %3867 = vmatmul.mubr.bf16.gmra.mxu0 %v2366
    %v3868 = vpop.f32.mrf.mxu0
    %v3869 = vadd.f32 0.0, %v3868
    %v3870 = vpop.f32.mrf.mxu0
    %v3871 = vpop.f32.mrf.mxu0
    %v3872 = vadd.f32 0.0, %v3871
    %v3873 = vpop.f32.mrf.mxu0
    %3874 = vmatprep.mubr.bf16.mxu0 %v2370
    %3875 = vmatmul.mubr.bf16.gmra.mxu0 %v2369
    %v3876 = vpop.f32.mrf.mxu0
    %v3877 = vadd.f32 0.0, %v3876
    %v3878 = vpop.f32.mrf.mxu0
    %v3879 = vpop.f32.mrf.mxu0
    %v3880 = vadd.f32 0.0, %v3879
    %v3881 = vpop.f32.mrf.mxu0
    %3882 = vmatprep.mubr.bf16.mxu0 %v2373
    %3883 = vmatmul.mubr.bf16.gmra.mxu0 %v2372
    %v3884 = vpop.f32.mrf.mxu0
    %v3885 = vadd.f32 0.0, %v3884
    %v3886 = vpop.f32.mrf.mxu0
    %v3887 = vpop.f32.mrf.mxu0
    %v3888 = vadd.f32 0.0, %v3887
    %v3889 = vpop.f32.mrf.mxu0
    %3890 = vmatprep.mubr.bf16.mxu0 %v2376
    %3891 = vmatmul.mubr.bf16.gmra.mxu0 %v2375
    %v3892 = vpop.f32.mrf.mxu0
    %v3893 = vadd.f32 0.0, %v3892
    %v3894 = vpop.f32.mrf.mxu0
    %v3895 = vpop.f32.mrf.mxu0
    %v3896 = vadd.f32 0.0, %v3895
    %v3897 = vpop.f32.mrf.mxu0
    %3898 = vmatprep.mubr.bf16.mxu0 %v2379
    %3899 = vmatmul.mubr.bf16.gmra.mxu0 %v2378
    %v3900 = vpop.f32.mrf.mxu0
    %v3901 = vadd.f32 0.0, %v3900
    %v3902 = vpop.f32.mrf.mxu0
    %v3903 = vpop.f32.mrf.mxu0
    %v3904 = vadd.f32 0.0, %v3903
    %v3905 = vpop.f32.mrf.mxu0
    %3906 = vmatprep.mubr.bf16.mxu0 %v2382
    %3907 = vmatmul.mubr.bf16.gmra.mxu0 %v2381
    %v3908 = vpop.f32.mrf.mxu0
    %v3909 = vadd.f32 0.0, %v3908
    %v3910 = vpop.f32.mrf.mxu0
    %v3911 = vpop.f32.mrf.mxu0
    %v3912 = vadd.f32 0.0, %v3911
    %v3913 = vpop.f32.mrf.mxu0
    %3914 = vmatprep.mubr.bf16.mxu0 %v2385
    %3915 = vmatmul.mubr.bf16.gmra.mxu0 %v2384
    %v3916 = vpop.f32.mrf.mxu0
    %v3917 = vadd.f32 0.0, %v3916
    %v3918 = vpop.f32.mrf.mxu0
    %v3919 = vpop.f32.mrf.mxu0
    %v3920 = vadd.f32 0.0, %v3919
    %v3921 = vpop.f32.mrf.mxu0
    %3922 = vmatprep.mubr.bf16.mxu0 %v2388
    %3923 = vmatmul.mubr.bf16.gmra.mxu0 %v2387
    %v3924 = vpop.f32.mrf.mxu0
    %v3925 = vadd.f32 0.0, %v3924
    %v3926 = vpop.f32.mrf.mxu0
    %v3927 = vpop.f32.mrf.mxu0
    %v3928 = vadd.f32 0.0, %v3927
    %v3929 = vpop.f32.mrf.mxu0
    %3930 = vmatprep.mubr.bf16.mxu0 %v2391
    %3931 = vmatmul.mubr.bf16.gmra.mxu0 %v2390
    %v3932 = vpop.f32.mrf.mxu0
    %v3933 = vadd.f32 0.0, %v3932
    %v3934 = vpop.f32.mrf.mxu0
    %v3935 = vpop.f32.mrf.mxu0
    %v3936 = vadd.f32 0.0, %v3935
    %v3937 = vpop.f32.mrf.mxu0
    %3938 = vmatprep.mubr.bf16.mxu0 %v2394
    %3939 = vmatmul.mubr.bf16.gmra.mxu0 %v2393
    %v3940 = vpop.f32.mrf.mxu0
    %v3941 = vadd.f32 0.0, %v3940
    %v3942 = vpop.f32.mrf.mxu0
    %v3943 = vpop.f32.mrf.mxu0
    %v3944 = vadd.f32 0.0, %v3943
    %v3945 = vpop.f32.mrf.mxu0
    %3946 = vmatprep.mubr.bf16.mxu0 %v2397
    %3947 = vmatmul.mubr.bf16.gmra.mxu0 %v2396
    %v3948 = vpop.f32.mrf.mxu0
    %v3949 = vadd.f32 0.0, %v3948
    %v3950 = vpop.f32.mrf.mxu0
    %v3951 = vpop.f32.mrf.mxu0
    %v3952 = vadd.f32 0.0, %v3951
    %v3953 = vpop.f32.mrf.mxu0
    %3954 = vmatprep.mubr.bf16.mxu0 %v2400
    %3955 = vmatmul.mubr.bf16.gmra.mxu0 %v2399
    %v3956 = vpop.f32.mrf.mxu0
    %v3957 = vadd.f32 0.0, %v3956
    %v3958 = vpop.f32.mrf.mxu0
    %v3959 = vpop.f32.mrf.mxu0
    %v3960 = vadd.f32 0.0, %v3959
    %v3961 = vpop.f32.mrf.mxu0
    %3962 = vmatprep.mubr.bf16.mxu0 %v2403
    %3963 = vmatmul.mubr.bf16.gmra.mxu0 %v2402
    %v3964 = vpop.f32.mrf.mxu0
    %v3965 = vadd.f32 0.0, %v3964
    %v3966 = vpop.f32.mrf.mxu0
    %v3967 = vpop.f32.mrf.mxu0
    %v3968 = vadd.f32 0.0, %v3967
    %v3969 = vpop.f32.mrf.mxu0
    %3970 = vmatprep.mubr.bf16.mxu0 %v2406
    %3971 = vmatmul.mubr.bf16.gmra.mxu0 %v2405
    %v3972 = vpop.f32.mrf.mxu0
    %v3973 = vadd.f32 0.0, %v3972
    %v3974 = vpop.f32.mrf.mxu0
    %v3975 = vpop.f32.mrf.mxu0
    %v3976 = vadd.f32 0.0, %v3975
    %v3977 = vpop.f32.mrf.mxu0
    %3978 = vmatprep.mubr.bf16.mxu0 %v2409
    %3979 = vmatmul.mubr.bf16.gmra.mxu0 %v2408
    %v3980 = vpop.f32.mrf.mxu0
    %v3981 = vadd.f32 0.0, %v3980
    %v3982 = vpop.f32.mrf.mxu0
    %v3983 = vpop.f32.mrf.mxu0
    %v3984 = vadd.f32 0.0, %v3983
    %v3985 = vpop.f32.mrf.mxu0
    %3986 = vmatprep.mubr.bf16.mxu0 %v2412
    %3987 = vmatmul.mubr.bf16.gmra.mxu0 %v2411
    %v3988 = vpop.f32.mrf.mxu0
    %v3989 = vadd.f32 0.0, %v3988
    %v3990 = vpop.f32.mrf.mxu0
    %v3991 = vpop.f32.mrf.mxu0
    %v3992 = vadd.f32 0.0, %v3991
    %v3993 = vpop.f32.mrf.mxu0
    %3994 = vmatprep.mubr.bf16.mxu0 %v2415
    %3995 = vmatmul.mubr.bf16.gmra.mxu0 %v2414
    %v3996 = vpop.f32.mrf.mxu0
    %v3997 = vadd.f32 0.0, %v3996
    %v3998 = vpop.f32.mrf.mxu0
    %v3999 = vpop.f32.mrf.mxu0
    %v4000 = vadd.f32 0.0, %v3999
    %v4001 = vpop.f32.mrf.mxu0
    %4002 = vmatprep.mubr.bf16.mxu0 %v2418
    %4003 = vmatmul.mubr.bf16.gmra.mxu0 %v2417
    %v4004 = vpop.f32.mrf.mxu0
    %v4005 = vadd.f32 0.0, %v4004
    %v4006 = vpop.f32.mrf.mxu0
    %v4007 = vpop.f32.mrf.mxu0
    %v4008 = vadd.f32 0.0, %v4007
    %v4009 = vpop.f32.mrf.mxu0
    %4010 = vmatprep.mubr.bf16.mxu0 %v2421
    %4011 = vmatmul.mubr.bf16.gmra.mxu0 %v2420
    %v4012 = vpop.f32.mrf.mxu0
    %v4013 = vadd.f32 0.0, %v4012
    %v4014 = vpop.f32.mrf.mxu0
    %v4015 = vpop.f32.mrf.mxu0
    %v4016 = vadd.f32 0.0, %v4015
    %v4017 = vpop.f32.mrf.mxu0
    %4018 = vmatprep.mubr.bf16.mxu0 %v2424
    %4019 = vmatmul.mubr.bf16.gmra.mxu0 %v2423
    %v4020 = vpop.f32.mrf.mxu0
    %v4021 = vadd.f32 0.0, %v4020
    %v4022 = vpop.f32.mrf.mxu0
    %v4023 = vpop.f32.mrf.mxu0
    %v4024 = vadd.f32 0.0, %v4023
    %v4025 = vpop.f32.mrf.mxu0
    %4026 = vmatprep.mubr.bf16.mxu0 %v2427
    %4027 = vmatmul.mubr.bf16.gmra.mxu0 %v2426
    %v4028 = vpop.f32.mrf.mxu0
    %v4029 = vadd.f32 0.0, %v4028
    %v4030 = vpop.f32.mrf.mxu0
    %v4031 = vpop.f32.mrf.mxu0
    %v4032 = vadd.f32 0.0, %v4031
    %v4033 = vpop.f32.mrf.mxu0
    %4034 = vmatprep.mubr.bf16.mxu0 %v2430
    %4035 = vmatmul.mubr.bf16.gmra.mxu0 %v2429
    %v4036 = vpop.f32.mrf.mxu0
    %v4037 = vadd.f32 0.0, %v4036
    %v4038 = vpop.f32.mrf.mxu0
    %v4039 = vpop.f32.mrf.mxu0
    %v4040 = vadd.f32 0.0, %v4039
    %v4041 = vpop.f32.mrf.mxu0
    %4042 = vmatprep.mubr.bf16.mxu0 %v2433
    %4043 = vmatmul.mubr.bf16.gmra.mxu0 %v2432
    %v4044 = vpop.f32.mrf.mxu0
    %v4045 = vadd.f32 0.0, %v4044
    %v4046 = vpop.f32.mrf.mxu0
    %v4047 = vpop.f32.mrf.mxu0
    %v4048 = vadd.f32 0.0, %v4047
    %v4049 = vpop.f32.mrf.mxu0
    %4050 = vmatprep.mubr.bf16.mxu0 %v2436
    %4051 = vmatmul.mubr.bf16.gmra.mxu0 %v2435
    %v4052 = vpop.f32.mrf.mxu0
    %v4053 = vadd.f32 0.0, %v4052
    %v4054 = vpop.f32.mrf.mxu0
    %v4055 = vpop.f32.mrf.mxu0
    %v4056 = vadd.f32 0.0, %v4055
    %v4057 = vpop.f32.mrf.mxu0
    %4058 = vmatprep.mubr.bf16.mxu0 %v2439
    %4059 = vmatmul.mubr.bf16.gmra.mxu0 %v2438
    %v4060 = vpop.f32.mrf.mxu0
    %v4061 = vadd.f32 0.0, %v4060
    %v4062 = vpop.f32.mrf.mxu0
    %v4063 = vpop.f32.mrf.mxu0
    %v4064 = vadd.f32 0.0, %v4063
    %v4065 = vpop.f32.mrf.mxu0
    %4066 = vmatprep.mubr.bf16.mxu0 %v2442
    %4067 = vmatmul.mubr.bf16.gmra.mxu0 %v2441
    %v4068 = vpop.f32.mrf.mxu0
    %v4069 = vadd.f32 0.0, %v4068
    %v4070 = vpop.f32.mrf.mxu0
    %v4071 = vpop.f32.mrf.mxu0
    %v4072 = vadd.f32 0.0, %v4071
    %v4073 = vpop.f32.mrf.mxu0
    %4074 = vmatprep.mubr.bf16.mxu0 %v2445
    %4075 = vmatmul.mubr.bf16.gmra.mxu0 %v2444
    %v4076 = vpop.f32.mrf.mxu0
    %v4077 = vadd.f32 0.0, %v4076
    %v4078 = vpop.f32.mrf.mxu0
    %v4079 = vpop.f32.mrf.mxu0
    %v4080 = vadd.f32 0.0, %v4079
    %v4081 = vpop.f32.mrf.mxu0
    %4082 = vmatprep.mubr.bf16.mxu0 %v2448
    %4083 = vmatmul.mubr.bf16.gmra.mxu0 %v2447
    %v4084 = vpop.f32.mrf.mxu0
    %v4085 = vadd.f32 0.0, %v4084
    %v4086 = vpop.f32.mrf.mxu0
    %v4087 = vpop.f32.mrf.mxu0
    %v4088 = vadd.f32 0.0, %v4087
    %v4089 = vpop.f32.mrf.mxu0
    %4090 = vmatprep.mubr.bf16.mxu0 %v2451
    %4091 = vmatmul.mubr.bf16.gmra.mxu0 %v2450
    %v4092 = vpop.f32.mrf.mxu0
    %v4093 = vadd.f32 0.0, %v4092
    %v4094 = vpop.f32.mrf.mxu0
    %v4095 = vpop.f32.mrf.mxu0
    %v4096 = vadd.f32 0.0, %v4095
    %v4097 = vpop.f32.mrf.mxu0
    %4098 = vmatprep.mubr.bf16.mxu0 %v2454
    %4099 = vmatmul.mubr.bf16.gmra.mxu0 %v2453
    %v4100 = vpop.f32.mrf.mxu0
    %v4101 = vadd.f32 0.0, %v4100
    %v4102 = vpop.f32.mrf.mxu0
    %v4103 = vpop.f32.mrf.mxu0
    %v4104 = vadd.f32 0.0, %v4103
    %v4105 = vpop.f32.mrf.mxu0
    %4106 = vmatprep.mubr.bf16.mxu0 %v2457
    %4107 = vmatmul.mubr.bf16.gmra.mxu0 %v2456
    %v4108 = vpop.f32.mrf.mxu0
    %v4109 = vadd.f32 0.0, %v4108
    %v4110 = vpop.f32.mrf.mxu0
    %v4111 = vpop.f32.mrf.mxu0
    %v4112 = vadd.f32 0.0, %v4111
    %v4113 = vpop.f32.mrf.mxu0
    %4114 = vmatprep.mubr.bf16.mxu0 %v2460
    %4115 = vmatmul.mubr.bf16.gmra.mxu0 %v2459
    %v4116 = vpop.f32.mrf.mxu0
    %v4117 = vadd.f32 0.0, %v4116
    %v4118 = vpop.f32.mrf.mxu0
    %v4119 = vpop.f32.mrf.mxu0
    %v4120 = vadd.f32 0.0, %v4119
    %v4121 = vpop.f32.mrf.mxu0
    %4122 = vmatprep.mubr.bf16.mxu0 %v2463
    %4123 = vmatmul.mubr.bf16.gmra.mxu0 %v2462
    %v4124 = vpop.f32.mrf.mxu0
    %v4125 = vadd.f32 0.0, %v4124
    %v4126 = vpop.f32.mrf.mxu0
    %v4127 = vpop.f32.mrf.mxu0
    %v4128 = vadd.f32 0.0, %v4127
    %v4129 = vpop.f32.mrf.mxu0
    %4130 = vmatprep.mubr.bf16.mxu0 %v2466
    %4131 = vmatmul.mubr.bf16.gmra.mxu0 %v2465
    %v4132 = vpop.f32.mrf.mxu0
    %v4133 = vadd.f32 0.0, %v4132
    %v4134 = vpop.f32.mrf.mxu0
    %v4135 = vpop.f32.mrf.mxu0
    %v4136 = vadd.f32 0.0, %v4135
    %v4137 = vpop.f32.mrf.mxu0
    %4138 = vmatprep.mubr.bf16.mxu0 %v2469
    %4139 = vmatmul.mubr.bf16.gmra.mxu0 %v2468
    %v4140 = vpop.f32.mrf.mxu0
    %v4141 = vadd.f32 0.0, %v4140
    %v4142 = vpop.f32.mrf.mxu0
    %v4143 = vpop.f32.mrf.mxu0
    %v4144 = vadd.f32 0.0, %v4143
    %v4145 = vpop.f32.mrf.mxu0
    %4146 = vmatprep.mubr.bf16.mxu0 %v2472
    %4147 = vmatmul.mubr.bf16.gmra.mxu0 %v2471
    %v4148 = vpop.f32.mrf.mxu0
    %v4149 = vadd.f32 0.0, %v4148
    %v4150 = vpop.f32.mrf.mxu0
    %v4151 = vpop.f32.mrf.mxu0
    %v4152 = vadd.f32 0.0, %v4151
    %v4153 = vpop.f32.mrf.mxu0
    %4154 = vmatprep.mubr.bf16.mxu0 %v2475
    %4155 = vmatmul.mubr.bf16.gmra.mxu0 %v2474
    %v4156 = vpop.f32.mrf.mxu0
    %v4157 = vadd.f32 0.0, %v4156
    %v4158 = vpop.f32.mrf.mxu0
    %v4159 = vpop.f32.mrf.mxu0
    %v4160 = vadd.f32 0.0, %v4159
    %v4161 = vpop.f32.mrf.mxu0
    %4162 = vmatprep.mubr.bf16.mxu0 %v2478
    %4163 = vmatmul.mubr.bf16.gmra.mxu0 %v2477
    %v4164 = vpop.f32.mrf.mxu0
    %v4165 = vadd.f32 0.0, %v4164
    %v4166 = vpop.f32.mrf.mxu0
    %v4167 = vpop.f32.mrf.mxu0
    %v4168 = vadd.f32 0.0, %v4167
    %v4169 = vpop.f32.mrf.mxu0
    %4170 = vmatprep.mubr.bf16.mxu0 %v2481
    %4171 = vmatmul.mubr.bf16.gmra.mxu0 %v2480
    %v4172 = vpop.f32.mrf.mxu0
    %v4173 = vadd.f32 0.0, %v4172
    %v4174 = vpop.f32.mrf.mxu0
    %v4175 = vpop.f32.mrf.mxu0
    %v4176 = vadd.f32 0.0, %v4175
    %v4177 = vpop.f32.mrf.mxu0
    %4178 = vmatprep.mubr.bf16.mxu0 %v2484
    %4179 = vmatmul.mubr.bf16.gmra.mxu0 %v2483
    %v4180 = vpop.f32.mrf.mxu0
    %v4181 = vadd.f32 0.0, %v4180
    %v4182 = vpop.f32.mrf.mxu0
    %v4183 = vpop.f32.mrf.mxu0
    %v4184 = vadd.f32 0.0, %v4183
    %v4185 = vpop.f32.mrf.mxu0
    %4186 = vmatprep.mubr.bf16.mxu0 %v2487
    %4187 = vmatmul.mubr.bf16.gmra.mxu0 %v2486
    %v4188 = vpop.f32.mrf.mxu0
    %v4189 = vadd.f32 0.0, %v4188
    %v4190 = vpop.f32.mrf.mxu0
    %v4191 = vpop.f32.mrf.mxu0
    %v4192 = vadd.f32 0.0, %v4191
    %v4193 = vpop.f32.mrf.mxu0
    %4194 = vmatprep.mubr.bf16.mxu0 %v2490
    %4195 = vmatmul.mubr.bf16.gmra.mxu0 %v2489
    %v4196 = vpop.f32.mrf.mxu0
    %v4197 = vadd.f32 0.0, %v4196
    %v4198 = vpop.f32.mrf.mxu0
    %v4199 = vpop.f32.mrf.mxu0
    %v4200 = vadd.f32 0.0, %v4199
    %v4201 = vpop.f32.mrf.mxu0
    %4202 = vmatprep.mubr.bf16.mxu0 %v2493
    %4203 = vmatmul.mubr.bf16.gmra.mxu0 %v2492
    %v4204 = vpop.f32.mrf.mxu0
    %v4205 = vadd.f32 0.0, %v4204
    %v4206 = vpop.f32.mrf.mxu0
    %v4207 = vpop.f32.mrf.mxu0
    %v4208 = vadd.f32 0.0, %v4207
    %v4209 = vpop.f32.mrf.mxu0
    %4210 = vmatprep.mubr.bf16.mxu0 %v2496
    %4211 = vmatmul.mubr.bf16.gmra.mxu0 %v2495
    %v4212 = vpop.f32.mrf.mxu0
    %v4213 = vadd.f32 0.0, %v4212
    %v4214 = vpop.f32.mrf.mxu0
    %v4215 = vpop.f32.mrf.mxu0
    %v4216 = vadd.f32 0.0, %v4215
    %v4217 = vpop.f32.mrf.mxu0
    %4218 = vmatprep.mubr.bf16.mxu0 %v2499
    %4219 = vmatmul.mubr.bf16.gmra.mxu0 %v2498
    %v4220 = vpop.f32.mrf.mxu0
    %v4221 = vadd.f32 0.0, %v4220
    %v4222 = vpop.f32.mrf.mxu0
    %v4223 = vpop.f32.mrf.mxu0
    %v4224 = vadd.f32 0.0, %v4223
    %v4225 = vpop.f32.mrf.mxu0
    %4226 = vmatprep.mubr.bf16.mxu0 %v2502
    %4227 = vmatmul.mubr.bf16.gmra.mxu0 %v2501
    %v4228 = vpop.f32.mrf.mxu0
    %v4229 = vadd.f32 0.0, %v4228
    %v4230 = vpop.f32.mrf.mxu0
    %v4231 = vpop.f32.mrf.mxu0
    %v4232 = vadd.f32 0.0, %v4231
    %v4233 = vpop.f32.mrf.mxu0
    %4234 = vmatprep.mubr.bf16.mxu0 %v2505
    %4235 = vmatmul.mubr.bf16.gmra.mxu0 %v2504
    %v4236 = vpop.f32.mrf.mxu0
    %v4237 = vadd.f32 0.0, %v4236
    %v4238 = vpop.f32.mrf.mxu0
    %v4239 = vpop.f32.mrf.mxu0
    %v4240 = vadd.f32 0.0, %v4239
    %v4241 = vpop.f32.mrf.mxu0
    %4242 = vmatprep.mubr.bf16.mxu0 %v2508
    %4243 = vmatmul.mubr.bf16.gmra.mxu0 %v2507
    %v4244 = vpop.f32.mrf.mxu0
    %v4245 = vadd.f32 0.0, %v4244
    %v4246 = vpop.f32.mrf.mxu0
    %v4247 = vpop.f32.mrf.mxu0
    %v4248 = vadd.f32 0.0, %v4247
    %v4249 = vpop.f32.mrf.mxu0
    %4250 = vmatprep.mubr.bf16.mxu0 %v2511
    %4251 = vmatmul.mubr.bf16.gmra.mxu0 %v2510
    %v4252 = vpop.f32.mrf.mxu0
    %v4253 = vadd.f32 0.0, %v4252
    %v4254 = vpop.f32.mrf.mxu0
    %v4255 = vpop.f32.mrf.mxu0
    %v4256 = vadd.f32 0.0, %v4255
    %v4257 = vpop.f32.mrf.mxu0
    %4258 = vmatprep.mubr.bf16.mxu0 %v2514
    %4259 = vmatmul.mubr.bf16.gmra.mxu0 %v2513
    %v4260 = vpop.f32.mrf.mxu0
    %v4261 = vadd.f32 0.0, %v4260
    %v4262 = vpop.f32.mrf.mxu0
    %v4263 = vpop.f32.mrf.mxu0
    %v4264 = vadd.f32 0.0, %v4263
    %v4265 = vpop.f32.mrf.mxu0
    %4266 = vmatprep.mubr.bf16.mxu0 %v2517
    %4267 = vmatmul.mubr.bf16.gmra.mxu0 %v2516
    %v4268 = vpop.f32.mrf.mxu0
    %v4269 = vadd.f32 0.0, %v4268
    %v4270 = vpop.f32.mrf.mxu0
    %v4271 = vpop.f32.mrf.mxu0
    %v4272 = vadd.f32 0.0, %v4271
    %v4273 = vpop.f32.mrf.mxu0
    %4274 = vmatprep.mubr.bf16.mxu0 %v2520
    %4275 = vmatmul.mubr.bf16.gmra.mxu0 %v2519
    %v4276 = vpop.f32.mrf.mxu0
    %v4277 = vadd.f32 0.0, %v4276
    %v4278 = vpop.f32.mrf.mxu0
    %v4279 = vpop.f32.mrf.mxu0
    %v4280 = vadd.f32 0.0, %v4279
    %v4281 = vpop.f32.mrf.mxu0
    %4282 = vdwg.mxu0
    %4283 = vmatprep.subr.bf16.mxu0 0
    %4284 = vmatpush1.bf16.msra.mxu0 %v3073
    %4285 = vmatprep.subr.bf16.mxu0 0
    %4286 = vmatpush1.bf16.msra.mxu0 %v3072
    %4287 = vmatprep.subr.bf16.mxu0 0
    %4288 = vmatpush1.bf16.msra.mxu0 %v3071
    %4289 = vmatprep.subr.bf16.mxu0 0
    %4290 = vmatpush1.bf16.msra.mxu0 %v3070
    %4291 = vmatprep.subr.bf16.mxu0 0
    %4292 = vmatpush1.bf16.msra.mxu0 %v3069
    %4293 = vmatprep.subr.bf16.mxu0 0
    %4294 = vmatpush1.bf16.msra.mxu0 %v3068
    %4295 = vmatprep.subr.bf16.mxu0 0
    %4296 = vmatpush1.bf16.msra.mxu0 %v3067
    %4297 = vmatprep.subr.bf16.mxu0 0
    %4298 = vmatpush1.bf16.msra.mxu0 %v3066
    %4299 = vmatprep.subr.bf16.mxu0 0
    %4300 = vmatpush2.bf16.msra.mxu0 0
    %4301 = vmatprep.subr.bf16.mxu0 0
    %4302 = vmatpush2.bf16.msra.mxu0 0
    %4303 = vmatprep.subr.bf16.mxu0 0
    %4304 = vmatpush2.bf16.msra.mxu0 0
    %4305 = vmatprep.subr.bf16.mxu0 0
    %4306 = vmatpush2.bf16.msra.mxu0 0
    %4307 = vmatprep.subr.bf16.mxu0 0
    %4308 = vmatpush2.bf16.msra.mxu0 0
    %4309 = vmatprep.subr.bf16.mxu0 0
    %4310 = vmatpush2.bf16.msra.mxu0 0
    %4311 = vmatprep.subr.bf16.mxu0 0
    %4312 = vmatpush2.bf16.msra.mxu0 0
    %4313 = vmatprep.subr.bf16.mxu0 0
    %4314 = vmatpush2.bf16.msra.mxu0 0
    %4315 = vmatprep.mubr.bf16.mxu0 0
    %4316 = vmatmul.mubr.bf16.gmra.mxu0 %v2092
    %v4317 = vpop.f32.mrf.mxu0
    %v4318 = vadd.f32 %v3133, %v4317
    %v4319 = vpop.f32.mrf.mxu0
    %v4320 = vpop.f32.mrf.mxu0
    %v4321 = vadd.f32 %v3136, %v4320
    %v4322 = vpop.f32.mrf.mxu0
    %4323 = vmatprep.mubr.bf16.mxu0 0
    %4324 = vmatmul.mubr.bf16.gmra.mxu0 %v2095
    %v4325 = vpop.f32.mrf.mxu0
    %v4326 = vadd.f32 %v3141, %v4325
    %v4327 = vpop.f32.mrf.mxu0
    %v4328 = vpop.f32.mrf.mxu0
    %v4329 = vadd.f32 %v3144, %v4328
    %v4330 = vpop.f32.mrf.mxu0
    %4331 = vmatprep.mubr.bf16.mxu0 0
    %4332 = vmatmul.mubr.bf16.gmra.mxu0 %v2098
    %v4333 = vpop.f32.mrf.mxu0
    %v4334 = vadd.f32 %v3149, %v4333
    %v4335 = vpop.f32.mrf.mxu0
    %v4336 = vpop.f32.mrf.mxu0
    %v4337 = vadd.f32 %v3152, %v4336
    %v4338 = vpop.f32.mrf.mxu0
    %4339 = vmatprep.mubr.bf16.mxu0 0
    %4340 = vmatmul.mubr.bf16.gmra.mxu0 %v2101
    %v4341 = vpop.f32.mrf.mxu0
    %v4342 = vadd.f32 %v3157, %v4341
    %v4343 = vpop.f32.mrf.mxu0
    %v4344 = vpop.f32.mrf.mxu0
    %v4345 = vadd.f32 %v3160, %v4344
    %v4346 = vpop.f32.mrf.mxu0
    %4347 = vmatprep.mubr.bf16.mxu0 0
    %4348 = vmatmul.mubr.bf16.gmra.mxu0 %v2104
    %v4349 = vpop.f32.mrf.mxu0
    %v4350 = vadd.f32 %v3165, %v4349
    %v4351 = vpop.f32.mrf.mxu0
    %v4352 = vpop.f32.mrf.mxu0
    %v4353 = vadd.f32 %v3168, %v4352
    %v4354 = vpop.f32.mrf.mxu0
    %4355 = vmatprep.mubr.bf16.mxu0 0
    %4356 = vmatmul.mubr.bf16.gmra.mxu0 %v2107
    %v4357 = vpop.f32.mrf.mxu0
    %v4358 = vadd.f32 %v3173, %v4357
    %v4359 = vpop.f32.mrf.mxu0
    %v4360 = vpop.f32.mrf.mxu0
    %v4361 = vadd.f32 %v3176, %v4360
    %v4362 = vpop.f32.mrf.mxu0
    %4363 = vmatprep.mubr.bf16.mxu0 0
    %4364 = vmatmul.mubr.bf16.gmra.mxu0 %v2110
    %v4365 = vpop.f32.mrf.mxu0
    %v4366 = vadd.f32 %v3181, %v4365
    %v4367 = vpop.f32.mrf.mxu0
    %v4368 = vpop.f32.mrf.mxu0
    %v4369 = vadd.f32 %v3184, %v4368
    %v4370 = vpop.f32.mrf.mxu0
    %4371 = vmatprep.mubr.bf16.mxu0 0
    %4372 = vmatmul.mubr.bf16.gmra.mxu0 %v2113
    %v4373 = vpop.f32.mrf.mxu0
    %v4374 = vadd.f32 %v3189, %v4373
    %v4375 = vpop.f32.mrf.mxu0
    %v4376 = vpop.f32.mrf.mxu0
    %v4377 = vadd.f32 %v3192, %v4376
    %v4378 = vpop.f32.mrf.mxu0
    %4379 = vmatprep.mubr.bf16.mxu0 0
    %4380 = vmatmul.mubr.bf16.gmra.mxu0 %v2116
    %v4381 = vpop.f32.mrf.mxu0
    %v4382 = vadd.f32 %v3197, %v4381
    %v4383 = vpop.f32.mrf.mxu0
    %v4384 = vpop.f32.mrf.mxu0
    %v4385 = vadd.f32 %v3200, %v4384
    %v4386 = vpop.f32.mrf.mxu0
    %4387 = vmatprep.mubr.bf16.mxu0 0
    %4388 = vmatmul.mubr.bf16.gmra.mxu0 %v2119
    %v4389 = vpop.f32.mrf.mxu0
    %v4390 = vadd.f32 %v3205, %v4389
    %v4391 = vpop.f32.mrf.mxu0
    %v4392 = vpop.f32.mrf.mxu0
    %v4393 = vadd.f32 %v3208, %v4392
    %v4394 = vpop.f32.mrf.mxu0
    %4395 = vmatprep.mubr.bf16.mxu0 0
    %4396 = vmatmul.mubr.bf16.gmra.mxu0 %v2122
    %v4397 = vpop.f32.mrf.mxu0
    %v4398 = vadd.f32 %v3213, %v4397
    %v4399 = vpop.f32.mrf.mxu0
    %v4400 = vpop.f32.mrf.mxu0
    %v4401 = vadd.f32 %v3216, %v4400
    %v4402 = vpop.f32.mrf.mxu0
    %4403 = vmatprep.mubr.bf16.mxu0 0
    %4404 = vmatmul.mubr.bf16.gmra.mxu0 %v2125
    %v4405 = vpop.f32.mrf.mxu0
    %v4406 = vadd.f32 %v3221, %v4405
    %v4407 = vpop.f32.mrf.mxu0
    %v4408 = vpop.f32.mrf.mxu0
    %v4409 = vadd.f32 %v3224, %v4408
    %v4410 = vpop.f32.mrf.mxu0
    %4411 = vmatprep.mubr.bf16.mxu0 0
    %4412 = vmatmul.mubr.bf16.gmra.mxu0 %v2128
    %v4413 = vpop.f32.mrf.mxu0
    %v4414 = vadd.f32 %v3229, %v4413
    %v4415 = vpop.f32.mrf.mxu0
    %v4416 = vpop.f32.mrf.mxu0
    %v4417 = vadd.f32 %v3232, %v4416
    %v4418 = vpop.f32.mrf.mxu0
    %4419 = vmatprep.mubr.bf16.mxu0 0
    %4420 = vmatmul.mubr.bf16.gmra.mxu0 %v2131
    %v4421 = vpop.f32.mrf.mxu0
    %v4422 = vadd.f32 %v3237, %v4421
    %v4423 = vpop.f32.mrf.mxu0
    %v4424 = vpop.f32.mrf.mxu0
    %v4425 = vadd.f32 %v3240, %v4424
    %v4426 = vpop.f32.mrf.mxu0
    %4427 = vmatprep.mubr.bf16.mxu0 0
    %4428 = vmatmul.mubr.bf16.gmra.mxu0 %v2134
    %v4429 = vpop.f32.mrf.mxu0
    %v4430 = vadd.f32 %v3245, %v4429
    %v4431 = vpop.f32.mrf.mxu0
    %v4432 = vpop.f32.mrf.mxu0
    %v4433 = vadd.f32 %v3248, %v4432
    %v4434 = vpop.f32.mrf.mxu0
    %4435 = vmatprep.mubr.bf16.mxu0 0
    %4436 = vmatmul.mubr.bf16.gmra.mxu0 %v2137
    %v4437 = vpop.f32.mrf.mxu0
    %v4438 = vadd.f32 %v3253, %v4437
    %v4439 = vpop.f32.mrf.mxu0
    %v4440 = vpop.f32.mrf.mxu0
    %v4441 = vadd.f32 %v3256, %v4440
    %v4442 = vpop.f32.mrf.mxu0
    %4443 = vmatprep.mubr.bf16.mxu0 0
    %4444 = vmatmul.mubr.bf16.gmra.mxu0 %v2140
    %v4445 = vpop.f32.mrf.mxu0
    %v4446 = vadd.f32 %v3261, %v4445
    %v4447 = vpop.f32.mrf.mxu0
    %v4448 = vpop.f32.mrf.mxu0
    %v4449 = vadd.f32 %v3264, %v4448
    %v4450 = vpop.f32.mrf.mxu0
    %4451 = vmatprep.mubr.bf16.mxu0 0
    %4452 = vmatmul.mubr.bf16.gmra.mxu0 %v2143
    %v4453 = vpop.f32.mrf.mxu0
    %v4454 = vadd.f32 %v3269, %v4453
    %v4455 = vpop.f32.mrf.mxu0
    %v4456 = vpop.f32.mrf.mxu0
    %v4457 = vadd.f32 %v3272, %v4456
    %v4458 = vpop.f32.mrf.mxu0
    %4459 = vmatprep.mubr.bf16.mxu0 0
    %4460 = vmatmul.mubr.bf16.gmra.mxu0 %v2146
    %v4461 = vpop.f32.mrf.mxu0
    %v4462 = vadd.f32 %v3277, %v4461
    %v4463 = vpop.f32.mrf.mxu0
    %v4464 = vpop.f32.mrf.mxu0
    %v4465 = vadd.f32 %v3280, %v4464
    %v4466 = vpop.f32.mrf.mxu0
    %4467 = vmatprep.mubr.bf16.mxu0 0
    %4468 = vmatmul.mubr.bf16.gmra.mxu0 %v2149
    %v4469 = vpop.f32.mrf.mxu0
    %v4470 = vadd.f32 %v3285, %v4469
    %v4471 = vpop.f32.mrf.mxu0
    %v4472 = vpop.f32.mrf.mxu0
    %v4473 = vadd.f32 %v3288, %v4472
    %v4474 = vpop.f32.mrf.mxu0
    %4475 = vmatprep.mubr.bf16.mxu0 0
    %4476 = vmatmul.mubr.bf16.gmra.mxu0 %v2152
    %v4477 = vpop.f32.mrf.mxu0
    %v4478 = vadd.f32 %v3293, %v4477
    %v4479 = vpop.f32.mrf.mxu0
    %v4480 = vpop.f32.mrf.mxu0
    %v4481 = vadd.f32 %v3296, %v4480
    %v4482 = vpop.f32.mrf.mxu0
    %4483 = vmatprep.mubr.bf16.mxu0 0
    %4484 = vmatmul.mubr.bf16.gmra.mxu0 %v2155
    %v4485 = vpop.f32.mrf.mxu0
    %v4486 = vadd.f32 %v3301, %v4485
    %v4487 = vpop.f32.mrf.mxu0
    %v4488 = vpop.f32.mrf.mxu0
    %v4489 = vadd.f32 %v3304, %v4488
    %v4490 = vpop.f32.mrf.mxu0
    %4491 = vmatprep.mubr.bf16.mxu0 0
    %4492 = vmatmul.mubr.bf16.gmra.mxu0 %v2158
    %v4493 = vpop.f32.mrf.mxu0
    %v4494 = vadd.f32 %v3309, %v4493
    %v4495 = vpop.f32.mrf.mxu0
    %v4496 = vpop.f32.mrf.mxu0
    %v4497 = vadd.f32 %v3312, %v4496
    %v4498 = vpop.f32.mrf.mxu0
    %4499 = vmatprep.mubr.bf16.mxu0 0
    %4500 = vmatmul.mubr.bf16.gmra.mxu0 %v2161
    %v4501 = vpop.f32.mrf.mxu0
    %v4502 = vadd.f32 %v3317, %v4501
    %v4503 = vpop.f32.mrf.mxu0
    %v4504 = vpop.f32.mrf.mxu0
    %v4505 = vadd.f32 %v3320, %v4504
    %v4506 = vpop.f32.mrf.mxu0
    %4507 = vmatprep.mubr.bf16.mxu0 0
    %4508 = vmatmul.mubr.bf16.gmra.mxu0 %v2164
    %v4509 = vpop.f32.mrf.mxu0
    %v4510 = vadd.f32 %v3325, %v4509
    %v4511 = vpop.f32.mrf.mxu0
    %v4512 = vpop.f32.mrf.mxu0
    %v4513 = vadd.f32 %v3328, %v4512
    %v4514 = vpop.f32.mrf.mxu0
    %4515 = vmatprep.mubr.bf16.mxu0 0
    %4516 = vmatmul.mubr.bf16.gmra.mxu0 %v2167
    %v4517 = vpop.f32.mrf.mxu0
    %v4518 = vadd.f32 %v3333, %v4517
    %v4519 = vpop.f32.mrf.mxu0
    %v4520 = vpop.f32.mrf.mxu0
    %v4521 = vadd.f32 %v3336, %v4520
    %v4522 = vpop.f32.mrf.mxu0
    %4523 = vmatprep.mubr.bf16.mxu0 0
    %4524 = vmatmul.mubr.bf16.gmra.mxu0 %v2170
    %v4525 = vpop.f32.mrf.mxu0
    %v4526 = vadd.f32 %v3341, %v4525
    %v4527 = vpop.f32.mrf.mxu0
    %v4528 = vpop.f32.mrf.mxu0
    %v4529 = vadd.f32 %v3344, %v4528
    %v4530 = vpop.f32.mrf.mxu0
    %4531 = vmatprep.mubr.bf16.mxu0 0
    %4532 = vmatmul.mubr.bf16.gmra.mxu0 %v2173
    %v4533 = vpop.f32.mrf.mxu0
    %v4534 = vadd.f32 %v3349, %v4533
    %v4535 = vpop.f32.mrf.mxu0
    %v4536 = vpop.f32.mrf.mxu0
    %v4537 = vadd.f32 %v3352, %v4536
    %v4538 = vpop.f32.mrf.mxu0
    %4539 = vmatprep.mubr.bf16.mxu0 0
    %4540 = vmatmul.mubr.bf16.gmra.mxu0 %v2176
    %v4541 = vpop.f32.mrf.mxu0
    %v4542 = vadd.f32 %v3357, %v4541
    %v4543 = vpop.f32.mrf.mxu0
    %v4544 = vpop.f32.mrf.mxu0
    %v4545 = vadd.f32 %v3360, %v4544
    %v4546 = vpop.f32.mrf.mxu0
    %4547 = vmatprep.mubr.bf16.mxu0 0
    %4548 = vmatmul.mubr.bf16.gmra.mxu0 %v2179
    %v4549 = vpop.f32.mrf.mxu0
    %v4550 = vadd.f32 %v3365, %v4549
    %v4551 = vpop.f32.mrf.mxu0
    %v4552 = vpop.f32.mrf.mxu0
    %v4553 = vadd.f32 %v3368, %v4552
    %v4554 = vpop.f32.mrf.mxu0
    %4555 = vmatprep.mubr.bf16.mxu0 0
    %4556 = vmatmul.mubr.bf16.gmra.mxu0 %v2182
    %v4557 = vpop.f32.mrf.mxu0
    %v4558 = vadd.f32 %v3373, %v4557
    %v4559 = vpop.f32.mrf.mxu0
    %v4560 = vpop.f32.mrf.mxu0
    %v4561 = vadd.f32 %v3376, %v4560
    %v4562 = vpop.f32.mrf.mxu0
    %4563 = vmatprep.mubr.bf16.mxu0 0
    %4564 = vmatmul.mubr.bf16.gmra.mxu0 %v2185
    %v4565 = vpop.f32.mrf.mxu0
    %v4566 = vadd.f32 %v3381, %v4565
    %v4567 = vpop.f32.mrf.mxu0
    %v4568 = vpop.f32.mrf.mxu0
    %v4569 = vadd.f32 %v3384, %v4568
    %v4570 = vpop.f32.mrf.mxu0
    %4571 = vmatprep.mubr.bf16.mxu0 0
    %4572 = vmatmul.mubr.bf16.gmra.mxu0 %v2188
    %v4573 = vpop.f32.mrf.mxu0
    %v4574 = vadd.f32 %v3389, %v4573
    %v4575 = vpop.f32.mrf.mxu0
    %v4576 = vpop.f32.mrf.mxu0
    %v4577 = vadd.f32 %v3392, %v4576
    %v4578 = vpop.f32.mrf.mxu0
    %4579 = vmatprep.mubr.bf16.mxu0 0
    %4580 = vmatmul.mubr.bf16.gmra.mxu0 %v2191
    %v4581 = vpop.f32.mrf.mxu0
    %v4582 = vadd.f32 %v3397, %v4581
    %v4583 = vpop.f32.mrf.mxu0
    %v4584 = vpop.f32.mrf.mxu0
    %v4585 = vadd.f32 %v3400, %v4584
    %v4586 = vpop.f32.mrf.mxu0
    %4587 = vmatprep.mubr.bf16.mxu0 0
    %4588 = vmatmul.mubr.bf16.gmra.mxu0 %v2194
    %v4589 = vpop.f32.mrf.mxu0
    %v4590 = vadd.f32 %v3405, %v4589
    %v4591 = vpop.f32.mrf.mxu0
    %v4592 = vpop.f32.mrf.mxu0
    %v4593 = vadd.f32 %v3408, %v4592
    %v4594 = vpop.f32.mrf.mxu0
    %4595 = vmatprep.mubr.bf16.mxu0 0
    %4596 = vmatmul.mubr.bf16.gmra.mxu0 %v2197
    %v4597 = vpop.f32.mrf.mxu0
    %v4598 = vadd.f32 %v3413, %v4597
    %v4599 = vpop.f32.mrf.mxu0
    %v4600 = vpop.f32.mrf.mxu0
    %v4601 = vadd.f32 %v3416, %v4600
    %v4602 = vpop.f32.mrf.mxu0
    %4603 = vmatprep.mubr.bf16.mxu0 0
    %4604 = vmatmul.mubr.bf16.gmra.mxu0 %v2200
    %v4605 = vpop.f32.mrf.mxu0
    %v4606 = vadd.f32 %v3421, %v4605
    %v4607 = vpop.f32.mrf.mxu0
    %v4608 = vpop.f32.mrf.mxu0
    %v4609 = vadd.f32 %v3424, %v4608
    %v4610 = vpop.f32.mrf.mxu0
    %4611 = vmatprep.mubr.bf16.mxu0 0
    %4612 = vmatmul.mubr.bf16.gmra.mxu0 %v2203
    %v4613 = vpop.f32.mrf.mxu0
    %v4614 = vadd.f32 %v3429, %v4613
    %v4615 = vpop.f32.mrf.mxu0
    %v4616 = vpop.f32.mrf.mxu0
    %v4617 = vadd.f32 %v3432, %v4616
    %v4618 = vpop.f32.mrf.mxu0
    %4619 = vmatprep.mubr.bf16.mxu0 0
    %4620 = vmatmul.mubr.bf16.gmra.mxu0 %v2206
    %v4621 = vpop.f32.mrf.mxu0
    %v4622 = vadd.f32 %v3437, %v4621
    %v4623 = vpop.f32.mrf.mxu0
    %v4624 = vpop.f32.mrf.mxu0
    %v4625 = vadd.f32 %v3440, %v4624
    %v4626 = vpop.f32.mrf.mxu0
    %4627 = vmatprep.mubr.bf16.mxu0 0
    %4628 = vmatmul.mubr.bf16.gmra.mxu0 %v2209
    %v4629 = vpop.f32.mrf.mxu0
    %v4630 = vadd.f32 %v3445, %v4629
    %v4631 = vpop.f32.mrf.mxu0
    %v4632 = vpop.f32.mrf.mxu0
    %v4633 = vadd.f32 %v3448, %v4632
    %v4634 = vpop.f32.mrf.mxu0
    %4635 = vmatprep.mubr.bf16.mxu0 0
    %4636 = vmatmul.mubr.bf16.gmra.mxu0 %v2212
    %v4637 = vpop.f32.mrf.mxu0
    %v4638 = vadd.f32 %v3453, %v4637
    %v4639 = vpop.f32.mrf.mxu0
    %v4640 = vpop.f32.mrf.mxu0
    %v4641 = vadd.f32 %v3456, %v4640
    %v4642 = vpop.f32.mrf.mxu0
    %4643 = vmatprep.mubr.bf16.mxu0 0
    %4644 = vmatmul.mubr.bf16.gmra.mxu0 %v2215
    %v4645 = vpop.f32.mrf.mxu0
    %v4646 = vadd.f32 %v3461, %v4645
    %v4647 = vpop.f32.mrf.mxu0
    %v4648 = vpop.f32.mrf.mxu0
    %v4649 = vadd.f32 %v3464, %v4648
    %v4650 = vpop.f32.mrf.mxu0
    %4651 = vmatprep.mubr.bf16.mxu0 0
    %4652 = vmatmul.mubr.bf16.gmra.mxu0 %v2218
    %v4653 = vpop.f32.mrf.mxu0
    %v4654 = vadd.f32 %v3469, %v4653
    %v4655 = vpop.f32.mrf.mxu0
    %v4656 = vpop.f32.mrf.mxu0
    %v4657 = vadd.f32 %v3472, %v4656
    %v4658 = vpop.f32.mrf.mxu0
    %4659 = vmatprep.mubr.bf16.mxu0 0
    %4660 = vmatmul.mubr.bf16.gmra.mxu0 %v2221
    %v4661 = vpop.f32.mrf.mxu0
    %v4662 = vadd.f32 %v3477, %v4661
    %v4663 = vpop.f32.mrf.mxu0
    %v4664 = vpop.f32.mrf.mxu0
    %v4665 = vadd.f32 %v3480, %v4664
    %v4666 = vpop.f32.mrf.mxu0
    %4667 = vmatprep.mubr.bf16.mxu0 0
    %4668 = vmatmul.mubr.bf16.gmra.mxu0 %v2224
    %v4669 = vpop.f32.mrf.mxu0
    %v4670 = vadd.f32 %v3485, %v4669
    %v4671 = vpop.f32.mrf.mxu0
    %v4672 = vpop.f32.mrf.mxu0
    %v4673 = vadd.f32 %v3488, %v4672
    %v4674 = vpop.f32.mrf.mxu0
    %4675 = vmatprep.mubr.bf16.mxu0 0
    %4676 = vmatmul.mubr.bf16.gmra.mxu0 %v2227
    %v4677 = vpop.f32.mrf.mxu0
    %v4678 = vadd.f32 %v3493, %v4677
    %v4679 = vpop.f32.mrf.mxu0
    %v4680 = vpop.f32.mrf.mxu0
    %v4681 = vadd.f32 %v3496, %v4680
    %v4682 = vpop.f32.mrf.mxu0
    %4683 = vmatprep.mubr.bf16.mxu0 0
    %4684 = vmatmul.mubr.bf16.gmra.mxu0 %v2230
    %v4685 = vpop.f32.mrf.mxu0
    %v4686 = vadd.f32 %v3501, %v4685
    %v4687 = vpop.f32.mrf.mxu0
    %v4688 = vpop.f32.mrf.mxu0
    %v4689 = vadd.f32 %v3504, %v4688
    %v4690 = vpop.f32.mrf.mxu0
    %4691 = vmatprep.mubr.bf16.mxu0 0
    %4692 = vmatmul.mubr.bf16.gmra.mxu0 %v2233
    %v4693 = vpop.f32.mrf.mxu0
    %v4694 = vadd.f32 %v3509, %v4693
    %v4695 = vpop.f32.mrf.mxu0
    %v4696 = vpop.f32.mrf.mxu0
    %v4697 = vadd.f32 %v3512, %v4696
    %v4698 = vpop.f32.mrf.mxu0
    %4699 = vmatprep.mubr.bf16.mxu0 0
    %4700 = vmatmul.mubr.bf16.gmra.mxu0 %v2236
    %v4701 = vpop.f32.mrf.mxu0
    %v4702 = vadd.f32 %v3517, %v4701
    %v4703 = vpop.f32.mrf.mxu0
    %v4704 = vpop.f32.mrf.mxu0
    %v4705 = vadd.f32 %v3520, %v4704
    %v4706 = vpop.f32.mrf.mxu0
    %4707 = vmatprep.mubr.bf16.mxu0 0
    %4708 = vmatmul.mubr.bf16.gmra.mxu0 %v2239
    %v4709 = vpop.f32.mrf.mxu0
    %v4710 = vadd.f32 %v3525, %v4709
    %v4711 = vpop.f32.mrf.mxu0
    %v4712 = vpop.f32.mrf.mxu0
    %v4713 = vadd.f32 %v3528, %v4712
    %v4714 = vpop.f32.mrf.mxu0
    %4715 = vmatprep.mubr.bf16.mxu0 0
    %4716 = vmatmul.mubr.bf16.gmra.mxu0 %v2242
    %v4717 = vpop.f32.mrf.mxu0
    %v4718 = vadd.f32 %v3533, %v4717
    %v4719 = vpop.f32.mrf.mxu0
    %v4720 = vpop.f32.mrf.mxu0
    %v4721 = vadd.f32 %v3536, %v4720
    %v4722 = vpop.f32.mrf.mxu0
    %4723 = vmatprep.mubr.bf16.mxu0 0
    %4724 = vmatmul.mubr.bf16.gmra.mxu0 %v2245
    %v4725 = vpop.f32.mrf.mxu0
    %v4726 = vadd.f32 %v3541, %v4725
    %v4727 = vpop.f32.mrf.mxu0
    %v4728 = vpop.f32.mrf.mxu0
    %v4729 = vadd.f32 %v3544, %v4728
    %v4730 = vpop.f32.mrf.mxu0
    %4731 = vmatprep.mubr.bf16.mxu0 0
    %4732 = vmatmul.mubr.bf16.gmra.mxu0 %v2248
    %v4733 = vpop.f32.mrf.mxu0
    %v4734 = vadd.f32 %v3549, %v4733
    %v4735 = vpop.f32.mrf.mxu0
    %v4736 = vpop.f32.mrf.mxu0
    %v4737 = vadd.f32 %v3552, %v4736
    %v4738 = vpop.f32.mrf.mxu0
    %4739 = vmatprep.mubr.bf16.mxu0 0
    %4740 = vmatmul.mubr.bf16.gmra.mxu0 %v2251
    %v4741 = vpop.f32.mrf.mxu0
    %v4742 = vadd.f32 %v3557, %v4741
    %v4743 = vpop.f32.mrf.mxu0
    %v4744 = vpop.f32.mrf.mxu0
    %v4745 = vadd.f32 %v3560, %v4744
    %v4746 = vpop.f32.mrf.mxu0
    %4747 = vmatprep.mubr.bf16.mxu0 0
    %4748 = vmatmul.mubr.bf16.gmra.mxu0 %v2254
    %v4749 = vpop.f32.mrf.mxu0
    %v4750 = vadd.f32 %v3565, %v4749
    %v4751 = vpop.f32.mrf.mxu0
    %v4752 = vpop.f32.mrf.mxu0
    %v4753 = vadd.f32 %v3568, %v4752
    %v4754 = vpop.f32.mrf.mxu0
    %4755 = vmatprep.mubr.bf16.mxu0 0
    %4756 = vmatmul.mubr.bf16.gmra.mxu0 %v2257
    %v4757 = vpop.f32.mrf.mxu0
    %v4758 = vadd.f32 %v3573, %v4757
    %v4759 = vpop.f32.mrf.mxu0
    %v4760 = vpop.f32.mrf.mxu0
    %v4761 = vadd.f32 %v3576, %v4760
    %v4762 = vpop.f32.mrf.mxu0
    %4763 = vmatprep.mubr.bf16.mxu0 0
    %4764 = vmatmul.mubr.bf16.gmra.mxu0 %v2260
    %v4765 = vpop.f32.mrf.mxu0
    %v4766 = vadd.f32 %v3581, %v4765
    %v4767 = vpop.f32.mrf.mxu0
    %v4768 = vpop.f32.mrf.mxu0
    %v4769 = vadd.f32 %v3584, %v4768
    %v4770 = vpop.f32.mrf.mxu0
    %4771 = vmatprep.mubr.bf16.mxu0 0
    %4772 = vmatmul.mubr.bf16.gmra.mxu0 %v2263
    %v4773 = vpop.f32.mrf.mxu0
    %v4774 = vadd.f32 %v3589, %v4773
    %v4775 = vpop.f32.mrf.mxu0
    %v4776 = vpop.f32.mrf.mxu0
    %v4777 = vadd.f32 %v3592, %v4776
    %v4778 = vpop.f32.mrf.mxu0
    %4779 = vmatprep.mubr.bf16.mxu0 0
    %4780 = vmatmul.mubr.bf16.gmra.mxu0 %v2266
    %v4781 = vpop.f32.mrf.mxu0
    %v4782 = vadd.f32 %v3597, %v4781
    %v4783 = vpop.f32.mrf.mxu0
    %v4784 = vpop.f32.mrf.mxu0
    %v4785 = vadd.f32 %v3600, %v4784
    %v4786 = vpop.f32.mrf.mxu0
    %4787 = vmatprep.mubr.bf16.mxu0 0
    %4788 = vmatmul.mubr.bf16.gmra.mxu0 %v2269
    %v4789 = vpop.f32.mrf.mxu0
    %v4790 = vadd.f32 %v3605, %v4789
    %v4791 = vpop.f32.mrf.mxu0
    %v4792 = vpop.f32.mrf.mxu0
    %v4793 = vadd.f32 %v3608, %v4792
    %v4794 = vpop.f32.mrf.mxu0
    %4795 = vmatprep.mubr.bf16.mxu0 0
    %4796 = vmatmul.mubr.bf16.gmra.mxu0 %v2272
    %v4797 = vpop.f32.mrf.mxu0
    %v4798 = vadd.f32 %v3613, %v4797
    %v4799 = vpop.f32.mrf.mxu0
    %v4800 = vpop.f32.mrf.mxu0
    %v4801 = vadd.f32 %v3616, %v4800
    %v4802 = vpop.f32.mrf.mxu0
    %4803 = vmatprep.mubr.bf16.mxu0 0
    %4804 = vmatmul.mubr.bf16.gmra.mxu0 %v2275
    %v4805 = vpop.f32.mrf.mxu0
    %v4806 = vadd.f32 %v3621, %v4805
    %v4807 = vpop.f32.mrf.mxu0
    %v4808 = vpop.f32.mrf.mxu0
    %v4809 = vadd.f32 %v3624, %v4808
    %v4810 = vpop.f32.mrf.mxu0
    %4811 = vmatprep.mubr.bf16.mxu0 0
    %4812 = vmatmul.mubr.bf16.gmra.mxu0 %v2278
    %v4813 = vpop.f32.mrf.mxu0
    %v4814 = vadd.f32 %v3629, %v4813
    %v4815 = vpop.f32.mrf.mxu0
    %v4816 = vpop.f32.mrf.mxu0
    %v4817 = vadd.f32 %v3632, %v4816
    %v4818 = vpop.f32.mrf.mxu0
    %4819 = vmatprep.mubr.bf16.mxu0 0
    %4820 = vmatmul.mubr.bf16.gmra.mxu0 %v2281
    %v4821 = vpop.f32.mrf.mxu0
    %v4822 = vadd.f32 %v3637, %v4821
    %v4823 = vpop.f32.mrf.mxu0
    %v4824 = vpop.f32.mrf.mxu0
    %v4825 = vadd.f32 %v3640, %v4824
    %v4826 = vpop.f32.mrf.mxu0
    %4827 = vmatprep.mubr.bf16.mxu0 0
    %4828 = vmatmul.mubr.bf16.gmra.mxu0 %v2284
    %v4829 = vpop.f32.mrf.mxu0
    %v4830 = vadd.f32 %v3645, %v4829
    %v4831 = vpop.f32.mrf.mxu0
    %v4832 = vpop.f32.mrf.mxu0
    %v4833 = vadd.f32 %v3648, %v4832
    %v4834 = vpop.f32.mrf.mxu0
    %4835 = vmatprep.mubr.bf16.mxu0 0
    %4836 = vmatmul.mubr.bf16.gmra.mxu0 %v2287
    %v4837 = vpop.f32.mrf.mxu0
    %v4838 = vadd.f32 %v3653, %v4837
    %v4839 = vpop.f32.mrf.mxu0
    %v4840 = vpop.f32.mrf.mxu0
    %v4841 = vadd.f32 %v3656, %v4840
    %v4842 = vpop.f32.mrf.mxu0
    %4843 = vmatprep.mubr.bf16.mxu0 0
    %4844 = vmatmul.mubr.bf16.gmra.mxu0 %v2290
    %v4845 = vpop.f32.mrf.mxu0
    %v4846 = vadd.f32 %v3661, %v4845
    %v4847 = vpop.f32.mrf.mxu0
    %v4848 = vpop.f32.mrf.mxu0
    %v4849 = vadd.f32 %v3664, %v4848
    %v4850 = vpop.f32.mrf.mxu0
    %4851 = vmatprep.mubr.bf16.mxu0 0
    %4852 = vmatmul.mubr.bf16.gmra.mxu0 %v2293
    %v4853 = vpop.f32.mrf.mxu0
    %v4854 = vadd.f32 %v3669, %v4853
    %v4855 = vpop.f32.mrf.mxu0
    %v4856 = vpop.f32.mrf.mxu0
    %v4857 = vadd.f32 %v3672, %v4856
    %v4858 = vpop.f32.mrf.mxu0
    %4859 = vmatprep.mubr.bf16.mxu0 0
    %4860 = vmatmul.mubr.bf16.gmra.mxu0 %v2296
    %v4861 = vpop.f32.mrf.mxu0
    %v4862 = vadd.f32 %v3677, %v4861
    %v4863 = vpop.f32.mrf.mxu0
    %v4864 = vpop.f32.mrf.mxu0
    %v4865 = vadd.f32 %v3680, %v4864
    %v4866 = vpop.f32.mrf.mxu0
    %4867 = vmatprep.mubr.bf16.mxu0 0
    %4868 = vmatmul.mubr.bf16.gmra.mxu0 %v2299
    %v4869 = vpop.f32.mrf.mxu0
    %v4870 = vadd.f32 %v3685, %v4869
    %v4871 = vpop.f32.mrf.mxu0
    %v4872 = vpop.f32.mrf.mxu0
    %v4873 = vadd.f32 %v3688, %v4872
    %v4874 = vpop.f32.mrf.mxu0
    %4875 = vmatprep.mubr.bf16.mxu0 0
    %4876 = vmatmul.mubr.bf16.gmra.mxu0 %v2302
    %v4877 = vpop.f32.mrf.mxu0
    %v4878 = vadd.f32 %v3693, %v4877
    %v4879 = vpop.f32.mrf.mxu0
    %v4880 = vpop.f32.mrf.mxu0
    %v4881 = vadd.f32 %v3696, %v4880
    %v4882 = vpop.f32.mrf.mxu0
    %4883 = vmatprep.mubr.bf16.mxu0 0
    %4884 = vmatmul.mubr.bf16.gmra.mxu0 %v2305
    %v4885 = vpop.f32.mrf.mxu0
    %v4886 = vadd.f32 %v3701, %v4885
    %v4887 = vpop.f32.mrf.mxu0
    %v4888 = vpop.f32.mrf.mxu0
    %v4889 = vadd.f32 %v3704, %v4888
    %v4890 = vpop.f32.mrf.mxu0
    %4891 = vmatprep.mubr.bf16.mxu0 0
    %4892 = vmatmul.mubr.bf16.gmra.mxu0 %v2308
    %v4893 = vpop.f32.mrf.mxu0
    %v4894 = vadd.f32 %v3709, %v4893
    %v4895 = vpop.f32.mrf.mxu0
    %v4896 = vpop.f32.mrf.mxu0
    %v4897 = vadd.f32 %v3712, %v4896
    %v4898 = vpop.f32.mrf.mxu0
    %4899 = vmatprep.mubr.bf16.mxu0 0
    %4900 = vmatmul.mubr.bf16.gmra.mxu0 %v2311
    %v4901 = vpop.f32.mrf.mxu0
    %v4902 = vadd.f32 %v3717, %v4901
    %v4903 = vpop.f32.mrf.mxu0
    %v4904 = vpop.f32.mrf.mxu0
    %v4905 = vadd.f32 %v3720, %v4904
    %v4906 = vpop.f32.mrf.mxu0
    %4907 = vmatprep.mubr.bf16.mxu0 0
    %4908 = vmatmul.mubr.bf16.gmra.mxu0 %v2314
    %v4909 = vpop.f32.mrf.mxu0
    %v4910 = vadd.f32 %v3725, %v4909
    %v4911 = vpop.f32.mrf.mxu0
    %v4912 = vpop.f32.mrf.mxu0
    %v4913 = vadd.f32 %v3728, %v4912
    %v4914 = vpop.f32.mrf.mxu0
    %4915 = vmatprep.mubr.bf16.mxu0 0
    %4916 = vmatmul.mubr.bf16.gmra.mxu0 %v2317
    %v4917 = vpop.f32.mrf.mxu0
    %v4918 = vadd.f32 %v3733, %v4917
    %v4919 = vpop.f32.mrf.mxu0
    %v4920 = vpop.f32.mrf.mxu0
    %v4921 = vadd.f32 %v3736, %v4920
    %v4922 = vpop.f32.mrf.mxu0
    %4923 = vmatprep.mubr.bf16.mxu0 0
    %4924 = vmatmul.mubr.bf16.gmra.mxu0 %v2320
    %v4925 = vpop.f32.mrf.mxu0
    %v4926 = vadd.f32 %v3741, %v4925
    %v4927 = vpop.f32.mrf.mxu0
    %v4928 = vpop.f32.mrf.mxu0
    %v4929 = vadd.f32 %v3744, %v4928
    %v4930 = vpop.f32.mrf.mxu0
    %4931 = vmatprep.mubr.bf16.mxu0 0
    %4932 = vmatmul.mubr.bf16.gmra.mxu0 %v2323
    %v4933 = vpop.f32.mrf.mxu0
    %v4934 = vadd.f32 %v3749, %v4933
    %v4935 = vpop.f32.mrf.mxu0
    %v4936 = vpop.f32.mrf.mxu0
    %v4937 = vadd.f32 %v3752, %v4936
    %v4938 = vpop.f32.mrf.mxu0
    %4939 = vmatprep.mubr.bf16.mxu0 0
    %4940 = vmatmul.mubr.bf16.gmra.mxu0 %v2326
    %v4941 = vpop.f32.mrf.mxu0
    %v4942 = vadd.f32 %v3757, %v4941
    %v4943 = vpop.f32.mrf.mxu0
    %v4944 = vpop.f32.mrf.mxu0
    %v4945 = vadd.f32 %v3760, %v4944
    %v4946 = vpop.f32.mrf.mxu0
    %4947 = vmatprep.mubr.bf16.mxu0 0
    %4948 = vmatmul.mubr.bf16.gmra.mxu0 %v2329
    %v4949 = vpop.f32.mrf.mxu0
    %v4950 = vadd.f32 %v3765, %v4949
    %v4951 = vpop.f32.mrf.mxu0
    %v4952 = vpop.f32.mrf.mxu0
    %v4953 = vadd.f32 %v3768, %v4952
    %v4954 = vpop.f32.mrf.mxu0
    %4955 = vmatprep.mubr.bf16.mxu0 0
    %4956 = vmatmul.mubr.bf16.gmra.mxu0 %v2332
    %v4957 = vpop.f32.mrf.mxu0
    %v4958 = vadd.f32 %v3773, %v4957
    %v4959 = vpop.f32.mrf.mxu0
    %v4960 = vpop.f32.mrf.mxu0
    %v4961 = vadd.f32 %v3776, %v4960
    %v4962 = vpop.f32.mrf.mxu0
    %4963 = vmatprep.mubr.bf16.mxu0 0
    %4964 = vmatmul.mubr.bf16.gmra.mxu0 %v2335
    %v4965 = vpop.f32.mrf.mxu0
    %v4966 = vadd.f32 %v3781, %v4965
    %v4967 = vpop.f32.mrf.mxu0
    %v4968 = vpop.f32.mrf.mxu0
    %v4969 = vadd.f32 %v3784, %v4968
    %v4970 = vpop.f32.mrf.mxu0
    %4971 = vmatprep.mubr.bf16.mxu0 0
    %4972 = vmatmul.mubr.bf16.gmra.mxu0 %v2338
    %v4973 = vpop.f32.mrf.mxu0
    %v4974 = vadd.f32 %v3789, %v4973
    %v4975 = vpop.f32.mrf.mxu0
    %v4976 = vpop.f32.mrf.mxu0
    %v4977 = vadd.f32 %v3792, %v4976
    %v4978 = vpop.f32.mrf.mxu0
    %4979 = vmatprep.mubr.bf16.mxu0 0
    %4980 = vmatmul.mubr.bf16.gmra.mxu0 %v2341
    %v4981 = vpop.f32.mrf.mxu0
    %v4982 = vadd.f32 %v3797, %v4981
    %v4983 = vpop.f32.mrf.mxu0
    %v4984 = vpop.f32.mrf.mxu0
    %v4985 = vadd.f32 %v3800, %v4984
    %v4986 = vpop.f32.mrf.mxu0
    %4987 = vmatprep.mubr.bf16.mxu0 0
    %4988 = vmatmul.mubr.bf16.gmra.mxu0 %v2344
    %v4989 = vpop.f32.mrf.mxu0
    %v4990 = vadd.f32 %v3805, %v4989
    %v4991 = vpop.f32.mrf.mxu0
    %v4992 = vpop.f32.mrf.mxu0
    %v4993 = vadd.f32 %v3808, %v4992
    %v4994 = vpop.f32.mrf.mxu0
    %4995 = vmatprep.mubr.bf16.mxu0 0
    %4996 = vmatmul.mubr.bf16.gmra.mxu0 %v2347
    %v4997 = vpop.f32.mrf.mxu0
    %v4998 = vadd.f32 %v3813, %v4997
    %v4999 = vpop.f32.mrf.mxu0
    %v5000 = vpop.f32.mrf.mxu0
    %v5001 = vadd.f32 %v3816, %v5000
    %v5002 = vpop.f32.mrf.mxu0
    %5003 = vmatprep.mubr.bf16.mxu0 0
    %5004 = vmatmul.mubr.bf16.gmra.mxu0 %v2350
    %v5005 = vpop.f32.mrf.mxu0
    %v5006 = vadd.f32 %v3821, %v5005
    %v5007 = vpop.f32.mrf.mxu0
    %v5008 = vpop.f32.mrf.mxu0
    %v5009 = vadd.f32 %v3824, %v5008
    %v5010 = vpop.f32.mrf.mxu0
    %5011 = vmatprep.mubr.bf16.mxu0 0
    %5012 = vmatmul.mubr.bf16.gmra.mxu0 %v2353
    %v5013 = vpop.f32.mrf.mxu0
    %v5014 = vadd.f32 %v3829, %v5013
    %v5015 = vpop.f32.mrf.mxu0
    %v5016 = vpop.f32.mrf.mxu0
    %v5017 = vadd.f32 %v3832, %v5016
    %v5018 = vpop.f32.mrf.mxu0
    %5019 = vmatprep.mubr.bf16.mxu0 0
    %5020 = vmatmul.mubr.bf16.gmra.mxu0 %v2356
    %v5021 = vpop.f32.mrf.mxu0
    %v5022 = vadd.f32 %v3837, %v5021
    %v5023 = vpop.f32.mrf.mxu0
    %v5024 = vpop.f32.mrf.mxu0
    %v5025 = vadd.f32 %v3840, %v5024
    %v5026 = vpop.f32.mrf.mxu0
    %5027 = vmatprep.mubr.bf16.mxu0 0
    %5028 = vmatmul.mubr.bf16.gmra.mxu0 %v2359
    %v5029 = vpop.f32.mrf.mxu0
    %v5030 = vadd.f32 %v3845, %v5029
    %v5031 = vpop.f32.mrf.mxu0
    %v5032 = vpop.f32.mrf.mxu0
    %v5033 = vadd.f32 %v3848, %v5032
    %v5034 = vpop.f32.mrf.mxu0
    %5035 = vmatprep.mubr.bf16.mxu0 0
    %5036 = vmatmul.mubr.bf16.gmra.mxu0 %v2362
    %v5037 = vpop.f32.mrf.mxu0
    %v5038 = vadd.f32 %v3853, %v5037
    %v5039 = vpop.f32.mrf.mxu0
    %v5040 = vpop.f32.mrf.mxu0
    %v5041 = vadd.f32 %v3856, %v5040
    %v5042 = vpop.f32.mrf.mxu0
    %5043 = vmatprep.mubr.bf16.mxu0 0
    %5044 = vmatmul.mubr.bf16.gmra.mxu0 %v2365
    %v5045 = vpop.f32.mrf.mxu0
    %v5046 = vadd.f32 %v3861, %v5045
    %v5047 = vpop.f32.mrf.mxu0
    %v5048 = vpop.f32.mrf.mxu0
    %v5049 = vadd.f32 %v3864, %v5048
    %v5050 = vpop.f32.mrf.mxu0
    %5051 = vmatprep.mubr.bf16.mxu0 0
    %5052 = vmatmul.mubr.bf16.gmra.mxu0 %v2368
    %v5053 = vpop.f32.mrf.mxu0
    %v5054 = vadd.f32 %v3869, %v5053
    %v5055 = vpop.f32.mrf.mxu0
    %v5056 = vpop.f32.mrf.mxu0
    %v5057 = vadd.f32 %v3872, %v5056
    %v5058 = vpop.f32.mrf.mxu0
    %5059 = vmatprep.mubr.bf16.mxu0 0
    %5060 = vmatmul.mubr.bf16.gmra.mxu0 %v2371
    %v5061 = vpop.f32.mrf.mxu0
    %v5062 = vadd.f32 %v3877, %v5061
    %v5063 = vpop.f32.mrf.mxu0
    %v5064 = vpop.f32.mrf.mxu0
    %v5065 = vadd.f32 %v3880, %v5064
    %v5066 = vpop.f32.mrf.mxu0
    %5067 = vmatprep.mubr.bf16.mxu0 0
    %5068 = vmatmul.mubr.bf16.gmra.mxu0 %v2374
    %v5069 = vpop.f32.mrf.mxu0
    %v5070 = vadd.f32 %v3885, %v5069
    %v5071 = vpop.f32.mrf.mxu0
    %v5072 = vpop.f32.mrf.mxu0
    %v5073 = vadd.f32 %v3888, %v5072
    %v5074 = vpop.f32.mrf.mxu0
    %5075 = vmatprep.mubr.bf16.mxu0 0
    %5076 = vmatmul.mubr.bf16.gmra.mxu0 %v2377
    %v5077 = vpop.f32.mrf.mxu0
    %v5078 = vadd.f32 %v3893, %v5077
    %v5079 = vpop.f32.mrf.mxu0
    %v5080 = vpop.f32.mrf.mxu0
    %v5081 = vadd.f32 %v3896, %v5080
    %v5082 = vpop.f32.mrf.mxu0
    %5083 = vmatprep.mubr.bf16.mxu0 0
    %5084 = vmatmul.mubr.bf16.gmra.mxu0 %v2380
    %v5085 = vpop.f32.mrf.mxu0
    %v5086 = vadd.f32 %v3901, %v5085
    %v5087 = vpop.f32.mrf.mxu0
    %v5088 = vpop.f32.mrf.mxu0
    %v5089 = vadd.f32 %v3904, %v5088
    %v5090 = vpop.f32.mrf.mxu0
    %5091 = vmatprep.mubr.bf16.mxu0 0
    %5092 = vmatmul.mubr.bf16.gmra.mxu0 %v2383
    %v5093 = vpop.f32.mrf.mxu0
    %v5094 = vadd.f32 %v3909, %v5093
    %v5095 = vpop.f32.mrf.mxu0
    %v5096 = vpop.f32.mrf.mxu0
    %v5097 = vadd.f32 %v3912, %v5096
    %v5098 = vpop.f32.mrf.mxu0
    %5099 = vmatprep.mubr.bf16.mxu0 0
    %5100 = vmatmul.mubr.bf16.gmra.mxu0 %v2386
    %v5101 = vpop.f32.mrf.mxu0
    %v5102 = vadd.f32 %v3917, %v5101
    %v5103 = vpop.f32.mrf.mxu0
    %v5104 = vpop.f32.mrf.mxu0
    %v5105 = vadd.f32 %v3920, %v5104
    %v5106 = vpop.f32.mrf.mxu0
    %5107 = vmatprep.mubr.bf16.mxu0 0
    %5108 = vmatmul.mubr.bf16.gmra.mxu0 %v2389
    %v5109 = vpop.f32.mrf.mxu0
    %v5110 = vadd.f32 %v3925, %v5109
    %v5111 = vpop.f32.mrf.mxu0
    %v5112 = vpop.f32.mrf.mxu0
    %v5113 = vadd.f32 %v3928, %v5112
    %v5114 = vpop.f32.mrf.mxu0
    %5115 = vmatprep.mubr.bf16.mxu0 0
    %5116 = vmatmul.mubr.bf16.gmra.mxu0 %v2392
    %v5117 = vpop.f32.mrf.mxu0
    %v5118 = vadd.f32 %v3933, %v5117
    %v5119 = vpop.f32.mrf.mxu0
    %v5120 = vpop.f32.mrf.mxu0
    %v5121 = vadd.f32 %v3936, %v5120
    %v5122 = vpop.f32.mrf.mxu0
    %5123 = vmatprep.mubr.bf16.mxu0 0
    %5124 = vmatmul.mubr.bf16.gmra.mxu0 %v2395
    %v5125 = vpop.f32.mrf.mxu0
    %v5126 = vadd.f32 %v3941, %v5125
    %v5127 = vpop.f32.mrf.mxu0
    %v5128 = vpop.f32.mrf.mxu0
    %v5129 = vadd.f32 %v3944, %v5128
    %v5130 = vpop.f32.mrf.mxu0
    %5131 = vmatprep.mubr.bf16.mxu0 0
    %5132 = vmatmul.mubr.bf16.gmra.mxu0 %v2398
    %v5133 = vpop.f32.mrf.mxu0
    %v5134 = vadd.f32 %v3949, %v5133
    %v5135 = vpop.f32.mrf.mxu0
    %v5136 = vpop.f32.mrf.mxu0
    %v5137 = vadd.f32 %v3952, %v5136
    %v5138 = vpop.f32.mrf.mxu0
    %5139 = vmatprep.mubr.bf16.mxu0 0
    %5140 = vmatmul.mubr.bf16.gmra.mxu0 %v2401
    %v5141 = vpop.f32.mrf.mxu0
    %v5142 = vadd.f32 %v3957, %v5141
    %v5143 = vpop.f32.mrf.mxu0
    %v5144 = vpop.f32.mrf.mxu0
    %v5145 = vadd.f32 %v3960, %v5144
    %v5146 = vpop.f32.mrf.mxu0
    %5147 = vmatprep.mubr.bf16.mxu0 0
    %5148 = vmatmul.mubr.bf16.gmra.mxu0 %v2404
    %v5149 = vpop.f32.mrf.mxu0
    %v5150 = vadd.f32 %v3965, %v5149
    %v5151 = vpop.f32.mrf.mxu0
    %v5152 = vpop.f32.mrf.mxu0
    %v5153 = vadd.f32 %v3968, %v5152
    %v5154 = vpop.f32.mrf.mxu0
    %5155 = vmatprep.mubr.bf16.mxu0 0
    %5156 = vmatmul.mubr.bf16.gmra.mxu0 %v2407
    %v5157 = vpop.f32.mrf.mxu0
    %v5158 = vadd.f32 %v3973, %v5157
    %v5159 = vpop.f32.mrf.mxu0
    %v5160 = vpop.f32.mrf.mxu0
    %v5161 = vadd.f32 %v3976, %v5160
    %v5162 = vpop.f32.mrf.mxu0
    %5163 = vmatprep.mubr.bf16.mxu0 0
    %5164 = vmatmul.mubr.bf16.gmra.mxu0 %v2410
    %v5165 = vpop.f32.mrf.mxu0
    %v5166 = vadd.f32 %v3981, %v5165
    %v5167 = vpop.f32.mrf.mxu0
    %v5168 = vpop.f32.mrf.mxu0
    %v5169 = vadd.f32 %v3984, %v5168
    %v5170 = vpop.f32.mrf.mxu0
    %5171 = vmatprep.mubr.bf16.mxu0 0
    %5172 = vmatmul.mubr.bf16.gmra.mxu0 %v2413
    %v5173 = vpop.f32.mrf.mxu0
    %v5174 = vadd.f32 %v3989, %v5173
    %v5175 = vpop.f32.mrf.mxu0
    %v5176 = vpop.f32.mrf.mxu0
    %v5177 = vadd.f32 %v3992, %v5176
    %v5178 = vpop.f32.mrf.mxu0
    %5179 = vmatprep.mubr.bf16.mxu0 0
    %5180 = vmatmul.mubr.bf16.gmra.mxu0 %v2416
    %v5181 = vpop.f32.mrf.mxu0
    %v5182 = vadd.f32 %v3997, %v5181
    %v5183 = vpop.f32.mrf.mxu0
    %v5184 = vpop.f32.mrf.mxu0
    %v5185 = vadd.f32 %v4000, %v5184
    %v5186 = vpop.f32.mrf.mxu0
    %5187 = vmatprep.mubr.bf16.mxu0 0
    %5188 = vmatmul.mubr.bf16.gmra.mxu0 %v2419
    %v5189 = vpop.f32.mrf.mxu0
    %v5190 = vadd.f32 %v4005, %v5189
    %v5191 = vpop.f32.mrf.mxu0
    %v5192 = vpop.f32.mrf.mxu0
    %v5193 = vadd.f32 %v4008, %v5192
    %v5194 = vpop.f32.mrf.mxu0
    %5195 = vmatprep.mubr.bf16.mxu0 0
    %5196 = vmatmul.mubr.bf16.gmra.mxu0 %v2422
    %v5197 = vpop.f32.mrf.mxu0
    %v5198 = vadd.f32 %v4013, %v5197
    %v5199 = vpop.f32.mrf.mxu0
    %v5200 = vpop.f32.mrf.mxu0
    %v5201 = vadd.f32 %v4016, %v5200
    %v5202 = vpop.f32.mrf.mxu0
    %5203 = vmatprep.mubr.bf16.mxu0 0
    %5204 = vmatmul.mubr.bf16.gmra.mxu0 %v2425
    %v5205 = vpop.f32.mrf.mxu0
    %v5206 = vadd.f32 %v4021, %v5205
    %v5207 = vpop.f32.mrf.mxu0
    %v5208 = vpop.f32.mrf.mxu0
    %v5209 = vadd.f32 %v4024, %v5208
    %v5210 = vpop.f32.mrf.mxu0
    %5211 = vmatprep.mubr.bf16.mxu0 0
    %5212 = vmatmul.mubr.bf16.gmra.mxu0 %v2428
    %v5213 = vpop.f32.mrf.mxu0
    %v5214 = vadd.f32 %v4029, %v5213
    %v5215 = vpop.f32.mrf.mxu0
    %v5216 = vpop.f32.mrf.mxu0
    %v5217 = vadd.f32 %v4032, %v5216
    %v5218 = vpop.f32.mrf.mxu0
    %5219 = vmatprep.mubr.bf16.mxu0 0
    %5220 = vmatmul.mubr.bf16.gmra.mxu0 %v2431
    %v5221 = vpop.f32.mrf.mxu0
    %v5222 = vadd.f32 %v4037, %v5221
    %v5223 = vpop.f32.mrf.mxu0
    %v5224 = vpop.f32.mrf.mxu0
    %v5225 = vadd.f32 %v4040, %v5224
    %v5226 = vpop.f32.mrf.mxu0
    %5227 = vmatprep.mubr.bf16.mxu0 0
    %5228 = vmatmul.mubr.bf16.gmra.mxu0 %v2434
    %v5229 = vpop.f32.mrf.mxu0
    %v5230 = vadd.f32 %v4045, %v5229
    %v5231 = vpop.f32.mrf.mxu0
    %v5232 = vpop.f32.mrf.mxu0
    %v5233 = vadd.f32 %v4048, %v5232
    %v5234 = vpop.f32.mrf.mxu0
    %5235 = vmatprep.mubr.bf16.mxu0 0
    %5236 = vmatmul.mubr.bf16.gmra.mxu0 %v2437
    %v5237 = vpop.f32.mrf.mxu0
    %v5238 = vadd.f32 %v4053, %v5237
    %v5239 = vpop.f32.mrf.mxu0
    %v5240 = vpop.f32.mrf.mxu0
    %v5241 = vadd.f32 %v4056, %v5240
    %v5242 = vpop.f32.mrf.mxu0
    %5243 = vmatprep.mubr.bf16.mxu0 0
    %5244 = vmatmul.mubr.bf16.gmra.mxu0 %v2440
    %v5245 = vpop.f32.mrf.mxu0
    %v5246 = vadd.f32 %v4061, %v5245
    %v5247 = vpop.f32.mrf.mxu0
    %v5248 = vpop.f32.mrf.mxu0
    %v5249 = vadd.f32 %v4064, %v5248
    %v5250 = vpop.f32.mrf.mxu0
    %5251 = vmatprep.mubr.bf16.mxu0 0
    %5252 = vmatmul.mubr.bf16.gmra.mxu0 %v2443
    %v5253 = vpop.f32.mrf.mxu0
    %v5254 = vadd.f32 %v4069, %v5253
    %v5255 = vpop.f32.mrf.mxu0
    %v5256 = vpop.f32.mrf.mxu0
    %v5257 = vadd.f32 %v4072, %v5256
    %v5258 = vpop.f32.mrf.mxu0
    %5259 = vmatprep.mubr.bf16.mxu0 0
    %5260 = vmatmul.mubr.bf16.gmra.mxu0 %v2446
    %v5261 = vpop.f32.mrf.mxu0
    %v5262 = vadd.f32 %v4077, %v5261
    %v5263 = vpop.f32.mrf.mxu0
    %v5264 = vpop.f32.mrf.mxu0
    %v5265 = vadd.f32 %v4080, %v5264
    %v5266 = vpop.f32.mrf.mxu0
    %5267 = vmatprep.mubr.bf16.mxu0 0
    %5268 = vmatmul.mubr.bf16.gmra.mxu0 %v2449
    %v5269 = vpop.f32.mrf.mxu0
    %v5270 = vadd.f32 %v4085, %v5269
    %v5271 = vpop.f32.mrf.mxu0
    %v5272 = vpop.f32.mrf.mxu0
    %v5273 = vadd.f32 %v4088, %v5272
    %v5274 = vpop.f32.mrf.mxu0
    %5275 = vmatprep.mubr.bf16.mxu0 0
    %5276 = vmatmul.mubr.bf16.gmra.mxu0 %v2452
    %v5277 = vpop.f32.mrf.mxu0
    %v5278 = vadd.f32 %v4093, %v5277
    %v5279 = vpop.f32.mrf.mxu0
    %v5280 = vpop.f32.mrf.mxu0
    %v5281 = vadd.f32 %v4096, %v5280
    %v5282 = vpop.f32.mrf.mxu0
    %5283 = vmatprep.mubr.bf16.mxu0 0
    %5284 = vmatmul.mubr.bf16.gmra.mxu0 %v2455
    %v5285 = vpop.f32.mrf.mxu0
    %v5286 = vadd.f32 %v4101, %v5285
    %v5287 = vpop.f32.mrf.mxu0
    %v5288 = vpop.f32.mrf.mxu0
    %v5289 = vadd.f32 %v4104, %v5288
    %v5290 = vpop.f32.mrf.mxu0
    %5291 = vmatprep.mubr.bf16.mxu0 0
    %5292 = vmatmul.mubr.bf16.gmra.mxu0 %v2458
    %v5293 = vpop.f32.mrf.mxu0
    %v5294 = vadd.f32 %v4109, %v5293
    %v5295 = vpop.f32.mrf.mxu0
    %v5296 = vpop.f32.mrf.mxu0
    %v5297 = vadd.f32 %v4112, %v5296
    %v5298 = vpop.f32.mrf.mxu0
    %5299 = vmatprep.mubr.bf16.mxu0 0
    %5300 = vmatmul.mubr.bf16.gmra.mxu0 %v2461
    %v5301 = vpop.f32.mrf.mxu0
    %v5302 = vadd.f32 %v4117, %v5301
    %v5303 = vpop.f32.mrf.mxu0
    %v5304 = vpop.f32.mrf.mxu0
    %v5305 = vadd.f32 %v4120, %v5304
    %v5306 = vpop.f32.mrf.mxu0
    %5307 = vmatprep.mubr.bf16.mxu0 0
    %5308 = vmatmul.mubr.bf16.gmra.mxu0 %v2464
    %v5309 = vpop.f32.mrf.mxu0
    %v5310 = vadd.f32 %v4125, %v5309
    %v5311 = vpop.f32.mrf.mxu0
    %v5312 = vpop.f32.mrf.mxu0
    %v5313 = vadd.f32 %v4128, %v5312
    %v5314 = vpop.f32.mrf.mxu0
    %5315 = vmatprep.mubr.bf16.mxu0 0
    %5316 = vmatmul.mubr.bf16.gmra.mxu0 %v2467
    %v5317 = vpop.f32.mrf.mxu0
    %v5318 = vadd.f32 %v4133, %v5317
    %v5319 = vpop.f32.mrf.mxu0
    %v5320 = vpop.f32.mrf.mxu0
    %v5321 = vadd.f32 %v4136, %v5320
    %v5322 = vpop.f32.mrf.mxu0
    %5323 = vmatprep.mubr.bf16.mxu0 0
    %5324 = vmatmul.mubr.bf16.gmra.mxu0 %v2470
    %v5325 = vpop.f32.mrf.mxu0
    %v5326 = vadd.f32 %v4141, %v5325
    %v5327 = vpop.f32.mrf.mxu0
    %v5328 = vpop.f32.mrf.mxu0
    %v5329 = vadd.f32 %v4144, %v5328
    %v5330 = vpop.f32.mrf.mxu0
    %5331 = vmatprep.mubr.bf16.mxu0 0
    %5332 = vmatmul.mubr.bf16.gmra.mxu0 %v2473
    %v5333 = vpop.f32.mrf.mxu0
    %v5334 = vadd.f32 %v4149, %v5333
    %v5335 = vpop.f32.mrf.mxu0
    %v5336 = vpop.f32.mrf.mxu0
    %v5337 = vadd.f32 %v4152, %v5336
    %v5338 = vpop.f32.mrf.mxu0
    %5339 = vmatprep.mubr.bf16.mxu0 0
    %5340 = vmatmul.mubr.bf16.gmra.mxu0 %v2476
    %v5341 = vpop.f32.mrf.mxu0
    %v5342 = vadd.f32 %v4157, %v5341
    %v5343 = vpop.f32.mrf.mxu0
    %v5344 = vpop.f32.mrf.mxu0
    %v5345 = vadd.f32 %v4160, %v5344
    %v5346 = vpop.f32.mrf.mxu0
    %5347 = vmatprep.mubr.bf16.mxu0 0
    %5348 = vmatmul.mubr.bf16.gmra.mxu0 %v2479
    %v5349 = vpop.f32.mrf.mxu0
    %v5350 = vadd.f32 %v4165, %v5349
    %v5351 = vpop.f32.mrf.mxu0
    %v5352 = vpop.f32.mrf.mxu0
    %v5353 = vadd.f32 %v4168, %v5352
    %v5354 = vpop.f32.mrf.mxu0
    %5355 = vmatprep.mubr.bf16.mxu0 0
    %5356 = vmatmul.mubr.bf16.gmra.mxu0 %v2482
    %v5357 = vpop.f32.mrf.mxu0
    %v5358 = vadd.f32 %v4173, %v5357
    %v5359 = vpop.f32.mrf.mxu0
    %v5360 = vpop.f32.mrf.mxu0
    %v5361 = vadd.f32 %v4176, %v5360
    %v5362 = vpop.f32.mrf.mxu0
    %5363 = vmatprep.mubr.bf16.mxu0 0
    %5364 = vmatmul.mubr.bf16.gmra.mxu0 %v2485
    %v5365 = vpop.f32.mrf.mxu0
    %v5366 = vadd.f32 %v4181, %v5365
    %v5367 = vpop.f32.mrf.mxu0
    %v5368 = vpop.f32.mrf.mxu0
    %v5369 = vadd.f32 %v4184, %v5368
    %v5370 = vpop.f32.mrf.mxu0
    %5371 = vmatprep.mubr.bf16.mxu0 0
    %5372 = vmatmul.mubr.bf16.gmra.mxu0 %v2488
    %v5373 = vpop.f32.mrf.mxu0
    %v5374 = vadd.f32 %v4189, %v5373
    %v5375 = vpop.f32.mrf.mxu0
    %v5376 = vpop.f32.mrf.mxu0
    %v5377 = vadd.f32 %v4192, %v5376
    %v5378 = vpop.f32.mrf.mxu0
    %5379 = vmatprep.mubr.bf16.mxu0 0
    %5380 = vmatmul.mubr.bf16.gmra.mxu0 %v2491
    %v5381 = vpop.f32.mrf.mxu0
    %v5382 = vadd.f32 %v4197, %v5381
    %v5383 = vpop.f32.mrf.mxu0
    %v5384 = vpop.f32.mrf.mxu0
    %v5385 = vadd.f32 %v4200, %v5384
    %v5386 = vpop.f32.mrf.mxu0
    %5387 = vmatprep.mubr.bf16.mxu0 0
    %5388 = vmatmul.mubr.bf16.gmra.mxu0 %v2494
    %v5389 = vpop.f32.mrf.mxu0
    %v5390 = vadd.f32 %v4205, %v5389
    %v5391 = vpop.f32.mrf.mxu0
    %v5392 = vpop.f32.mrf.mxu0
    %v5393 = vadd.f32 %v4208, %v5392
    %v5394 = vpop.f32.mrf.mxu0
    %5395 = vmatprep.mubr.bf16.mxu0 0
    %5396 = vmatmul.mubr.bf16.gmra.mxu0 %v2497
    %v5397 = vpop.f32.mrf.mxu0
    %v5398 = vadd.f32 %v4213, %v5397
    %v5399 = vpop.f32.mrf.mxu0
    %v5400 = vpop.f32.mrf.mxu0
    %v5401 = vadd.f32 %v4216, %v5400
    %v5402 = vpop.f32.mrf.mxu0
    %5403 = vmatprep.mubr.bf16.mxu0 0
    %5404 = vmatmul.mubr.bf16.gmra.mxu0 %v2500
    %v5405 = vpop.f32.mrf.mxu0
    %v5406 = vadd.f32 %v4221, %v5405
    %v5407 = vpop.f32.mrf.mxu0
    %v5408 = vpop.f32.mrf.mxu0
    %v5409 = vadd.f32 %v4224, %v5408
    %v5410 = vpop.f32.mrf.mxu0
    %5411 = vmatprep.mubr.bf16.mxu0 0
    %5412 = vmatmul.mubr.bf16.gmra.mxu0 %v2503
    %v5413 = vpop.f32.mrf.mxu0
    %v5414 = vadd.f32 %v4229, %v5413
    %v5415 = vpop.f32.mrf.mxu0
    %v5416 = vpop.f32.mrf.mxu0
    %v5417 = vadd.f32 %v4232, %v5416
    %v5418 = vpop.f32.mrf.mxu0
    %5419 = vmatprep.mubr.bf16.mxu0 0
    %5420 = vmatmul.mubr.bf16.gmra.mxu0 %v2506
    %v5421 = vpop.f32.mrf.mxu0
    %v5422 = vadd.f32 %v4237, %v5421
    %v5423 = vpop.f32.mrf.mxu0
    %v5424 = vpop.f32.mrf.mxu0
    %v5425 = vadd.f32 %v4240, %v5424
    %v5426 = vpop.f32.mrf.mxu0
    %5427 = vmatprep.mubr.bf16.mxu0 0
    %5428 = vmatmul.mubr.bf16.gmra.mxu0 %v2509
    %v5429 = vpop.f32.mrf.mxu0
    %v5430 = vadd.f32 %v4245, %v5429
    %v5431 = vpop.f32.mrf.mxu0
    %v5432 = vpop.f32.mrf.mxu0
    %v5433 = vadd.f32 %v4248, %v5432
    %v5434 = vpop.f32.mrf.mxu0
    %5435 = vmatprep.mubr.bf16.mxu0 0
    %5436 = vmatmul.mubr.bf16.gmra.mxu0 %v2512
    %v5437 = vpop.f32.mrf.mxu0
    %v5438 = vadd.f32 %v4253, %v5437
    %v5439 = vpop.f32.mrf.mxu0
    %v5440 = vpop.f32.mrf.mxu0
    %v5441 = vadd.f32 %v4256, %v5440
    %v5442 = vpop.f32.mrf.mxu0
    %5443 = vmatprep.mubr.bf16.mxu0 0
    %5444 = vmatmul.mubr.bf16.gmra.mxu0 %v2515
    %v5445 = vpop.f32.mrf.mxu0
    %v5446 = vadd.f32 %v4261, %v5445
    %v5447 = vpop.f32.mrf.mxu0
    %v5448 = vpop.f32.mrf.mxu0
    %v5449 = vadd.f32 %v4264, %v5448
    %v5450 = vpop.f32.mrf.mxu0
    %5451 = vmatprep.mubr.bf16.mxu0 0
    %5452 = vmatmul.mubr.bf16.gmra.mxu0 %v2518
    %v5453 = vpop.f32.mrf.mxu0
    %v5454 = vadd.f32 %v4269, %v5453
    %v5455 = vpop.f32.mrf.mxu0
    %v5456 = vpop.f32.mrf.mxu0
    %v5457 = vadd.f32 %v4272, %v5456
    %v5458 = vpop.f32.mrf.mxu0
    %5459 = vmatprep.mubr.bf16.mxu0 0
    %5460 = vmatmul.mubr.bf16.gmra.mxu0 %v2521
    %v5461 = vpop.f32.mrf.mxu0
    %v5462 = vadd.f32 %v4277, %v5461
    %v5463 = vpop.f32.mrf.mxu0
    %v5464 = vpop.f32.mrf.mxu0
    %v5465 = vadd.f32 %v4280, %v5464
    %v5466 = vpop.f32.mrf.mxu0
    %5467 = vdwg.mxu0
    %vm5468 = vcmask 400384
    %5469 = vst.msk [vmem:[%s2] sm:$0xff] %vm5468, %v4318
    %5470 = vst.msk [vmem:[%s2 + $0x8] sm:$0xff] %vm5468, %v4321
    %5471 = vst.msk [vmem:[%s2 + $0x10] sm:$0xff] %vm5468, %v4326
    %5472 = vst.msk [vmem:[%s2 + $0x18] sm:$0xff] %vm5468, %v4329
    %5473 = vst.msk [vmem:[%s2 + $0x20] sm:$0xff] %vm5468, %v4334
    %5474 = vst.msk [vmem:[%s2 + $0x28] sm:$0xff] %vm5468, %v4337
    %5475 = vst.msk [vmem:[%s2 + $0x30] sm:$0xff] %vm5468, %v4342
    %5476 = vst.msk [vmem:[%s2 + $0x38] sm:$0xff] %vm5468, %v4345
    %5477 = vst.msk [vmem:[%s2 + $0x40] sm:$0xff] %vm5468, %v4350
    %5478 = vst.msk [vmem:[%s2 + $0x48] sm:$0xff] %vm5468, %v4353
    %5479 = vst.msk [vmem:[%s2 + $0x50] sm:$0xff] %vm5468, %v4358
    %5480 = vst.msk [vmem:[%s2 + $0x58] sm:$0xff] %vm5468, %v4361
    %5481 = vst.msk [vmem:[%s2 + $0x60] sm:$0xff] %vm5468, %v4366
    %5482 = vst.msk [vmem:[%s2 + $0x68] sm:$0xff] %vm5468, %v4369
    %5483 = vst.msk [vmem:[%s2 + $0x70] sm:$0xff] %vm5468, %v4374
    %5484 = vst.msk [vmem:[%s2 + $0x78] sm:$0xff] %vm5468, %v4377
    %5485 = vst.msk [vmem:[%s2 + $0x80] sm:$0xff] %vm5468, %v4382
    %5486 = vst.msk [vmem:[%s2 + $0x88] sm:$0xff] %vm5468, %v4385
    %5487 = vst.msk [vmem:[%s2 + $0x90] sm:$0xff] %vm5468, %v4390
    %5488 = vst.msk [vmem:[%s2 + $0x98] sm:$0xff] %vm5468, %v4393
    %5489 = vst.msk [vmem:[%s2 + $0xa0] sm:$0xff] %vm5468, %v4398
    %5490 = vst.msk [vmem:[%s2 + $0xa8] sm:$0xff] %vm5468, %v4401
    %5491 = vst.msk [vmem:[%s2 + $0xb0] sm:$0xff] %vm5468, %v4406
    %5492 = vst.msk [vmem:[%s2 + $0xb8] sm:$0xff] %vm5468, %v4409
    %5493 = vst.msk [vmem:[%s2 + $0xc0] sm:$0xff] %vm5468, %v4414
    %5494 = vst.msk [vmem:[%s2 + $0xc8] sm:$0xff] %vm5468, %v4417
    %5495 = vst.msk [vmem:[%s2 + $0xd0] sm:$0xff] %vm5468, %v4422
    %5496 = vst.msk [vmem:[%s2 + $0xd8] sm:$0xff] %vm5468, %v4425
    %5497 = vst.msk [vmem:[%s2 + $0xe0] sm:$0xff] %vm5468, %v4430
    %5498 = vst.msk [vmem:[%s2 + $0xe8] sm:$0xff] %vm5468, %v4433
    %5499 = vst.msk [vmem:[%s2 + $0xf0] sm:$0xff] %vm5468, %v4438
    %5500 = vst.msk [vmem:[%s2 + $0xf8] sm:$0xff] %vm5468, %v4441
    %5501 = vst.msk [vmem:[%s2 + $0x100] sm:$0xff] %vm5468, %v4446
    %5502 = vst.msk [vmem:[%s2 + $0x108] sm:$0xff] %vm5468, %v4449
    %5503 = vst.msk [vmem:[%s2 + $0x110] sm:$0xff] %vm5468, %v4454
    %5504 = vst.msk [vmem:[%s2 + $0x118] sm:$0xff] %vm5468, %v4457
    %5505 = vst.msk [vmem:[%s2 + $0x120] sm:$0xff] %vm5468, %v4462
    %5506 = vst.msk [vmem:[%s2 + $0x128] sm:$0xff] %vm5468, %v4465
    %5507 = vst.msk [vmem:[%s2 + $0x130] sm:$0xff] %vm5468, %v4470
    %5508 = vst.msk [vmem:[%s2 + $0x138] sm:$0xff] %vm5468, %v4473
    %5509 = vst.msk [vmem:[%s2 + $0x140] sm:$0xff] %vm5468, %v4478
    %5510 = vst.msk [vmem:[%s2 + $0x148] sm:$0xff] %vm5468, %v4481
    %5511 = vst.msk [vmem:[%s2 + $0x150] sm:$0xff] %vm5468, %v4486
    %5512 = vst.msk [vmem:[%s2 + $0x158] sm:$0xff] %vm5468, %v4489
    %5513 = vst.msk [vmem:[%s2 + $0x160] sm:$0xff] %vm5468, %v4494
    %5514 = vst.msk [vmem:[%s2 + $0x168] sm:$0xff] %vm5468, %v4497
    %5515 = vst.msk [vmem:[%s2 + $0x170] sm:$0xff] %vm5468, %v4502
    %5516 = vst.msk [vmem:[%s2 + $0x178] sm:$0xff] %vm5468, %v4505
    %5517 = vst.msk [vmem:[%s2 + $0x180] sm:$0xff] %vm5468, %v4510
    %5518 = vst.msk [vmem:[%s2 + $0x188] sm:$0xff] %vm5468, %v4513
    %5519 = vst.msk [vmem:[%s2 + $0x190] sm:$0xff] %vm5468, %v4518
    %5520 = vst.msk [vmem:[%s2 + $0x198] sm:$0xff] %vm5468, %v4521
    %5521 = vst.msk [vmem:[%s2 + $0x1a0] sm:$0xff] %vm5468, %v4526
    %5522 = vst.msk [vmem:[%s2 + $0x1a8] sm:$0xff] %vm5468, %v4529
    %5523 = vst.msk [vmem:[%s2 + $0x1b0] sm:$0xff] %vm5468, %v4534
    %5524 = vst.msk [vmem:[%s2 + $0x1b8] sm:$0xff] %vm5468, %v4537
    %5525 = vst.msk [vmem:[%s2 + $0x1c0] sm:$0xff] %vm5468, %v4542
    %5526 = vst.msk [vmem:[%s2 + $0x1c8] sm:$0xff] %vm5468, %v4545
    %5527 = vst.msk [vmem:[%s2 + $0x1d0] sm:$0xff] %vm5468, %v4550
    %5528 = vst.msk [vmem:[%s2 + $0x1d8] sm:$0xff] %vm5468, %v4553
    %5529 = vst.msk [vmem:[%s2 + $0x1e0] sm:$0xff] %vm5468, %v4558
    %5530 = vst.msk [vmem:[%s2 + $0x1e8] sm:$0xff] %vm5468, %v4561
    %5531 = vst.msk [vmem:[%s2 + $0x1f0] sm:$0xff] %vm5468, %v4566
    %5532 = vst.msk [vmem:[%s2 + $0x1f8] sm:$0xff] %vm5468, %v4569
    %5533 = vst.msk [vmem:[%s2 + $0x200] sm:$0xff] %vm5468, %v4574
    %5534 = vst.msk [vmem:[%s2 + $0x208] sm:$0xff] %vm5468, %v4577
    %5535 = vst.msk [vmem:[%s2 + $0x210] sm:$0xff] %vm5468, %v4582
    %5536 = vst.msk [vmem:[%s2 + $0x218] sm:$0xff] %vm5468, %v4585
    %5537 = vst.msk [vmem:[%s2 + $0x220] sm:$0xff] %vm5468, %v4590
    %5538 = vst.msk [vmem:[%s2 + $0x228] sm:$0xff] %vm5468, %v4593
    %5539 = vst.msk [vmem:[%s2 + $0x230] sm:$0xff] %vm5468, %v4598
    %5540 = vst.msk [vmem:[%s2 + $0x238] sm:$0xff] %vm5468, %v4601
    %5541 = vst.msk [vmem:[%s2 + $0x240] sm:$0xff] %vm5468, %v4606
    %5542 = vst.msk [vmem:[%s2 + $0x248] sm:$0xff] %vm5468, %v4609
    %5543 = vst.msk [vmem:[%s2 + $0x250] sm:$0xff] %vm5468, %v4614
    %5544 = vst.msk [vmem:[%s2 + $0x258] sm:$0xff] %vm5468, %v4617
    %5545 = vst.msk [vmem:[%s2 + $0x260] sm:$0xff] %vm5468, %v4622
    %5546 = vst.msk [vmem:[%s2 + $0x268] sm:$0xff] %vm5468, %v4625
    %5547 = vst.msk [vmem:[%s2 + $0x270] sm:$0xff] %vm5468, %v4630
    %5548 = vst.msk [vmem:[%s2 + $0x278] sm:$0xff] %vm5468, %v4633
    %5549 = vst.msk [vmem:[%s2 + $0x280] sm:$0xff] %vm5468, %v4638
    %5550 = vst.msk [vmem:[%s2 + $0x288] sm:$0xff] %vm5468, %v4641
    %5551 = vst.msk [vmem:[%s2 + $0x290] sm:$0xff] %vm5468, %v4646
    %5552 = vst.msk [vmem:[%s2 + $0x298] sm:$0xff] %vm5468, %v4649
    %5553 = vst.msk [vmem:[%s2 + $0x2a0] sm:$0xff] %vm5468, %v4654
    %5554 = vst.msk [vmem:[%s2 + $0x2a8] sm:$0xff] %vm5468, %v4657
    %5555 = vst.msk [vmem:[%s2 + $0x2b0] sm:$0xff] %vm5468, %v4662
    %5556 = vst.msk [vmem:[%s2 + $0x2b8] sm:$0xff] %vm5468, %v4665
    %5557 = vst.msk [vmem:[%s2 + $0x2c0] sm:$0xff] %vm5468, %v4670
    %5558 = vst.msk [vmem:[%s2 + $0x2c8] sm:$0xff] %vm5468, %v4673
    %5559 = vst.msk [vmem:[%s2 + $0x2d0] sm:$0xff] %vm5468, %v4678
    %5560 = vst.msk [vmem:[%s2 + $0x2d8] sm:$0xff] %vm5468, %v4681
    %5561 = vst.msk [vmem:[%s2 + $0x2e0] sm:$0xff] %vm5468, %v4686
    %5562 = vst.msk [vmem:[%s2 + $0x2e8] sm:$0xff] %vm5468, %v4689
    %5563 = vst.msk [vmem:[%s2 + $0x2f0] sm:$0xff] %vm5468, %v4694
    %5564 = vst.msk [vmem:[%s2 + $0x2f8] sm:$0xff] %vm5468, %v4697
    %5565 = vst.msk [vmem:[%s2 + $0x300] sm:$0xff] %vm5468, %v4702
    %5566 = vst.msk [vmem:[%s2 + $0x308] sm:$0xff] %vm5468, %v4705
    %5567 = vst.msk [vmem:[%s2 + $0x310] sm:$0xff] %vm5468, %v4710
    %5568 = vst.msk [vmem:[%s2 + $0x318] sm:$0xff] %vm5468, %v4713
    %5569 = vst.msk [vmem:[%s2 + $0x320] sm:$0xff] %vm5468, %v4718
    %5570 = vst.msk [vmem:[%s2 + $0x328] sm:$0xff] %vm5468, %v4721
    %5571 = vst.msk [vmem:[%s2 + $0x330] sm:$0xff] %vm5468, %v4726
    %5572 = vst.msk [vmem:[%s2 + $0x338] sm:$0xff] %vm5468, %v4729
    %5573 = vst.msk [vmem:[%s2 + $0x340] sm:$0xff] %vm5468, %v4734
    %5574 = vst.msk [vmem:[%s2 + $0x348] sm:$0xff] %vm5468, %v4737
    %5575 = vst.msk [vmem:[%s2 + $0x350] sm:$0xff] %vm5468, %v4742
    %5576 = vst.msk [vmem:[%s2 + $0x358] sm:$0xff] %vm5468, %v4745
    %5577 = vst.msk [vmem:[%s2 + $0x360] sm:$0xff] %vm5468, %v4750
    %5578 = vst.msk [vmem:[%s2 + $0x368] sm:$0xff] %vm5468, %v4753
    %5579 = vst.msk [vmem:[%s2 + $0x370] sm:$0xff] %vm5468, %v4758
    %5580 = vst.msk [vmem:[%s2 + $0x378] sm:$0xff] %vm5468, %v4761
    %5581 = vst.msk [vmem:[%s2 + $0x380] sm:$0xff] %vm5468, %v4766
    %5582 = vst.msk [vmem:[%s2 + $0x388] sm:$0xff] %vm5468, %v4769
    %5583 = vst.msk [vmem:[%s2 + $0x390] sm:$0xff] %vm5468, %v4774
    %5584 = vst.msk [vmem:[%s2 + $0x398] sm:$0xff] %vm5468, %v4777
    %5585 = vst.msk [vmem:[%s2 + $0x3a0] sm:$0xff] %vm5468, %v4782
    %5586 = vst.msk [vmem:[%s2 + $0x3a8] sm:$0xff] %vm5468, %v4785
    %5587 = vst.msk [vmem:[%s2 + $0x3b0] sm:$0xff] %vm5468, %v4790
    %5588 = vst.msk [vmem:[%s2 + $0x3b8] sm:$0xff] %vm5468, %v4793
    %5589 = vst.msk [vmem:[%s2 + $0x3c0] sm:$0xff] %vm5468, %v4798
    %5590 = vst.msk [vmem:[%s2 + $0x3c8] sm:$0xff] %vm5468, %v4801
    %5591 = vst.msk [vmem:[%s2 + $0x3d0] sm:$0xff] %vm5468, %v4806
    %5592 = vst.msk [vmem:[%s2 + $0x3d8] sm:$0xff] %vm5468, %v4809
    %5593 = vst.msk [vmem:[%s2 + $0x3e0] sm:$0xff] %vm5468, %v4814
    %5594 = vst.msk [vmem:[%s2 + $0x3e8] sm:$0xff] %vm5468, %v4817
    %5595 = vst.msk [vmem:[%s2 + $0x3f0] sm:$0xff] %vm5468, %v4822
    %5596 = vst.msk [vmem:[%s2 + $0x3f8] sm:$0xff] %vm5468, %v4825
    %5597 = vst.msk [vmem:[%s2 + $0x400] sm:$0xff] %vm5468, %v4830
    %5598 = vst.msk [vmem:[%s2 + $0x408] sm:$0xff] %vm5468, %v4833
    %5599 = vst.msk [vmem:[%s2 + $0x410] sm:$0xff] %vm5468, %v4838
    %5600 = vst.msk [vmem:[%s2 + $0x418] sm:$0xff] %vm5468, %v4841
    %5601 = vst.msk [vmem:[%s2 + $0x420] sm:$0xff] %vm5468, %v4846
    %5602 = vst.msk [vmem:[%s2 + $0x428] sm:$0xff] %vm5468, %v4849
    %5603 = vst.msk [vmem:[%s2 + $0x430] sm:$0xff] %vm5468, %v4854
    %5604 = vst.msk [vmem:[%s2 + $0x438] sm:$0xff] %vm5468, %v4857
    %5605 = vst.msk [vmem:[%s2 + $0x440] sm:$0xff] %vm5468, %v4862
    %5606 = vst.msk [vmem:[%s2 + $0x448] sm:$0xff] %vm5468, %v4865
    %5607 = vst.msk [vmem:[%s2 + $0x450] sm:$0xff] %vm5468, %v4870
    %5608 = vst.msk [vmem:[%s2 + $0x458] sm:$0xff] %vm5468, %v4873
    %5609 = vst.msk [vmem:[%s2 + $0x460] sm:$0xff] %vm5468, %v4878
    %5610 = vst.msk [vmem:[%s2 + $0x468] sm:$0xff] %vm5468, %v4881
    %5611 = vst.msk [vmem:[%s2 + $0x470] sm:$0xff] %vm5468, %v4886
    %5612 = vst.msk [vmem:[%s2 + $0x478] sm:$0xff] %vm5468, %v4889
    %5613 = vst.msk [vmem:[%s2 + $0x480] sm:$0xff] %vm5468, %v4894
    %5614 = vst.msk [vmem:[%s2 + $0x488] sm:$0xff] %vm5468, %v4897
    %5615 = vst.msk [vmem:[%s2 + $0x490] sm:$0xff] %vm5468, %v4902
    %5616 = vst.msk [vmem:[%s2 + $0x498] sm:$0xff] %vm5468, %v4905
    %5617 = vst.msk [vmem:[%s2 + $0x4a0] sm:$0xff] %vm5468, %v4910
    %5618 = vst.msk [vmem:[%s2 + $0x4a8] sm:$0xff] %vm5468, %v4913
    %5619 = vst.msk [vmem:[%s2 + $0x4b0] sm:$0xff] %vm5468, %v4918
    %5620 = vst.msk [vmem:[%s2 + $0x4b8] sm:$0xff] %vm5468, %v4921
    %5621 = vst.msk [vmem:[%s2 + $0x4c0] sm:$0xff] %vm5468, %v4926
    %5622 = vst.msk [vmem:[%s2 + $0x4c8] sm:$0xff] %vm5468, %v4929
    %5623 = vst.msk [vmem:[%s2 + $0x4d0] sm:$0xff] %vm5468, %v4934
    %5624 = vst.msk [vmem:[%s2 + $0x4d8] sm:$0xff] %vm5468, %v4937
    %5625 = vst.msk [vmem:[%s2 + $0x4e0] sm:$0xff] %vm5468, %v4942
    %5626 = vst.msk [vmem:[%s2 + $0x4e8] sm:$0xff] %vm5468, %v4945
    %5627 = vst.msk [vmem:[%s2 + $0x4f0] sm:$0xff] %vm5468, %v4950
    %5628 = vst.msk [vmem:[%s2 + $0x4f8] sm:$0xff] %vm5468, %v4953
    %5629 = vst.msk [vmem:[%s2 + $0x500] sm:$0xff] %vm5468, %v4958
    %5630 = vst.msk [vmem:[%s2 + $0x508] sm:$0xff] %vm5468, %v4961
    %5631 = vst.msk [vmem:[%s2 + $0x510] sm:$0xff] %vm5468, %v4966
    %5632 = vst.msk [vmem:[%s2 + $0x518] sm:$0xff] %vm5468, %v4969
    %5633 = vst.msk [vmem:[%s2 + $0x520] sm:$0xff] %vm5468, %v4974
    %5634 = vst.msk [vmem:[%s2 + $0x528] sm:$0xff] %vm5468, %v4977
    %5635 = vst.msk [vmem:[%s2 + $0x530] sm:$0xff] %vm5468, %v4982
    %5636 = vst.msk [vmem:[%s2 + $0x538] sm:$0xff] %vm5468, %v4985
    %5637 = vst.msk [vmem:[%s2 + $0x540] sm:$0xff] %vm5468, %v4990
    %5638 = vst.msk [vmem:[%s2 + $0x548] sm:$0xff] %vm5468, %v4993
    %5639 = vst.msk [vmem:[%s2 + $0x550] sm:$0xff] %vm5468, %v4998
    %5640 = vst.msk [vmem:[%s2 + $0x558] sm:$0xff] %vm5468, %v5001
    %5641 = vst.msk [vmem:[%s2 + $0x560] sm:$0xff] %vm5468, %v5006
    %5642 = vst.msk [vmem:[%s2 + $0x568] sm:$0xff] %vm5468, %v5009
    %5643 = vst.msk [vmem:[%s2 + $0x570] sm:$0xff] %vm5468, %v5014
    %5644 = vst.msk [vmem:[%s2 + $0x578] sm:$0xff] %vm5468, %v5017
    %5645 = vst.msk [vmem:[%s2 + $0x580] sm:$0xff] %vm5468, %v5022
    %5646 = vst.msk [vmem:[%s2 + $0x588] sm:$0xff] %vm5468, %v5025
    %5647 = vst.msk [vmem:[%s2 + $0x590] sm:$0xff] %vm5468, %v5030
    %5648 = vst.msk [vmem:[%s2 + $0x598] sm:$0xff] %vm5468, %v5033
    %5649 = vst.msk [vmem:[%s2 + $0x5a0] sm:$0xff] %vm5468, %v5038
    %5650 = vst.msk [vmem:[%s2 + $0x5a8] sm:$0xff] %vm5468, %v5041
    %5651 = vst.msk [vmem:[%s2 + $0x5b0] sm:$0xff] %vm5468, %v5046
    %5652 = vst.msk [vmem:[%s2 + $0x5b8] sm:$0xff] %vm5468, %v5049
    %5653 = vst.msk [vmem:[%s2 + $0x5c0] sm:$0xff] %vm5468, %v5054
    %5654 = vst.msk [vmem:[%s2 + $0x5c8] sm:$0xff] %vm5468, %v5057
    %5655 = vst.msk [vmem:[%s2 + $0x5d0] sm:$0xff] %vm5468, %v5062
    %5656 = vst.msk [vmem:[%s2 + $0x5d8] sm:$0xff] %vm5468, %v5065
    %5657 = vst.msk [vmem:[%s2 + $0x5e0] sm:$0xff] %vm5468, %v5070
    %5658 = vst.msk [vmem:[%s2 + $0x5e8] sm:$0xff] %vm5468, %v5073
    %5659 = vst.msk [vmem:[%s2 + $0x5f0] sm:$0xff] %vm5468, %v5078
    %5660 = vst.msk [vmem:[%s2 + $0x5f8] sm:$0xff] %vm5468, %v5081
    %5661 = vst.msk [vmem:[%s2 + $0x600] sm:$0xff] %vm5468, %v5086
    %5662 = vst.msk [vmem:[%s2 + $0x608] sm:$0xff] %vm5468, %v5089
    %5663 = vst.msk [vmem:[%s2 + $0x610] sm:$0xff] %vm5468, %v5094
    %5664 = vst.msk [vmem:[%s2 + $0x618] sm:$0xff] %vm5468, %v5097
    %5665 = vst.msk [vmem:[%s2 + $0x620] sm:$0xff] %vm5468, %v5102
    %5666 = vst.msk [vmem:[%s2 + $0x628] sm:$0xff] %vm5468, %v5105
    %5667 = vst.msk [vmem:[%s2 + $0x630] sm:$0xff] %vm5468, %v5110
    %5668 = vst.msk [vmem:[%s2 + $0x638] sm:$0xff] %vm5468, %v5113
    %5669 = vst.msk [vmem:[%s2 + $0x640] sm:$0xff] %vm5468, %v5118
    %5670 = vst.msk [vmem:[%s2 + $0x648] sm:$0xff] %vm5468, %v5121
    %5671 = vst.msk [vmem:[%s2 + $0x650] sm:$0xff] %vm5468, %v5126
    %5672 = vst.msk [vmem:[%s2 + $0x658] sm:$0xff] %vm5468, %v5129
    %5673 = vst.msk [vmem:[%s2 + $0x660] sm:$0xff] %vm5468, %v5134
    %5674 = vst.msk [vmem:[%s2 + $0x668] sm:$0xff] %vm5468, %v5137
    %5675 = vst.msk [vmem:[%s2 + $0x670] sm:$0xff] %vm5468, %v5142
    %5676 = vst.msk [vmem:[%s2 + $0x678] sm:$0xff] %vm5468, %v5145
    %5677 = vst.msk [vmem:[%s2 + $0x680] sm:$0xff] %vm5468, %v5150
    %5678 = vst.msk [vmem:[%s2 + $0x688] sm:$0xff] %vm5468, %v5153
    %5679 = vst.msk [vmem:[%s2 + $0x690] sm:$0xff] %vm5468, %v5158
    %5680 = vst.msk [vmem:[%s2 + $0x698] sm:$0xff] %vm5468, %v5161
    %5681 = vst.msk [vmem:[%s2 + $0x6a0] sm:$0xff] %vm5468, %v5166
    %5682 = vst.msk [vmem:[%s2 + $0x6a8] sm:$0xff] %vm5468, %v5169
    %5683 = vst.msk [vmem:[%s2 + $0x6b0] sm:$0xff] %vm5468, %v5174
    %5684 = vst.msk [vmem:[%s2 + $0x6b8] sm:$0xff] %vm5468, %v5177
    %5685 = vst.msk [vmem:[%s2 + $0x6c0] sm:$0xff] %vm5468, %v5182
    %5686 = vst.msk [vmem:[%s2 + $0x6c8] sm:$0xff] %vm5468, %v5185
    %5687 = vst.msk [vmem:[%s2 + $0x6d0] sm:$0xff] %vm5468, %v5190
    %5688 = vst.msk [vmem:[%s2 + $0x6d8] sm:$0xff] %vm5468, %v5193
    %5689 = vst.msk [vmem:[%s2 + $0x6e0] sm:$0xff] %vm5468, %v5198
    %5690 = vst.msk [vmem:[%s2 + $0x6e8] sm:$0xff] %vm5468, %v5201
    %5691 = vst.msk [vmem:[%s2 + $0x6f0] sm:$0xff] %vm5468, %v5206
    %5692 = vst.msk [vmem:[%s2 + $0x6f8] sm:$0xff] %vm5468, %v5209
    %5693 = vst.msk [vmem:[%s2 + $0x700] sm:$0xff] %vm5468, %v5214
    %5694 = vst.msk [vmem:[%s2 + $0x708] sm:$0xff] %vm5468, %v5217
    %5695 = vst.msk [vmem:[%s2 + $0x710] sm:$0xff] %vm5468, %v5222
    %5696 = vst.msk [vmem:[%s2 + $0x718] sm:$0xff] %vm5468, %v5225
    %5697 = vst.msk [vmem:[%s2 + $0x720] sm:$0xff] %vm5468, %v5230
    %5698 = vst.msk [vmem:[%s2 + $0x728] sm:$0xff] %vm5468, %v5233
    %5699 = vst.msk [vmem:[%s2 + $0x730] sm:$0xff] %vm5468, %v5238
    %5700 = vst.msk [vmem:[%s2 + $0x738] sm:$0xff] %vm5468, %v5241
    %5701 = vst.msk [vmem:[%s2 + $0x740] sm:$0xff] %vm5468, %v5246
    %5702 = vst.msk [vmem:[%s2 + $0x748] sm:$0xff] %vm5468, %v5249
    %5703 = vst.msk [vmem:[%s2 + $0x750] sm:$0xff] %vm5468, %v5254
    %5704 = vst.msk [vmem:[%s2 + $0x758] sm:$0xff] %vm5468, %v5257
    %5705 = vst.msk [vmem:[%s2 + $0x760] sm:$0xff] %vm5468, %v5262
    %5706 = vst.msk [vmem:[%s2 + $0x768] sm:$0xff] %vm5468, %v5265
    %5707 = vst.msk [vmem:[%s2 + $0x770] sm:$0xff] %vm5468, %v5270
    %5708 = vst.msk [vmem:[%s2 + $0x778] sm:$0xff] %vm5468, %v5273
    %5709 = vst.msk [vmem:[%s2 + $0x780] sm:$0xff] %vm5468, %v5278
    %5710 = vst.msk [vmem:[%s2 + $0x788] sm:$0xff] %vm5468, %v5281
    %5711 = vst.msk [vmem:[%s2 + $0x790] sm:$0xff] %vm5468, %v5286
    %5712 = vst.msk [vmem:[%s2 + $0x798] sm:$0xff] %vm5468, %v5289
    %5713 = vst.msk [vmem:[%s2 + $0x7a0] sm:$0xff] %vm5468, %v5294
    %5714 = vst.msk [vmem:[%s2 + $0x7a8] sm:$0xff] %vm5468, %v5297
    %5715 = vst.msk [vmem:[%s2 + $0x7b0] sm:$0xff] %vm5468, %v5302
    %5716 = vst.msk [vmem:[%s2 + $0x7b8] sm:$0xff] %vm5468, %v5305
    %5717 = vst.msk [vmem:[%s2 + $0x7c0] sm:$0xff] %vm5468, %v5310
    %5718 = vst.msk [vmem:[%s2 + $0x7c8] sm:$0xff] %vm5468, %v5313
    %5719 = vst.msk [vmem:[%s2 + $0x7d0] sm:$0xff] %vm5468, %v5318
    %5720 = vst.msk [vmem:[%s2 + $0x7d8] sm:$0xff] %vm5468, %v5321
    %5721 = vst.msk [vmem:[%s2 + $0x7e0] sm:$0xff] %vm5468, %v5326
    %5722 = vst.msk [vmem:[%s2 + $0x7e8] sm:$0xff] %vm5468, %v5329
    %5723 = vst.msk [vmem:[%s2 + $0x7f0] sm:$0xff] %vm5468, %v5334
    %5724 = vst.msk [vmem:[%s2 + $0x7f8] sm:$0xff] %vm5468, %v5337
    %5725 = vst.msk [vmem:[%s2 + $0x800] sm:$0xff] %vm5468, %v5342
    %5726 = vst.msk [vmem:[%s2 + $0x808] sm:$0xff] %vm5468, %v5345
    %5727 = vst.msk [vmem:[%s2 + $0x810] sm:$0xff] %vm5468, %v5350
    %5728 = vst.msk [vmem:[%s2 + $0x818] sm:$0xff] %vm5468, %v5353
    %5729 = vst.msk [vmem:[%s2 + $0x820] sm:$0xff] %vm5468, %v5358
    %5730 = vst.msk [vmem:[%s2 + $0x828] sm:$0xff] %vm5468, %v5361
    %5731 = vst.msk [vmem:[%s2 + $0x830] sm:$0xff] %vm5468, %v5366
    %5732 = vst.msk [vmem:[%s2 + $0x838] sm:$0xff] %vm5468, %v5369
    %5733 = vst.msk [vmem:[%s2 + $0x840] sm:$0xff] %vm5468, %v5374
    %5734 = vst.msk [vmem:[%s2 + $0x848] sm:$0xff] %vm5468, %v5377
    %5735 = vst.msk [vmem:[%s2 + $0x850] sm:$0xff] %vm5468, %v5382
    %5736 = vst.msk [vmem:[%s2 + $0x858] sm:$0xff] %vm5468, %v5385
    %5737 = vst.msk [vmem:[%s2 + $0x860] sm:$0xff] %vm5468, %v5390
    %5738 = vst.msk [vmem:[%s2 + $0x868] sm:$0xff] %vm5468, %v5393
    %5739 = vst.msk [vmem:[%s2 + $0x870] sm:$0xff] %vm5468, %v5398
    %5740 = vst.msk [vmem:[%s2 + $0x878] sm:$0xff] %vm5468, %v5401
    %5741 = vst.msk [vmem:[%s2 + $0x880] sm:$0xff] %vm5468, %v5406
    %5742 = vst.msk [vmem:[%s2 + $0x888] sm:$0xff] %vm5468, %v5409
    %5743 = vst.msk [vmem:[%s2 + $0x890] sm:$0xff] %vm5468, %v5414
    %5744 = vst.msk [vmem:[%s2 + $0x898] sm:$0xff] %vm5468, %v5417
    %5745 = vst.msk [vmem:[%s2 + $0x8a0] sm:$0xff] %vm5468, %v5422
    %5746 = vst.msk [vmem:[%s2 + $0x8a8] sm:$0xff] %vm5468, %v5425
    %5747 = vst.msk [vmem:[%s2 + $0x8b0] sm:$0xff] %vm5468, %v5430
    %5748 = vst.msk [vmem:[%s2 + $0x8b8] sm:$0xff] %vm5468, %v5433
    %5749 = vst.msk [vmem:[%s2 + $0x8c0] sm:$0xff] %vm5468, %v5438
    %5750 = vst.msk [vmem:[%s2 + $0x8c8] sm:$0xff] %vm5468, %v5441
    %5751 = vst.msk [vmem:[%s2 + $0x8d0] sm:$0xff] %vm5468, %v5446
    %5752 = vst.msk [vmem:[%s2 + $0x8d8] sm:$0xff] %vm5468, %v5449
    %5753 = vst.msk [vmem:[%s2 + $0x8e0] sm:$0xff] %vm5468, %v5454
    %5754 = vst.msk [vmem:[%s2 + $0x8e8] sm:$0xff] %vm5468, %v5457
    %5755 = vst.msk [vmem:[%s2 + $0x8f0] sm:$0xff] %vm5468, %v5462
    %5756 = vst.msk [vmem:[%s2 + $0x8f8] sm:$0xff] %vm5468, %v5465
    // Predicated region
    $region14: #{tpu_custom_call.1} parent=1 // pred_check
      _
    $region15: #{tpu_custom_call.1} parent=1 // pred_check_branch
      %5758 = sbr.rel (0) target = $region17
    $region16: #{tpu_custom_call.1} parent=1 // pred_region
      _
    $region17: #{tpu_custom_call.1} parent=1 // pred_fallthru
      _
    // Predicated region
    $region18: #{tpu_custom_call.1} parent=1 // pred_check
      _
    $region19: #{tpu_custom_call.1} parent=1 // pred_check_branch
      %5760 = sbr.rel (0) target = $region21
    $region20: #{tpu_custom_call.1} parent=1 // pred_region
      _
    $region21: #{tpu_custom_call.1} parent=1 // pred_fallthru
      _
    %5761 = vsyncpa [#allocation3], 1

</llo_original>
